<compile_context>
chip_gen: v7x
topology: tpu7x:2x2x1
jax: 0.10.0
libtpu: 0.0.40
codegen_flags: <defaults>
</compile_context>

<pallas_src>
import functools

import jax
import jax.numpy as jnp
from jax.experimental import pallas as pl
from jax.experimental.pallas import tpu as pltpu


# ----------------------------------------------------------------------------
# Static geometry (fc1 = Linear(144, 64) implies a 28x28 single-channel input).
# ----------------------------------------------------------------------------
S_IN = 28
C1, C2, C3 = 8, 16, 16          # conv channel counts
W1 = S_IN + 2                   # 30 : conv1 output spatial (1x1 conv, padding=1)
P1 = W1 // 2                    # 15 : pool1 output spatial
P2 = P1 // 2                    # 7  : pool2 output spatial
P3 = P2 // 2                    # 3  : pool3 output spatial (16*3*3 = 144 FC features)
BN_EPS = 1e-5


# ----------------------------------------------------------------------------
# The fused per-image kernel.
# Feature maps are (H, W*C) values: rows on sublanes, width*channels on lanes.
# Lane index = w*C + c.  Pool outputs keep the pre-selection lane width
# ((W-1)*C); only even lane groups (g = 2*q) carry pooled values and the next
# layer's folded weight matrix multiplies the odd (don't-care) groups by zero.
# ----------------------------------------------------------------------------
def _net_kernel(x_ref, w1_ref, bst1_ref, w2_ref, bst2_ref, w3_ref, bst3_ref,
                wf1_ref, bf1_ref, wf2_ref, bf2_ref, wf3_ref, bf3_ref, out_ref):
    f32, bf16 = jnp.float32, jnp.bfloat16

    def epilogue(acc, bst_ref):
        # conv bias -> ReLU -> BatchNorm(eval) folded to per-(width,channel) affine.
        b, s, t = bst_ref[0:1, :], bst_ref[1:2, :], bst_ref[2:3, :]
        return jnp.maximum(acc + b, 0.0) * s + t

    def hpad(a, pad):
        z = jnp.zeros((pad, a.shape[1]), a.dtype)
        return jnp.concatenate([z, a, z], axis=0)

    def pool2x2(a, c):
        # a: (H, W*c).  Returns (H//2, (W-1)*c); lane group 2*q = pooled col q.
        h, l = a.shape
        wmax = jnp.maximum(a[:, : l - c], a[:, c:])            # width pair max
        rmax = jnp.maximum(wmax[: h - 1, :], wmax[1:, :])      # row pair max (even rows valid)
        p = h // 2
        row = jax.lax.broadcasted_iota(jnp.int32, (p, h - 1), 0)
        col = jax.lax.broadcasted_iota(jnp.int32, (p, h - 1), 1)
        sel = (col == 2 * row).astype(f32)                     # even-row selection
        return jnp.dot(sel, rmax, preferred_element_type=f32)

    # ---- conv1 (1x1, pad=1, 1->8): width pad + channel broadcast folded into w1big.
    x = x_ref[0].astype(bf16)                                            # (28, 28)
    acc1 = hpad(jnp.dot(x, w1_ref[...], preferred_element_type=f32), 1)  # (30, 240)
    a1 = epilogue(acc1, bst1_ref)                                        # (30, 240)

    # ---- pool1 -> conv2 (3x3, pad=1, 8->16): 3 row-tap matmuls, K = 232.
    pin2 = hpad(pool2x2(a1, C1), 1)                                      # (17, 232)
    acc2 = jnp.zeros((P1, P1 * C2), f32)
    for i in range(3):
        acc2 = acc2 + jnp.dot(pin2[i:i + P1, :].astype(bf16), w2_ref[i],
                              preferred_element_type=f32)
    a2 = epilogue(acc2, bst2_ref)                                        # (15, 240)

    # ---- pool2 -> conv3 (5x5, pad=2, 16->16): 5 row-tap matmuls, K = 224.
    pin3 = hpad(pool2x2(a2, C2), 2)                                      # (11, 224)
    acc3 = jnp.zeros((P2, P2 * C3), f32)
    for i in range(5):
        acc3 = acc3 + jnp.dot(pin3[i:i + P2, :].astype(bf16), w3_ref[i],
                              preferred_element_type=f32)
    a3 = epilogue(acc3, bst3_ref)                                        # (7, 112)

    # ---- pool3 -> FC head (Dropout = identity in eval).
    p3 = pool2x2(a3, C3)                                                 # (3, 96)
    # wf1 was folded host-side so column block p*64:(p+1)*64 holds row p's
    # contribution; summing the three blocks finishes the 144-feature dot.
    part = jnp.dot(p3.astype(bf16), wf1_ref[...], preferred_element_type=f32)   # (3, 192)
    h1 = part[0:1, 0:64] + part[1:2, 64:128] + part[2:3, 128:192]
    h1 = jnp.maximum(h1 + bf1_ref[...], 0.0)                             # (1, 64)
    h2 = jnp.maximum(jnp.dot(h1.astype(bf16), wf2_ref[...],
                             preferred_element_type=f32) + bf2_ref[...], 0.0)
    out_ref[0] = jnp.dot(h2.astype(bf16), wf3_ref[...],
                         preferred_element_type=f32) + bf3_ref[...]


# ----------------------------------------------------------------------------
# Host-side weight folding (layout plumbing only; runs once under jit).
# ----------------------------------------------------------------------------
def _conv1_big(w1):
    # conv1 is 1x1 with padding=1: fold the channel broadcast and the width
    # padding into one (28, 30*8) matrix; height padding is added in-kernel.
    w1v = w1.reshape(C1)
    wi = jnp.arange(S_IN)[:, None]
    wo = jnp.arange(W1)[None, :]
    hit = (wo == wi + 1).astype(w1.dtype)                       # (28, 30)
    return (hit[:, :, None] * w1v[None, None, :]).reshape(S_IN, W1 * C1)


def _conv_big(w, g_count, w_out, pad):
    # Fold width taps, "same" width padding and the preceding MaxPool's
    # stride-2 lane selection of a kxk conv into per-row-tap matrices.
    #   w: PyTorch layout (Cout, Cin, k, k).
    #   big[i, g*Cin+ci, wo*Cout+co] = w[co, ci, i, j],  j = g//2 - wo + pad,
    # nonzero only for even g (pooled columns) and 0 <= j < k.
    cout, cin, k, _ = w.shape
    g = jnp.arange(g_count)[:, None]
    wo = jnp.arange(w_out)[None, :]
    j = g // 2 - wo + pad
    valid = ((g % 2 == 0) & (j >= 0) & (j < k)).astype(w.dtype)
    jc = jnp.clip(j, 0, k - 1)
    w_t = jnp.transpose(w, (2, 3, 1, 0))                        # (i, j, ci, co)
    taps = w_t[:, jc, :, :]                                     # (i, g, wo, ci, co)
    taps = taps * valid[None, :, :, None, None]
    taps = jnp.transpose(taps, (0, 1, 3, 2, 4))                 # (i, g, ci, wo, co)
    return taps.reshape(k, g_count * cin, w_out * cout)


def _fc1_big(wf1):
    # Fold the NCHW flatten order (c*9 + py*3 + px) and pool3's stride-2 lane
    # selection into a (96, 3*64) matrix; the kernel sums the three per-row
    # 64-wide column blocks to finish the contraction over py.
    w = wf1.reshape(64, C3, P3, P3)                             # (o, c, py, px)
    w = jnp.transpose(w, (2, 3, 1, 0))                          # (py, px, c, o)
    a = jnp.zeros((P3, 2 * P3, C3, 64), wf1.dtype)              # lane group g = 2*px
    a = a.at[:, 0::2, :, :].set(w)
    a = a.reshape(P3, (P2 - 1) * C3, 64)
    return jnp.transpose(a, (1, 0, 2)).reshape((P2 - 1) * C3, P3 * 64)


def _bst(p, i, w_out):
    # Per-layer (bias, BN scale, BN shift), tiled across the output width so it
    # broadcasts over the (H, Wout*C) lane layout.
    s = p[f"g{i}"] * jax.lax.rsqrt(p[f"rv{i}"] + BN_EPS)
    t = p[f"be{i}"] - p[f"rm{i}"] * s
    return jnp.stack([jnp.tile(p[f"b{i}"], w_out), jnp.tile(s, w_out),
                      jnp.tile(t, w_out)]).astype(jnp.float32)


# ----------------------------------------------------------------------------
# Forward wrapper: only weight folding / reshapes live outside the kernel.
# ----------------------------------------------------------------------------
@jax.jit
def forward(x_nchw, params):
    n = x_nchw.shape[0]
    assert x_nchw.shape[1:] == (1, S_IN, S_IN)
    f32, bf16 = jnp.float32, jnp.bfloat16
    x = x_nchw.astype(f32).reshape(n, S_IN, S_IN)

    w1big = _conv1_big(params["w1"]).astype(bf16)                      # (28, 240)
    w2big = _conv_big(params["w2"], W1 - 1, P1, 1).astype(bf16)        # (3, 232, 240)
    w3big = _conv_big(params["w3"], P1 - 1, P2, 2).astype(bf16)        # (5, 224, 112)
    wf1big = _fc1_big(params["wf1"]).astype(bf16)                      # (96, 192)
    wf2t = params["wf2"].T.astype(bf16)                                # (64, 64)
    wf3t = params["wf3"].T.astype(bf16)                                # (64, 10)

    bst1 = _bst(params, 1, W1)                                         # (3, 240)
    bst2 = _bst(params, 2, P1)                                         # (3, 240)
    bst3 = _bst(params, 3, P2)                                         # (3, 112)

    bf1 = params["bf1"].reshape(1, 64).astype(f32)
    bf2 = params["bf2"].reshape(1, 64).astype(f32)
    bf3 = params["bf3"].reshape(1, 10).astype(f32)

    weights = (w1big, bst1, w2big, bst2, w3big, bst3,
               wf1big, bf1, wf2t, bf2, wf3t, bf3)

    in_specs = [pl.BlockSpec((1, S_IN, S_IN), lambda i: (i, 0, 0))]
    in_specs += [pl.BlockSpec(a.shape, lambda i, nd=a.ndim: (0,) * nd)
                 for a in weights]

    out = pl.pallas_call(
        _net_kernel,
        out_shape=jax.ShapeDtypeStruct((n, 1, 10), f32),
        grid=(n,),
        in_specs=in_specs,
        out_specs=pl.BlockSpec((1, 1, 10), lambda i: (i, 0, 0)),
        compiler_params=pltpu.CompilerParams(
            dimension_semantics=("parallel",)),
    )(x, *weights)
    return out.reshape(n, 10)


# ----------------------------------------------------------------------------
# Pure-JAX f32 reference (PyTorch eval-mode semantics) for self-validation.
# ----------------------------------------------------------------------------
def reference_forward(x, p):
    def conv(h, w, b, pad):
        y = jax.lax.conv_general_dilated(
            h, w, window_strides=(1, 1), padding=[(pad, pad), (pad, pad)],
            dimension_numbers=("NCHW", "OIHW", "NCHW"))
        return y + b[None, :, None, None]

    def bn(h, i):
        s = p[f"g{i}"] * jax.lax.rsqrt(p[f"rv{i}"] + BN_EPS)
        t = p[f"be{i}"] - p[f"rm{i}"] * s
        return h * s[None, :, None, None] + t[None, :, None, None]

    def pool(h):
        return jax.lax.reduce_window(h, -jnp.inf, jax.lax.max,
                                     (1, 1, 2, 2), (1, 1, 2, 2), "VALID")

    h = x.astype(jnp.float32)
    h = pool(bn(jax.nn.relu(conv(h, p["w1"], p["b1"], 1)), 1))
    h = pool(bn(jax.nn.relu(conv(h, p["w2"], p["b2"], 1)), 2))
    h = pool(bn(jax.nn.relu(conv(h, p["w3"], p["b3"], 2)), 3))
    h = h.reshape(h.shape[0], -1)
    h = jax.nn.relu(h @ p["wf1"].T + p["bf1"])
    h = jax.nn.relu(h @ p["wf2"].T + p["bf2"])
    return h @ p["wf3"].T + p["bf3"]


# ----------------------------------------------------------------------------
# Deterministic synthetic parameters in PyTorch layouts:
# conv (Cout, Cin, kh, kw), FC (out, in), BatchNorm gamma/beta/running stats.
# ----------------------------------------------------------------------------
def init_params(key):
    ks = jax.random.split(key, 24)

    def rnd(k, shape, scale=0.1):
        return scale * jax.random.normal(k, shape, dtype=jnp.float32)

    return {
        "w1": rnd(ks[0], (C1, 1, 1, 1)),   "b1": rnd(ks[1], (C1,)),
        "g1": 1.0 + rnd(ks[2], (C1,)),     "be1": rnd(ks[3], (C1,)),
        "rm1": rnd(ks[4], (C1,), 0.05),
        "rv1": 1.0 + 0.1 * jnp.abs(jax.random.normal(ks[5], (C1,), jnp.float32)),
        "w2": rnd(ks[6], (C2, C1, 3, 3)),  "b2": rnd(ks[7], (C2,)),
        "g2": 1.0 + rnd(ks[8], (C2,)),     "be2": rnd(ks[9], (C2,)),
        "rm2": rnd(ks[10], (C2,), 0.05),
        "rv2": 1.0 + 0.1 * jnp.abs(jax.random.normal(ks[11], (C2,), jnp.float32)),
        "w3": rnd(ks[12], (C3, C2, 5, 5)), "b3": rnd(ks[13], (C3,)),
        "g3": 1.0 + rnd(ks[14], (C3,)),    "be3": rnd(ks[15], (C3,)),
        "rm3": rnd(ks[16], (C3,), 0.05),
        "rv3": 1.0 + 0.1 * jnp.abs(jax.random.normal(ks[17], (C3,), jnp.float32)),
        "wf1": rnd(ks[18], (64, C3 * P3 * P3)), "bf1": rnd(ks[19], (64,)),
        "wf2": rnd(ks[20], (64, 64)),           "bf2": rnd(ks[21], (64,)),
        "wf3": rnd(ks[22], (10, 64)),           "bf3": rnd(ks[23], (10,)),
    }


if __name__ == "__main__":
    key = jax.random.PRNGKey(0)
    k_in, k_par = jax.random.split(key)
    # fc1 = Linear(144, 64) implies a 28x28 single-channel input (MNIST-like).
    x = jax.random.normal(k_in, (2, 1, S_IN, S_IN), dtype=jnp.float32)
    params = init_params(k_par)

    out = jax.block_until_ready(forward(x, params))
    assert out.shape == (2, 10), out.shape
    assert bool(jnp.all(jnp.isfinite(out)))

    # Self-check against a plain-JAX f32 reference (kernel uses bf16 MXU operands).
    ref = jax.block_until_ready(reference_forward(x, params))
    max_err = float(jnp.max(jnp.abs(out - ref)))
    assert max_err < 0.25, f"kernel vs reference max abs err = {max_err}"

    print("KERNEL_OK")
</pallas_src>

<mosaic_0001>
module attributes {stable_mosaic.version = 11 : i64} {
  func.func @_net_kernel(%arg0: i32, %arg1: memref<1x28x28xf32, #tpu.memory_space<vmem>>, %arg2: memref<28x240xbf16, #tpu.memory_space<vmem>>, %arg3: memref<3x240xf32, #tpu.memory_space<vmem>>, %arg4: memref<3x232x240xbf16, #tpu.memory_space<vmem>>, %arg5: memref<3x240xf32, #tpu.memory_space<vmem>>, %arg6: memref<5x224x112xbf16, #tpu.memory_space<vmem>>, %arg7: memref<3x112xf32, #tpu.memory_space<vmem>>, %arg8: memref<96x192xbf16, #tpu.memory_space<vmem>>, %arg9: memref<1x64xf32, #tpu.memory_space<vmem>>, %arg10: memref<64x64xbf16, #tpu.memory_space<vmem>>, %arg11: memref<1x64xf32, #tpu.memory_space<vmem>>, %arg12: memref<64x10xbf16, #tpu.memory_space<vmem>>, %arg13: memref<1x10xf32, #tpu.memory_space<vmem>>, %arg14: memref<1x1x10xf32, #tpu.memory_space<vmem>>) attributes {dimension_semantics = [#tpu.dimension_semantics<parallel>], iteration_bounds = array<i64: 2>, scalar_prefetch = 0 : i64, scratch_operands = 0 : i64, tpu.core_type = #tpu.core_type<tc>, window_params = [{transform_indices = @transform_0, window_bounds = array<i64: 1, 28, 28>}, {pipeline_mode = #tpu.pipeline_mode<synchronous>, transform_indices = @transform_1, window_bounds = array<i64: 28, 240>}, {pipeline_mode = #tpu.pipeline_mode<synchronous>, transform_indices = @transform_2, window_bounds = array<i64: 3, 240>}, {pipeline_mode = #tpu.pipeline_mode<synchronous>, transform_indices = @transform_3, window_bounds = array<i64: 3, 232, 240>}, {pipeline_mode = #tpu.pipeline_mode<synchronous>, transform_indices = @transform_4, window_bounds = array<i64: 3, 240>}, {pipeline_mode = #tpu.pipeline_mode<synchronous>, transform_indices = @transform_5, window_bounds = array<i64: 5, 224, 112>}, {pipeline_mode = #tpu.pipeline_mode<synchronous>, transform_indices = @transform_6, window_bounds = array<i64: 3, 112>}, {pipeline_mode = #tpu.pipeline_mode<synchronous>, transform_indices = @transform_7, window_bounds = array<i64: 96, 192>}, {pipeline_mode = #tpu.pipeline_mode<synchronous>, transform_indices = @transform_8, window_bounds = array<i64: 1, 64>}, {pipeline_mode = #tpu.pipeline_mode<synchronous>, transform_indices = @transform_9, window_bounds = array<i64: 64, 64>}, {pipeline_mode = #tpu.pipeline_mode<synchronous>, transform_indices = @transform_10, window_bounds = array<i64: 1, 64>}, {pipeline_mode = #tpu.pipeline_mode<synchronous>, transform_indices = @transform_11, window_bounds = array<i64: 64, 10>}, {pipeline_mode = #tpu.pipeline_mode<synchronous>, transform_indices = @transform_12, window_bounds = array<i64: 1, 10>}, {transform_indices = @transform_13, window_bounds = array<i64: 1, 1, 10>}]} {
    %c0 = arith.constant 0 : index
    %c0_0 = arith.constant 0 : index
    %c0_1 = arith.constant 0 : index
    %0 = vector.load %arg1[%c0, %c0_0, %c0_1] : memref<1x28x28xf32, #tpu.memory_space<vmem>>, vector<1x28x28xf32>
    %1 = vector.shape_cast %0 : vector<1x28x28xf32> to vector<28x28xf32>
    %2 = arith.truncf %1 : vector<28x28xf32> to vector<28x28xbf16>
    %c0_2 = arith.constant 0 : index
    %c0_3 = arith.constant 0 : index
    %3 = vector.load %arg2[%c0_2, %c0_3] : memref<28x240xbf16, #tpu.memory_space<vmem>>, vector<28x240xbf16>
    %cst = arith.constant dense<0.000000e+00> : vector<28x240xf32>
    %4 = tpu.matmul %2, %3, %cst {dimension_numbers = #tpu.dot_dimension_numbers<[1], [0], [0], [1], [0, 0, 1, 1], [], []>} : vector<28x28xbf16>, vector<28x240xbf16>, vector<28x240xf32> -> vector<28x240xf32>
    %cst_4 = arith.constant 0.000000e+00 : f32
    %5 = vector.broadcast %cst_4 : f32 to vector<1x240xf32>
    %6 = tpu.concatenate %5, %4, %5 in 0 : vector<1x240xf32>, vector<28x240xf32>, vector<1x240xf32> -> vector<30x240xf32>
    %c0_5 = arith.constant 0 : index
    %c0_6 = arith.constant 0 : index
    %7 = vector.load %arg3[%c0_5, %c0_6] : memref<3x240xf32, #tpu.memory_space<vmem>>, vector<1x240xf32>
    %c1 = arith.constant 1 : index
    %c0_7 = arith.constant 0 : index
    %8 = vector.load %arg3[%c1, %c0_7] : memref<3x240xf32, #tpu.memory_space<vmem>>, vector<1x240xf32>
    %c2 = arith.constant 2 : index
    %c0_8 = arith.constant 0 : index
    %9 = vector.load %arg3[%c2, %c0_8] : memref<3x240xf32, #tpu.memory_space<vmem>>, vector<1x240xf32>
    %10 = vector.broadcast %7 : vector<1x240xf32> to vector<30x240xf32>
    %11 = arith.addf %6, %10 : vector<30x240xf32>
    %cst_9 = arith.constant 0.000000e+00 : f32
    %12 = vector.broadcast %cst_9 : f32 to vector<30x240xf32>
    %13 = arith.maximumf %11, %12 : vector<30x240xf32>
    %14 = vector.broadcast %8 : vector<1x240xf32> to vector<30x240xf32>
    %15 = arith.mulf %13, %14 : vector<30x240xf32>
    %16 = vector.broadcast %9 : vector<1x240xf32> to vector<30x240xf32>
    %17 = arith.addf %15, %16 : vector<30x240xf32>
    %18 = vector.extract_strided_slice %17 {offsets = [0, 0], sizes = [30, 232], strides = [1, 1]} : vector<30x240xf32> to vector<30x232xf32>
    %19 = vector.extract_strided_slice %17 {offsets = [0, 8], sizes = [30, 232], strides = [1, 1]} : vector<30x240xf32> to vector<30x232xf32>
    %20 = arith.maximumf %18, %19 : vector<30x232xf32>
    %21 = vector.extract_strided_slice %20 {offsets = [0, 0], sizes = [29, 232], strides = [1, 1]} : vector<30x232xf32> to vector<29x232xf32>
    %22 = vector.extract_strided_slice %20 {offsets = [1, 0], sizes = [29, 232], strides = [1, 1]} : vector<30x232xf32> to vector<29x232xf32>
    %23 = arith.maximumf %21, %22 : vector<29x232xf32>
    %24 = tpu.iota {dimensions = array<i32: 0>} : vector<15x29xi32>
    %25 = tpu.iota {dimensions = array<i32: 1>} : vector<15x29xi32>
    %c2_i32 = arith.constant 2 : i32
    %26 = vector.broadcast %c2_i32 : i32 to vector<15x29xi32>
    %27 = arith.muli %26, %24 : vector<15x29xi32>
    %28 = arith.cmpi eq, %25, %27 : vector<15x29xi32>
    %29 = arith.extui %28 : vector<15x29xi1> to vector<15x29xi32>
    %30 = arith.sitofp %29 : vector<15x29xi32> to vector<15x29xf32>
    %cst_10 = arith.constant dense<0.000000e+00> : vector<15x232xf32>
    %31 = tpu.matmul %30, %23, %cst_10 {dimension_numbers = #tpu.dot_dimension_numbers<[1], [0], [0], [1], [0, 0, 1, 1], [], []>} : vector<15x29xf32>, vector<29x232xf32>, vector<15x232xf32> -> vector<15x232xf32>
    %cst_11 = arith.constant 0.000000e+00 : f32
    %32 = vector.broadcast %cst_11 : f32 to vector<1x232xf32>
    %33 = tpu.concatenate %32, %31, %32 in 0 : vector<1x232xf32>, vector<15x232xf32>, vector<1x232xf32> -> vector<17x232xf32>
    %cst_12 = arith.constant 0.000000e+00 : f32
    %34 = vector.broadcast %cst_12 : f32 to vector<15x240xf32>
    %35 = vector.extract_strided_slice %33 {offsets = [0, 0], sizes = [15, 232], strides = [1, 1]} : vector<17x232xf32> to vector<15x232xf32>
    %36 = arith.truncf %35 : vector<15x232xf32> to vector<15x232xbf16>
    %c0_13 = arith.constant 0 : index
    %c0_14 = arith.constant 0 : index
    %c0_15 = arith.constant 0 : index
    %37 = vector.load %arg4[%c0_13, %c0_14, %c0_15] : memref<3x232x240xbf16, #tpu.memory_space<vmem>>, vector<1x232x240xbf16>
    %38 = vector.shape_cast %37 : vector<1x232x240xbf16> to vector<232x240xbf16>
    %cst_16 = arith.constant dense<0.000000e+00> : vector<15x240xf32>
    %39 = tpu.matmul %36, %38, %cst_16 {dimension_numbers = #tpu.dot_dimension_numbers<[1], [0], [0], [1], [0, 0, 1, 1], [], []>} : vector<15x232xbf16>, vector<232x240xbf16>, vector<15x240xf32> -> vector<15x240xf32>
    %40 = arith.addf %34, %39 : vector<15x240xf32>
    %41 = vector.extract_strided_slice %33 {offsets = [1, 0], sizes = [15, 232], strides = [1, 1]} : vector<17x232xf32> to vector<15x232xf32>
    %42 = arith.truncf %41 : vector<15x232xf32> to vector<15x232xbf16>
    %c1_17 = arith.constant 1 : index
    %c0_18 = arith.constant 0 : index
    %c0_19 = arith.constant 0 : index
    %43 = vector.load %arg4[%c1_17, %c0_18, %c0_19] : memref<3x232x240xbf16, #tpu.memory_space<vmem>>, vector<1x232x240xbf16>
    %44 = vector.shape_cast %43 : vector<1x232x240xbf16> to vector<232x240xbf16>
    %cst_20 = arith.constant dense<0.000000e+00> : vector<15x240xf32>
    %45 = tpu.matmul %42, %44, %cst_20 {dimension_numbers = #tpu.dot_dimension_numbers<[1], [0], [0], [1], [0, 0, 1, 1], [], []>} : vector<15x232xbf16>, vector<232x240xbf16>, vector<15x240xf32> -> vector<15x240xf32>
    %46 = arith.addf %40, %45 : vector<15x240xf32>
    %47 = vector.extract_strided_slice %33 {offsets = [2, 0], sizes = [15, 232], strides = [1, 1]} : vector<17x232xf32> to vector<15x232xf32>
    %48 = arith.truncf %47 : vector<15x232xf32> to vector<15x232xbf16>
    %c2_21 = arith.constant 2 : index
    %c0_22 = arith.constant 0 : index
    %c0_23 = arith.constant 0 : index
    %49 = vector.load %arg4[%c2_21, %c0_22, %c0_23] : memref<3x232x240xbf16, #tpu.memory_space<vmem>>, vector<1x232x240xbf16>
    %50 = vector.shape_cast %49 : vector<1x232x240xbf16> to vector<232x240xbf16>
    %cst_24 = arith.constant dense<0.000000e+00> : vector<15x240xf32>
    %51 = tpu.matmul %48, %50, %cst_24 {dimension_numbers = #tpu.dot_dimension_numbers<[1], [0], [0], [1], [0, 0, 1, 1], [], []>} : vector<15x232xbf16>, vector<232x240xbf16>, vector<15x240xf32> -> vector<15x240xf32>
    %52 = arith.addf %46, %51 : vector<15x240xf32>
    %c0_25 = arith.constant 0 : index
    %c0_26 = arith.constant 0 : index
    %53 = vector.load %arg5[%c0_25, %c0_26] : memref<3x240xf32, #tpu.memory_space<vmem>>, vector<1x240xf32>
    %c1_27 = arith.constant 1 : index
    %c0_28 = arith.constant 0 : index
    %54 = vector.load %arg5[%c1_27, %c0_28] : memref<3x240xf32, #tpu.memory_space<vmem>>, vector<1x240xf32>
    %c2_29 = arith.constant 2 : index
    %c0_30 = arith.constant 0 : index
    %55 = vector.load %arg5[%c2_29, %c0_30] : memref<3x240xf32, #tpu.memory_space<vmem>>, vector<1x240xf32>
    %56 = vector.broadcast %53 : vector<1x240xf32> to vector<15x240xf32>
    %57 = arith.addf %52, %56 : vector<15x240xf32>
    %cst_31 = arith.constant 0.000000e+00 : f32
    %58 = vector.broadcast %cst_31 : f32 to vector<15x240xf32>
    %59 = arith.maximumf %57, %58 : vector<15x240xf32>
    %60 = vector.broadcast %54 : vector<1x240xf32> to vector<15x240xf32>
    %61 = arith.mulf %59, %60 : vector<15x240xf32>
    %62 = vector.broadcast %55 : vector<1x240xf32> to vector<15x240xf32>
    %63 = arith.addf %61, %62 : vector<15x240xf32>
    %64 = vector.extract_strided_slice %63 {offsets = [0, 0], sizes = [15, 224], strides = [1, 1]} : vector<15x240xf32> to vector<15x224xf32>
    %65 = vector.extract_strided_slice %63 {offsets = [0, 16], sizes = [15, 224], strides = [1, 1]} : vector<15x240xf32> to vector<15x224xf32>
    %66 = arith.maximumf %64, %65 : vector<15x224xf32>
    %67 = vector.extract_strided_slice %66 {offsets = [0, 0], sizes = [14, 224], strides = [1, 1]} : vector<15x224xf32> to vector<14x224xf32>
    %68 = vector.extract_strided_slice %66 {offsets = [1, 0], sizes = [14, 224], strides = [1, 1]} : vector<15x224xf32> to vector<14x224xf32>
    %69 = arith.maximumf %67, %68 : vector<14x224xf32>
    %70 = tpu.iota {dimensions = array<i32: 0>} : vector<7x14xi32>
    %71 = tpu.iota {dimensions = array<i32: 1>} : vector<7x14xi32>
    %c2_i32_32 = arith.constant 2 : i32
    %72 = vector.broadcast %c2_i32_32 : i32 to vector<7x14xi32>
    %73 = arith.muli %72, %70 : vector<7x14xi32>
    %74 = arith.cmpi eq, %71, %73 : vector<7x14xi32>
    %75 = arith.extui %74 : vector<7x14xi1> to vector<7x14xi32>
    %76 = arith.sitofp %75 : vector<7x14xi32> to vector<7x14xf32>
    %cst_33 = arith.constant dense<0.000000e+00> : vector<7x224xf32>
    %77 = tpu.matmul %76, %69, %cst_33 {dimension_numbers = #tpu.dot_dimension_numbers<[1], [0], [0], [1], [0, 0, 1, 1], [], []>} : vector<7x14xf32>, vector<14x224xf32>, vector<7x224xf32> -> vector<7x224xf32>
    %cst_34 = arith.constant 0.000000e+00 : f32
    %78 = vector.broadcast %cst_34 : f32 to vector<2x224xf32>
    %79 = tpu.concatenate %78, %77, %78 in 0 : vector<2x224xf32>, vector<7x224xf32>, vector<2x224xf32> -> vector<11x224xf32>
    %cst_35 = arith.constant 0.000000e+00 : f32
    %80 = vector.broadcast %cst_35 : f32 to vector<7x112xf32>
    %81 = vector.extract_strided_slice %79 {offsets = [0, 0], sizes = [7, 224], strides = [1, 1]} : vector<11x224xf32> to vector<7x224xf32>
    %82 = arith.truncf %81 : vector<7x224xf32> to vector<7x224xbf16>
    %c0_36 = arith.constant 0 : index
    %c0_37 = arith.constant 0 : index
    %c0_38 = arith.constant 0 : index
    %83 = vector.load %arg6[%c0_36, %c0_37, %c0_38] : memref<5x224x112xbf16, #tpu.memory_space<vmem>>, vector<1x224x112xbf16>
    %84 = vector.shape_cast %83 : vector<1x224x112xbf16> to vector<224x112xbf16>
    %cst_39 = arith.constant dense<0.000000e+00> : vector<7x112xf32>
    %85 = tpu.matmul %82, %84, %cst_39 {dimension_numbers = #tpu.dot_dimension_numbers<[1], [0], [0], [1], [0, 0, 1, 1], [], []>} : vector<7x224xbf16>, vector<224x112xbf16>, vector<7x112xf32> -> vector<7x112xf32>
    %86 = arith.addf %80, %85 : vector<7x112xf32>
    %87 = vector.extract_strided_slice %79 {offsets = [1, 0], sizes = [7, 224], strides = [1, 1]} : vector<11x224xf32> to vector<7x224xf32>
    %88 = arith.truncf %87 : vector<7x224xf32> to vector<7x224xbf16>
    %c1_40 = arith.constant 1 : index
    %c0_41 = arith.constant 0 : index
    %c0_42 = arith.constant 0 : index
    %89 = vector.load %arg6[%c1_40, %c0_41, %c0_42] : memref<5x224x112xbf16, #tpu.memory_space<vmem>>, vector<1x224x112xbf16>
    %90 = vector.shape_cast %89 : vector<1x224x112xbf16> to vector<224x112xbf16>
    %cst_43 = arith.constant dense<0.000000e+00> : vector<7x112xf32>
    %91 = tpu.matmul %88, %90, %cst_43 {dimension_numbers = #tpu.dot_dimension_numbers<[1], [0], [0], [1], [0, 0, 1, 1], [], []>} : vector<7x224xbf16>, vector<224x112xbf16>, vector<7x112xf32> -> vector<7x112xf32>
    %92 = arith.addf %86, %91 : vector<7x112xf32>
    %93 = vector.extract_strided_slice %79 {offsets = [2, 0], sizes = [7, 224], strides = [1, 1]} : vector<11x224xf32> to vector<7x224xf32>
    %94 = arith.truncf %93 : vector<7x224xf32> to vector<7x224xbf16>
    %c2_44 = arith.constant 2 : index
    %c0_45 = arith.constant 0 : index
    %c0_46 = arith.constant 0 : index
    %95 = vector.load %arg6[%c2_44, %c0_45, %c0_46] : memref<5x224x112xbf16, #tpu.memory_space<vmem>>, vector<1x224x112xbf16>
    %96 = vector.shape_cast %95 : vector<1x224x112xbf16> to vector<224x112xbf16>
    %cst_47 = arith.constant dense<0.000000e+00> : vector<7x112xf32>
    %97 = tpu.matmul %94, %96, %cst_47 {dimension_numbers = #tpu.dot_dimension_numbers<[1], [0], [0], [1], [0, 0, 1, 1], [], []>} : vector<7x224xbf16>, vector<224x112xbf16>, vector<7x112xf32> -> vector<7x112xf32>
    %98 = arith.addf %92, %97 : vector<7x112xf32>
    %99 = vector.extract_strided_slice %79 {offsets = [3, 0], sizes = [7, 224], strides = [1, 1]} : vector<11x224xf32> to vector<7x224xf32>
    %100 = arith.truncf %99 : vector<7x224xf32> to vector<7x224xbf16>
    %c3 = arith.constant 3 : index
    %c0_48 = arith.constant 0 : index
    %c0_49 = arith.constant 0 : index
    %101 = vector.load %arg6[%c3, %c0_48, %c0_49] : memref<5x224x112xbf16, #tpu.memory_space<vmem>>, vector<1x224x112xbf16>
    %102 = vector.shape_cast %101 : vector<1x224x112xbf16> to vector<224x112xbf16>
    %cst_50 = arith.constant dense<0.000000e+00> : vector<7x112xf32>
    %103 = tpu.matmul %100, %102, %cst_50 {dimension_numbers = #tpu.dot_dimension_numbers<[1], [0], [0], [1], [0, 0, 1, 1], [], []>} : vector<7x224xbf16>, vector<224x112xbf16>, vector<7x112xf32> -> vector<7x112xf32>
    %104 = arith.addf %98, %103 : vector<7x112xf32>
    %105 = vector.extract_strided_slice %79 {offsets = [4, 0], sizes = [7, 224], strides = [1, 1]} : vector<11x224xf32> to vector<7x224xf32>
    %106 = arith.truncf %105 : vector<7x224xf32> to vector<7x224xbf16>
    %c4 = arith.constant 4 : index
    %c0_51 = arith.constant 0 : index
    %c0_52 = arith.constant 0 : index
    %107 = vector.load %arg6[%c4, %c0_51, %c0_52] : memref<5x224x112xbf16, #tpu.memory_space<vmem>>, vector<1x224x112xbf16>
    %108 = vector.shape_cast %107 : vector<1x224x112xbf16> to vector<224x112xbf16>
    %cst_53 = arith.constant dense<0.000000e+00> : vector<7x112xf32>
    %109 = tpu.matmul %106, %108, %cst_53 {dimension_numbers = #tpu.dot_dimension_numbers<[1], [0], [0], [1], [0, 0, 1, 1], [], []>} : vector<7x224xbf16>, vector<224x112xbf16>, vector<7x112xf32> -> vector<7x112xf32>
    %110 = arith.addf %104, %109 : vector<7x112xf32>
    %c0_54 = arith.constant 0 : index
    %c0_55 = arith.constant 0 : index
    %111 = vector.load %arg7[%c0_54, %c0_55] : memref<3x112xf32, #tpu.memory_space<vmem>>, vector<1x112xf32>
    %c1_56 = arith.constant 1 : index
    %c0_57 = arith.constant 0 : index
    %112 = vector.load %arg7[%c1_56, %c0_57] : memref<3x112xf32, #tpu.memory_space<vmem>>, vector<1x112xf32>
    %c2_58 = arith.constant 2 : index
    %c0_59 = arith.constant 0 : index
    %113 = vector.load %arg7[%c2_58, %c0_59] : memref<3x112xf32, #tpu.memory_space<vmem>>, vector<1x112xf32>
    %114 = vector.broadcast %111 : vector<1x112xf32> to vector<7x112xf32>
    %115 = arith.addf %110, %114 : vector<7x112xf32>
    %cst_60 = arith.constant 0.000000e+00 : f32
    %116 = vector.broadcast %cst_60 : f32 to vector<7x112xf32>
    %117 = arith.maximumf %115, %116 : vector<7x112xf32>
    %118 = vector.broadcast %112 : vector<1x112xf32> to vector<7x112xf32>
    %119 = arith.mulf %117, %118 : vector<7x112xf32>
    %120 = vector.broadcast %113 : vector<1x112xf32> to vector<7x112xf32>
    %121 = arith.addf %119, %120 : vector<7x112xf32>
    %122 = vector.extract_strided_slice %121 {offsets = [0, 0], sizes = [7, 96], strides = [1, 1]} : vector<7x112xf32> to vector<7x96xf32>
    %123 = vector.extract_strided_slice %121 {offsets = [0, 16], sizes = [7, 96], strides = [1, 1]} : vector<7x112xf32> to vector<7x96xf32>
    %124 = arith.maximumf %122, %123 : vector<7x96xf32>
    %125 = vector.extract_strided_slice %124 {offsets = [0, 0], sizes = [6, 96], strides = [1, 1]} : vector<7x96xf32> to vector<6x96xf32>
    %126 = vector.extract_strided_slice %124 {offsets = [1, 0], sizes = [6, 96], strides = [1, 1]} : vector<7x96xf32> to vector<6x96xf32>
    %127 = arith.maximumf %125, %126 : vector<6x96xf32>
    %128 = tpu.iota {dimensions = array<i32: 0>} : vector<3x6xi32>
    %129 = tpu.iota {dimensions = array<i32: 1>} : vector<3x6xi32>
    %c2_i32_61 = arith.constant 2 : i32
    %130 = vector.broadcast %c2_i32_61 : i32 to vector<3x6xi32>
    %131 = arith.muli %130, %128 : vector<3x6xi32>
    %132 = arith.cmpi eq, %129, %131 : vector<3x6xi32>
    %133 = arith.extui %132 : vector<3x6xi1> to vector<3x6xi32>
    %134 = arith.sitofp %133 : vector<3x6xi32> to vector<3x6xf32>
    %cst_62 = arith.constant dense<0.000000e+00> : vector<3x96xf32>
    %135 = tpu.matmul %134, %127, %cst_62 {dimension_numbers = #tpu.dot_dimension_numbers<[1], [0], [0], [1], [0, 0, 1, 1], [], []>} : vector<3x6xf32>, vector<6x96xf32>, vector<3x96xf32> -> vector<3x96xf32>
    %136 = arith.truncf %135 : vector<3x96xf32> to vector<3x96xbf16>
    %c0_63 = arith.constant 0 : index
    %c0_64 = arith.constant 0 : index
    %137 = vector.load %arg8[%c0_63, %c0_64] : memref<96x192xbf16, #tpu.memory_space<vmem>>, vector<96x192xbf16>
    %cst_65 = arith.constant dense<0.000000e+00> : vector<3x192xf32>
    %138 = tpu.matmul %136, %137, %cst_65 {dimension_numbers = #tpu.dot_dimension_numbers<[1], [0], [0], [1], [0, 0, 1, 1], [], []>} : vector<3x96xbf16>, vector<96x192xbf16>, vector<3x192xf32> -> vector<3x192xf32>
    %139 = vector.extract_strided_slice %138 {offsets = [0, 0], sizes = [1, 64], strides = [1, 1]} : vector<3x192xf32> to vector<1x64xf32>
    %140 = vector.extract_strided_slice %138 {offsets = [1, 64], sizes = [1, 64], strides = [1, 1]} : vector<3x192xf32> to vector<1x64xf32>
    %141 = arith.addf %139, %140 : vector<1x64xf32>
    %142 = vector.extract_strided_slice %138 {offsets = [2, 128], sizes = [1, 64], strides = [1, 1]} : vector<3x192xf32> to vector<1x64xf32>
    %143 = arith.addf %141, %142 : vector<1x64xf32>
    %c0_66 = arith.constant 0 : index
    %c0_67 = arith.constant 0 : index
    %144 = vector.load %arg9[%c0_66, %c0_67] : memref<1x64xf32, #tpu.memory_space<vmem>>, vector<1x64xf32>
    %145 = arith.addf %143, %144 : vector<1x64xf32>
    %cst_68 = arith.constant 0.000000e+00 : f32
    %146 = vector.broadcast %cst_68 : f32 to vector<1x64xf32>
    %147 = arith.maximumf %145, %146 : vector<1x64xf32>
    %148 = arith.truncf %147 : vector<1x64xf32> to vector<1x64xbf16>
    %c0_69 = arith.constant 0 : index
    %c0_70 = arith.constant 0 : index
    %149 = vector.load %arg10[%c0_69, %c0_70] : memref<64x64xbf16, #tpu.memory_space<vmem>>, vector<64x64xbf16>
    %cst_71 = arith.constant dense<0.000000e+00> : vector<1x64xf32>
    %150 = tpu.matmul %148, %149, %cst_71 {dimension_numbers = #tpu.dot_dimension_numbers<[1], [0], [0], [1], [0, 0, 1, 1], [], []>} : vector<1x64xbf16>, vector<64x64xbf16>, vector<1x64xf32> -> vector<1x64xf32>
    %c0_72 = arith.constant 0 : index
    %c0_73 = arith.constant 0 : index
    %151 = vector.load %arg11[%c0_72, %c0_73] : memref<1x64xf32, #tpu.memory_space<vmem>>, vector<1x64xf32>
    %152 = arith.addf %150, %151 : vector<1x64xf32>
    %cst_74 = arith.constant 0.000000e+00 : f32
    %153 = vector.broadcast %cst_74 : f32 to vector<1x64xf32>
    %154 = arith.maximumf %152, %153 : vector<1x64xf32>
    %155 = arith.truncf %154 : vector<1x64xf32> to vector<1x64xbf16>
    %c0_75 = arith.constant 0 : index
    %c0_76 = arith.constant 0 : index
    %156 = vector.load %arg12[%c0_75, %c0_76] : memref<64x10xbf16, #tpu.memory_space<vmem>>, vector<64x10xbf16>
    %cst_77 = arith.constant dense<0.000000e+00> : vector<1x10xf32>
    %157 = tpu.matmul %155, %156, %cst_77 {dimension_numbers = #tpu.dot_dimension_numbers<[1], [0], [0], [1], [0, 0, 1, 1], [], []>} : vector<1x64xbf16>, vector<64x10xbf16>, vector<1x10xf32> -> vector<1x10xf32>
    %c0_78 = arith.constant 0 : index
    %c0_79 = arith.constant 0 : index
    %158 = vector.load %arg13[%c0_78, %c0_79] : memref<1x10xf32, #tpu.memory_space<vmem>>, vector<1x10xf32>
    %159 = arith.addf %157, %158 : vector<1x10xf32>
    %c0_80 = arith.constant 0 : index
    %c0_81 = arith.constant 0 : index
    %c0_82 = arith.constant 0 : index
    %160 = vector.load %arg14[%c0_80, %c0_81, %c0_82] : memref<1x1x10xf32, #tpu.memory_space<vmem>>, vector<1x1x10xf32>
    %161 = vector.shape_cast %160 : vector<1x1x10xf32> to vector<1x10xf32>
    %162 = vector.shape_cast %159 : vector<1x10xf32> to vector<1x1x10xf32>
    tpu.vector_store %arg14[%c0_80, %c0_81, %c0_82], %162 {strides = array<i32>} : memref<1x1x10xf32, #tpu.memory_space<vmem>>, vector<1x1x10xf32>,
    return
  }
  func.func @transform_0(%arg0: i32) -> (i32, i32, i32) {
    %c0_i32 = arith.constant 0 : i32
    %c0_i32_0 = arith.constant 0 : i32
    %c0_i32_1 = arith.constant 0 : i32
    return %arg0, %c0_i32, %c0_i32_0 : i32, i32, i32
  }
  func.func @transform_1(%arg0: i32) -> (i32, i32) {
    %c0_i32 = arith.constant 0 : i32
    %c0_i32_0 = arith.constant 0 : i32
    %c0_i32_1 = arith.constant 0 : i32
    return %c0_i32, %c0_i32_0 : i32, i32
  }
  func.func @transform_2(%arg0: i32) -> (i32, i32) {
    %c0_i32 = arith.constant 0 : i32
    %c0_i32_0 = arith.constant 0 : i32
    %c0_i32_1 = arith.constant 0 : i32
    return %c0_i32, %c0_i32_0 : i32, i32
  }
  func.func @transform_3(%arg0: i32) -> (i32, i32, i32) {
    %c0_i32 = arith.constant 0 : i32
    %c0_i32_0 = arith.constant 0 : i32
    %c0_i32_1 = arith.constant 0 : i32
    %c0_i32_2 = arith.constant 0 : i32
    return %c0_i32, %c0_i32_0, %c0_i32_1 : i32, i32, i32
  }
  func.func @transform_4(%arg0: i32) -> (i32, i32) {
    %c0_i32 = arith.constant 0 : i32
    %c0_i32_0 = arith.constant 0 : i32
    %c0_i32_1 = arith.constant 0 : i32
    return %c0_i32, %c0_i32_0 : i32, i32
  }
  func.func @transform_5(%arg0: i32) -> (i32, i32, i32) {
    %c0_i32 = arith.constant 0 : i32
    %c0_i32_0 = arith.constant 0 : i32
    %c0_i32_1 = arith.constant 0 : i32
    %c0_i32_2 = arith.constant 0 : i32
    return %c0_i32, %c0_i32_0, %c0_i32_1 : i32, i32, i32
  }
  func.func @transform_6(%arg0: i32) -> (i32, i32) {
    %c0_i32 = arith.constant 0 : i32
    %c0_i32_0 = arith.constant 0 : i32
    %c0_i32_1 = arith.constant 0 : i32
    return %c0_i32, %c0_i32_0 : i32, i32
  }
  func.func @transform_7(%arg0: i32) -> (i32, i32) {
    %c0_i32 = arith.constant 0 : i32
    %c0_i32_0 = arith.constant 0 : i32
    %c0_i32_1 = arith.constant 0 : i32
    return %c0_i32, %c0_i32_0 : i32, i32
  }
  func.func @transform_8(%arg0: i32) -> (i32, i32) {
    %c0_i32 = arith.constant 0 : i32
    %c0_i32_0 = arith.constant 0 : i32
    %c0_i32_1 = arith.constant 0 : i32
    return %c0_i32, %c0_i32_0 : i32, i32
  }
  func.func @transform_9(%arg0: i32) -> (i32, i32) {
    %c0_i32 = arith.constant 0 : i32
    %c0_i32_0 = arith.constant 0 : i32
    %c0_i32_1 = arith.constant 0 : i32
    return %c0_i32, %c0_i32_0 : i32, i32
  }
  func.func @transform_10(%arg0: i32) -> (i32, i32) {
    %c0_i32 = arith.constant 0 : i32
    %c0_i32_0 = arith.constant 0 : i32
    %c0_i32_1 = arith.constant 0 : i32
    return %c0_i32, %c0_i32_0 : i32, i32
  }
  func.func @transform_11(%arg0: i32) -> (i32, i32) {
    %c0_i32 = arith.constant 0 : i32
    %c0_i32_0 = arith.constant 0 : i32
    %c0_i32_1 = arith.constant 0 : i32
    return %c0_i32, %c0_i32_0 : i32, i32
  }
  func.func @transform_12(%arg0: i32) -> (i32, i32) {
    %c0_i32 = arith.constant 0 : i32
    %c0_i32_0 = arith.constant 0 : i32
    %c0_i32_1 = arith.constant 0 : i32
    return %c0_i32, %c0_i32_0 : i32, i32
  }
  func.func @transform_13(%arg0: i32) -> (i32, i32, i32) {
    %c0_i32 = arith.constant 0 : i32
    %c0_i32_0 = arith.constant 0 : i32
    %c0_i32_1 = arith.constant 0 : i32
    return %arg0, %c0_i32, %c0_i32_0 : i32, i32, i32
  }
}

</mosaic_0001>

<llo_original>
// kernel: tile.52
$region0: #{tile.52}
  #allocation0 [shape = 's32[1]{0}', space=sflag, size = 0x4, scoped, tag = 'scoped memory for tile.52']
  %s0 = inlined_call_operand.vmem [shape: f32[8], index: 0, kind: input, shape index: {}]
  %s1 = inlined_call_operand.vmem [shape: f32[30,8], index: 1, kind: output, shape index: {}]
  // Predicated region
  $region2: #{tile.52} parent=0 // pred_check
    _
  $region3: #{tile.52} parent=0 // pred_check_branch
    %3 = sbr.rel (0) target = $region5
  $region4: #{tile.52} parent=0 // pred_region
    _
  $region5: #{tile.52} parent=0 // pred_fallthru
    _
  %v4 = vld [vmem:[%s0] ss:$0 sm:$0xff]
  %5 = vst [vmem:[%s1] sm:$0xff] %v4
  %s6 = scalar_lea.vmem %s1, 8
  %7 = vst [vmem:[%s6] sm:$0xff] %v4
  %s8 = scalar_lea.vmem %s1, 16
  %9 = vst [vmem:[%s8] sm:$0xff] %v4
  %s10 = scalar_lea.vmem %s1, 24
  %11 = vst [vmem:[%s10] sm:$0xff] %v4

// kernel: tile.58
$region0: #{tile.58}
  %s0 = inlined_call_operand.vmem [shape: f32[30,8], index: 0, kind: input, shape index: {}]
  %s1 = inlined_call_operand.vmem [shape: f32[1,240], index: 1, kind: output, shape index: {}]
  $region1: #{tile.58} parent=0
    #allocation0 [shape = 'u8[8192]{0}', space=vmem, size = 0x2000, scoped, tag = 'scoped mem for output reshape']
    %s2 = smov 3
    %v3 = vld [vmem:[%s0] ss:$16 sm:%s2]
    %vm4 = vcmask 64512
    %5 = vst.msk [vmem:[#allocation0] ss:$8 sm:$0x3] %vm4, %v3
    %s6 = scalar_lea.vmem %s0, 15
    %v7 = vld [vmem:[%s6] sm:$0x1]
    %8 = vrot.lane.b32.xlu0 %v7, 120
    %v9 = vpop.permute.xlu0 %8
    %vm10 = vcmask 1048512
    %11 = vst.msk [vmem:[#allocation0] sm:$0x1] %vm10, %v9
    %s12 = scalar_lea.vmem %s0, 14
    %v13 = vld [vmem:[%s12] sm:$0x1]
    %14 = vrot.lane.b32.xlu0 %v13, 112
    %v15 = vpop.permute.xlu0 %14
    %vm16 = vcmask 982912
    %17 = vst.msk [vmem:[#allocation0] sm:$0x1] %vm16, %v15
    %s18 = scalar_lea.vmem %s0, 13
    %s19 = smov 3
    %v20 = vld [vmem:[%s18] ss:$16 sm:%s19]
    %21 = vrot.lane.b32.xlu0 %v20, 104
    %v22 = vpop.permute.xlu0 %21
    %vm23 = vcmask 917312
    %24 = vst.msk [vmem:[#allocation0] ss:$8 sm:$0x3] %vm23, %v22
    %s25 = scalar_lea.vmem %s0, 12
    %s26 = smov 3
    %v27 = vld [vmem:[%s25] ss:$16 sm:%s26]
    %28 = vrot.lane.b32.xlu0 %v27, 96
    %v29 = vpop.permute.xlu0 %28
    %vm30 = vcmask 851712
    %31 = vst.msk [vmem:[#allocation0] ss:$8 sm:$0x3] %vm30, %v29
    %s32 = scalar_lea.vmem %s0, 11
    %s33 = smov 3
    %v34 = vld [vmem:[%s32] ss:$16 sm:%s33]
    %35 = vrot.lane.b32.xlu0 %v34, 88
    %v36 = vpop.permute.xlu0 %35
    %vm37 = vcmask 786112
    %38 = vst.msk [vmem:[#allocation0] ss:$8 sm:$0x3] %vm37, %v36
    %s39 = scalar_lea.vmem %s0, 10
    %s40 = smov 3
    %v41 = vld [vmem:[%s39] ss:$16 sm:%s40]
    %42 = vrot.lane.b32.xlu0 %v41, 80
    %v43 = vpop.permute.xlu0 %42
    %vm44 = vcmask 720512
    %45 = vst.msk [vmem:[#allocation0] ss:$8 sm:$0x3] %vm44, %v43
    %s46 = scalar_lea.vmem %s0, 9
    %s47 = smov 3
    %v48 = vld [vmem:[%s46] ss:$16 sm:%s47]
    %49 = vrot.lane.b32.xlu0 %v48, 72
    %v50 = vpop.permute.xlu0 %49
    %vm51 = vcmask 654912
    %52 = vst.msk [vmem:[#allocation0] ss:$8 sm:$0x3] %vm51, %v50
    %s53 = scalar_lea.vmem %s0, 8
    %s54 = smov 3
    %v55 = vld [vmem:[%s53] ss:$16 sm:%s54]
    %56 = vrot.lane.b32.xlu0 %v55, 64
    %v57 = vpop.permute.xlu0 %56
    %vm58 = vcmask 589312
    %59 = vst.msk [vmem:[#allocation0] ss:$8 sm:$0x3] %vm58, %v57
    %s60 = scalar_lea.vmem %s0, 7
    %s61 = smov 3
    %v62 = vld [vmem:[%s60] ss:$16 sm:%s61]
    %63 = vrot.lane.b32.xlu0 %v62, 56
    %v64 = vpop.permute.xlu0 %63
    %vm65 = vcmask 523712
    %66 = vst.msk [vmem:[#allocation0] ss:$8 sm:$0x3] %vm65, %v64
    %s67 = scalar_lea.vmem %s0, 6
    %s68 = smov 3
    %v69 = vld [vmem:[%s67] ss:$16 sm:%s68]
    %70 = vrot.lane.b32.xlu0 %v69, 48
    %v71 = vpop.permute.xlu0 %70
    %vm72 = vcmask 458112
    %73 = vst.msk [vmem:[#allocation0] ss:$8 sm:$0x3] %vm72, %v71
    %s74 = scalar_lea.vmem %s0, 5
    %s75 = smov 3
    %v76 = vld [vmem:[%s74] ss:$16 sm:%s75]
    %77 = vrot.lane.b32.xlu0 %v76, 40
    %v78 = vpop.permute.xlu0 %77
    %vm79 = vcmask 392512
    %80 = vst.msk [vmem:[#allocation0] ss:$8 sm:$0x3] %vm79, %v78
    %s81 = scalar_lea.vmem %s0, 4
    %s82 = smov 3
    %v83 = vld [vmem:[%s81] ss:$16 sm:%s82]
    %84 = vrot.lane.b32.xlu0 %v83, 32
    %v85 = vpop.permute.xlu0 %84
    %vm86 = vcmask 326912
    %87 = vst.msk [vmem:[#allocation0] ss:$8 sm:$0x3] %vm86, %v85
    %s88 = scalar_lea.vmem %s0, 3
    %s89 = smov 3
    %v90 = vld [vmem:[%s88] ss:$16 sm:%s89]
    %91 = vrot.lane.b32.xlu0 %v90, 24
    %v92 = vpop.permute.xlu0 %91
    %vm93 = vcmask 261312
    %94 = vst.msk [vmem:[#allocation0] ss:$8 sm:$0x3] %vm93, %v92
    %s95 = scalar_lea.vmem %s0, 2
    %s96 = smov 3
    %v97 = vld [vmem:[%s95] ss:$16 sm:%s96]
    %98 = vrot.lane.b32.xlu0 %v97, 16
    %v99 = vpop.permute.xlu0 %98
    %vm100 = vcmask 195712
    %101 = vst.msk [vmem:[#allocation0] ss:$8 sm:$0x3] %vm100, %v99
    %s102 = scalar_lea.vmem %s0, 1
    %s103 = smov 3
    %v104 = vld [vmem:[%s102] ss:$16 sm:%s103]
    %105 = vrot.lane.b32.xlu0 %v104, 8
    %v106 = vpop.permute.xlu0 %105
    %vm107 = vcmask 130112
    %108 = vst.msk [vmem:[#allocation0] ss:$8 sm:$0x3] %vm107, %v106
    %s110 = sshllo.u32 0, 1
    %v112 = vld [vmem:[#allocation0] sm:%s110]
    %s113 = sshllo.u32 0, 1
    %114 = vst [vmem:[%s1] sm:%s113] %v112
    %s115 = scalar_lea.vmem [#allocation0], 8
    %v116 = vld [vmem:[%s115] sm:%s110]
    %s117 = sshllo.u32 0, 1
    %s118 = scalar_lea.vmem %s1, 1
    %119 = vst [vmem:[%s118] sm:%s117] %v116

// kernel: tile.67
$region0: #{tile.67}
  #allocation0 [shape = 's32[1]{0}', space=sflag, size = 0x4, scoped, tag = 'scoped memory for tile.67']
  %s0 = inlined_call_operand.vmem [shape: f32[16], index: 0, kind: input, shape index: {}]
  %s1 = inlined_call_operand.vmem [shape: f32[15,16], index: 1, kind: output, shape index: {}]
  // Predicated region
  $region2: #{tile.67} parent=0 // pred_check
    _
  $region3: #{tile.67} parent=0 // pred_check_branch
    %3 = sbr.rel (0) target = $region5
  $region4: #{tile.67} parent=0 // pred_region
    _
  $region5: #{tile.67} parent=0 // pred_fallthru
    _
  %v4 = vld [vmem:[%s0] ss:$0 sm:$0xff]
  %5 = vst [vmem:[%s1] sm:$0xff] %v4
  %s6 = scalar_lea.vmem %s1, 8
  %7 = vst [vmem:[%s6] sm:$0xff] %v4

// kernel: tile.73
$region0: #{tile.73}
  %s0 = inlined_call_operand.vmem [shape: f32[15,16], index: 0, kind: input, shape index: {}]
  %s1 = inlined_call_operand.vmem [shape: f32[1,240], index: 1, kind: output, shape index: {}]
  $region1: #{tile.73} parent=0
    #allocation0 [shape = 'u8[8192]{0}', space=vmem, size = 0x2000, scoped, tag = 'scoped mem for output reshape']
    %s2 = smov 3
    %v3 = vld [vmem:[%s0] ss:$8 sm:%s2]
    %vm4 = vcmask 130048
    %5 = vst.msk [vmem:[#allocation0] ss:$8 sm:$0x3] %vm4, %v3
    %s6 = scalar_lea.vmem %s0, 7
    %v7 = vld [vmem:[%s6] sm:$0x1]
    %8 = vrot.lane.b32.xlu0 %v7, 112
    %v9 = vpop.permute.xlu0 %8
    %vm10 = vcmask 1048448
    %11 = vst.msk [vmem:[#allocation0] sm:$0x1] %vm10, %v9
    %s12 = scalar_lea.vmem %s0, 6
    %s13 = smov 3
    %v14 = vld [vmem:[%s12] ss:$8 sm:%s13]
    %15 = vrot.lane.b32.xlu0 %v14, 96
    %v16 = vpop.permute.xlu0 %15
    %vm17 = vcmask 917248
    %18 = vst.msk [vmem:[#allocation0] ss:$8 sm:$0x3] %vm17, %v16
    %s19 = scalar_lea.vmem %s0, 5
    %s20 = smov 3
    %v21 = vld [vmem:[%s19] ss:$8 sm:%s20]
    %22 = vrot.lane.b32.xlu0 %v21, 80
    %v23 = vpop.permute.xlu0 %22
    %vm24 = vcmask 786048
    %25 = vst.msk [vmem:[#allocation0] ss:$8 sm:$0x3] %vm24, %v23
    %s26 = scalar_lea.vmem %s0, 4
    %s27 = smov 3
    %v28 = vld [vmem:[%s26] ss:$8 sm:%s27]
    %29 = vrot.lane.b32.xlu0 %v28, 64
    %v30 = vpop.permute.xlu0 %29
    %vm31 = vcmask 654848
    %32 = vst.msk [vmem:[#allocation0] ss:$8 sm:$0x3] %vm31, %v30
    %s33 = scalar_lea.vmem %s0, 3
    %s34 = smov 3
    %v35 = vld [vmem:[%s33] ss:$8 sm:%s34]
    %36 = vrot.lane.b32.xlu0 %v35, 48
    %v37 = vpop.permute.xlu0 %36
    %vm38 = vcmask 523648
    %39 = vst.msk [vmem:[#allocation0] ss:$8 sm:$0x3] %vm38, %v37
    %s40 = scalar_lea.vmem %s0, 2
    %s41 = smov 3
    %v42 = vld [vmem:[%s40] ss:$8 sm:%s41]
    %43 = vrot.lane.b32.xlu0 %v42, 32
    %v44 = vpop.permute.xlu0 %43
    %vm45 = vcmask 392448
    %46 = vst.msk [vmem:[#allocation0] ss:$8 sm:$0x3] %vm45, %v44
    %s47 = scalar_lea.vmem %s0, 1
    %s48 = smov 3
    %v49 = vld [vmem:[%s47] ss:$8 sm:%s48]
    %50 = vrot.lane.b32.xlu0 %v49, 16
    %v51 = vpop.permute.xlu0 %50
    %vm52 = vcmask 261248
    %53 = vst.msk [vmem:[#allocation0] ss:$8 sm:$0x3] %vm52, %v51
    %s55 = sshllo.u32 0, 1
    %v57 = vld [vmem:[#allocation0] sm:%s55]
    %s58 = sshllo.u32 0, 1
    %59 = vst [vmem:[%s1] sm:%s58] %v57
    %s60 = scalar_lea.vmem [#allocation0], 8
    %v61 = vld [vmem:[%s60] sm:%s55]
    %s62 = sshllo.u32 0, 1
    %s63 = scalar_lea.vmem %s1, 1
    %64 = vst [vmem:[%s63] sm:%s62] %v61

// kernel: tile.48
$region0: #{tile.48}
  #allocation2 [shape = 's32[1]{0}', space=sflag, size = 0x4, scoped, tag = 'scoped memory for tile.48']
  %s0 = inlined_call_operand.hbm [shape: f32[8], index: 0, kind: input, shape index: {}]
  %s1 = inlined_call_operand.vmem [shape: f32[30,8], index: 1, kind: output, shape index: {}]
  $region1: #{tile.48} parent=0
    #allocation0 [shape = 'u8[512]{0}', space=vmem, size = 0x400, scoped, tag = 'operand span for operand 0']
    #allocation1 [shape = 's32[1]{0}', space=sflag, size = 0x4, scoped, tag = 'scoped memory for tile.48']
    %2 = vsyncpa [#allocation1], 0
    // Predicated region
    $region2: #{tile.48} parent=1 // pred_check
      _
    $region3: #{tile.48} parent=1 // pred_check_branch
      %4 = sbr.rel (0) target = $region5
    $region4: #{tile.48} parent=1 // pred_region
      %s6 = ssub.s32 16, 16
      %7 = vsyncadd [#allocation1], %s6
      %s9 = sshll.u32 [#allocation0], 4
      %s10 = int_to_ptr.vmem [resolvable:$true] %s9
      %12 = dma.hbm_to_vmem [thread:$0]  %s0, 16, %s10, [#allocation1]
    $region5: #{tile.48} parent=1 // pred_fallthru
      _
    // Predicated region
    $region6: #{tile.48} parent=1 // pred_check
      _
    $region7: #{tile.48} parent=1 // pred_check_branch
      %14 = sbr.rel (0) target = $region9
    $region8: #{tile.48} parent=1 // pred_region
      %15 = dma.done [#allocation1], 16
    $region9: #{tile.48} parent=1 // pred_fallthru
      _
    %v16 = vld [vmem:[#allocation0] ss:$0 sm:$0xff]
    %17 = vst [vmem:[%s1] sm:$0xff] %v16
    %s18 = scalar_lea.vmem %s1, 8
    %19 = vst [vmem:[%s18] sm:$0xff] %v16
    %s20 = scalar_lea.vmem %s1, 16
    %21 = vst [vmem:[%s20] sm:$0xff] %v16
    %s22 = scalar_lea.vmem %s1, 24
    %23 = vst [vmem:[%s22] sm:$0xff] %v16
    %24 = vsyncpa [#allocation1], 1

// kernel: tile.63
$region0: #{tile.63}
  #allocation2 [shape = 's32[1]{0}', space=sflag, size = 0x4, scoped, tag = 'scoped memory for tile.63']
  %s0 = inlined_call_operand.hbm [shape: f32[16], index: 0, kind: input, shape index: {}]
  %s1 = inlined_call_operand.vmem [shape: f32[15,16], index: 1, kind: output, shape index: {}]
  $region1: #{tile.63} parent=0
    #allocation0 [shape = 'u8[512]{0}', space=vmem, size = 0x400, scoped, tag = 'operand span for operand 0']
    #allocation1 [shape = 's32[1]{0}', space=sflag, size = 0x4, scoped, tag = 'scoped memory for tile.63']
    %2 = vsyncpa [#allocation1], 0
    // Predicated region
    $region2: #{tile.63} parent=1 // pred_check
      _
    $region3: #{tile.63} parent=1 // pred_check_branch
      %4 = sbr.rel (0) target = $region5
    $region4: #{tile.63} parent=1 // pred_region
      %s6 = ssub.s32 16, 16
      %7 = vsyncadd [#allocation1], %s6
      %s9 = sshll.u32 [#allocation0], 4
      %s10 = int_to_ptr.vmem [resolvable:$true] %s9
      %12 = dma.hbm_to_vmem [thread:$0]  %s0, 16, %s10, [#allocation1]
    $region5: #{tile.63} parent=1 // pred_fallthru
      _
    // Predicated region
    $region6: #{tile.63} parent=1 // pred_check
      _
    $region7: #{tile.63} parent=1 // pred_check_branch
      %14 = sbr.rel (0) target = $region9
    $region8: #{tile.63} parent=1 // pred_region
      %15 = dma.done [#allocation1], 16
    $region9: #{tile.63} parent=1 // pred_fallthru
      _
    %v16 = vld [vmem:[#allocation0] ss:$0 sm:$0xff]
    %17 = vst [vmem:[%s1] sm:$0xff] %v16
    %s18 = scalar_lea.vmem %s1, 8
    %19 = vst [vmem:[%s18] sm:$0xff] %v16
    %20 = vsyncpa [#allocation1], 1

// kernel: tile.82
$region0: #{tile.82}
  #allocation0 [shape = 's32[1]{0}', space=sflag, size = 0x4, scoped, tag = 'scoped memory for tile.82']
  %s0 = inlined_call_operand.vmem [shape: f32[16], index: 0, kind: input, shape index: {}]
  %s1 = inlined_call_operand.vmem [shape: f32[7,16], index: 1, kind: output, shape index: {}]
  // Predicated region
  $region2: #{tile.82} parent=0 // pred_check
    _
  $region3: #{tile.82} parent=0 // pred_check_branch
    %3 = sbr.rel (0) target = $region5
  $region4: #{tile.82} parent=0 // pred_region
    _
  $region5: #{tile.82} parent=0 // pred_fallthru
    _
  %v4 = vld [vmem:[%s0] ss:$0 sm:$0xff]
  %5 = vst [vmem:[%s1] sm:$0xff] %v4

// kernel: tile.88
$region0: #{tile.88}
  %s0 = inlined_call_operand.vmem [shape: f32[7,16], index: 0, kind: input, shape index: {}]
  %s1 = inlined_call_operand.vmem [shape: f32[1,112], index: 1, kind: output, shape index: {}]
  $region1: #{tile.88} parent=0
    #allocation0 [shape = 'u8[4096]{0}', space=vmem, size = 0x1000, scoped, tag = 'scoped mem for output reshape']
    %v2 = vld [vmem:[%s0] sm:$0x1]
    %vm3 = vcmask 130048
    %4 = vst.msk [vmem:[#allocation0] sm:$0x1] %vm3, %v2
    %s5 = scalar_lea.vmem %s0, 6
    %v6 = vld [vmem:[%s5] sm:$0x1]
    %7 = vrot.lane.b32.xlu0 %v6, 96
    %v8 = vpop.permute.xlu0 %7
    %vm9 = vcmask 917248
    %10 = vst.msk [vmem:[#allocation0] sm:$0x1] %vm9, %v8
    %s11 = scalar_lea.vmem %s0, 5
    %v12 = vld [vmem:[%s11] sm:$0x1]
    %13 = vrot.lane.b32.xlu0 %v12, 80
    %v14 = vpop.permute.xlu0 %13
    %vm15 = vcmask 786048
    %16 = vst.msk [vmem:[#allocation0] sm:$0x1] %vm15, %v14
    %s17 = scalar_lea.vmem %s0, 4
    %v18 = vld [vmem:[%s17] sm:$0x1]
    %19 = vrot.lane.b32.xlu0 %v18, 64
    %v20 = vpop.permute.xlu0 %19
    %vm21 = vcmask 654848
    %22 = vst.msk [vmem:[#allocation0] sm:$0x1] %vm21, %v20
    %s23 = scalar_lea.vmem %s0, 3
    %v24 = vld [vmem:[%s23] sm:$0x1]
    %25 = vrot.lane.b32.xlu0 %v24, 48
    %v26 = vpop.permute.xlu0 %25
    %vm27 = vcmask 523648
    %28 = vst.msk [vmem:[#allocation0] sm:$0x1] %vm27, %v26
    %s29 = scalar_lea.vmem %s0, 2
    %v30 = vld [vmem:[%s29] sm:$0x1]
    %31 = vrot.lane.b32.xlu0 %v30, 32
    %v32 = vpop.permute.xlu0 %31
    %vm33 = vcmask 392448
    %34 = vst.msk [vmem:[#allocation0] sm:$0x1] %vm33, %v32
    %s35 = scalar_lea.vmem %s0, 1
    %v36 = vld [vmem:[%s35] sm:$0x1]
    %37 = vrot.lane.b32.xlu0 %v36, 16
    %v38 = vpop.permute.xlu0 %37
    %vm39 = vcmask 261248
    %40 = vst.msk [vmem:[#allocation0] sm:$0x1] %vm39, %v38
    %s42 = sshllo.u32 0, 1
    %v44 = vld [vmem:[#allocation0] sm:%s42]
    %s45 = sshllo.u32 0, 1
    %46 = vst [vmem:[%s1] sm:%s45] %v44

// kernel: forward.1
$region0: #{forward.1}
  #allocation0 [shape = 'u32[]', space=smem, size = 0x4, offset = 0x4, fixed_abs, tag = 'smem constant byte address 0x4 - core index']
  #allocation1 [shape = 'u32[144,128]{1,0:T(1,128)}', space=vmem, size = 0x12000, scoped, tag = 'internal scratch']
  %s0 = inlined_call_operand.vmem [shape: f32[2,28,28], index: 0, kind: input, shape index: {}]
  %s1 = inlined_call_operand.vmem [shape: bf16[28,240], index: 1, kind: input, shape index: {}]
  %s2 = inlined_call_operand.vmem [shape: f32[3,240], index: 2, kind: input, shape index: {}]
  %s3 = inlined_call_operand.vmem [shape: bf16[3,232,240], index: 3, kind: input, shape index: {}]
  %s4 = inlined_call_operand.vmem [shape: f32[3,240], index: 4, kind: input, shape index: {}]
  %s5 = inlined_call_operand.vmem [shape: bf16[5,224,112], index: 5, kind: input, shape index: {}]
  %s6 = inlined_call_operand.vmem [shape: f32[3,112], index: 6, kind: input, shape index: {}]
  %s7 = inlined_call_operand.vmem [shape: bf16[96,192], index: 7, kind: input, shape index: {}]
  %s8 = inlined_call_operand.vmem [shape: f32[1,64], index: 8, kind: input, shape index: {}]
  %s9 = inlined_call_operand.vmem [shape: bf16[64,64], index: 9, kind: input, shape index: {}]
  %s10 = inlined_call_operand.vmem [shape: f32[1,64], index: 10, kind: input, shape index: {}]
  %s11 = inlined_call_operand.vmem [shape: bf16[64,10], index: 11, kind: input, shape index: {}]
  %s12 = inlined_call_operand.vmem [shape: f32[1,10], index: 12, kind: input, shape index: {}]
  %s13 = inlined_call_operand.hbm [shape: f32[2,1,10], index: 13, kind: output, shape index: {}]
  %s14 = sld [smem:[#allocation0]]
  $region85: #{forward.1} parent=0
    _
  %s16 = ssub.s32 1, %s14
  %s17 = scalar_select 0, %s16, %s14
  $region1: #{forward.1} parent=0
    #allocation2 [shape = 'u8[1024]{0}', space=vmem, size = 0x400, scoped, tag = 'output window, operand 0']
    #allocation3 [shape = 's32[2]{0}', space=sflag, size = 0x8, scoped, tag = 'scoped memory for forward.1']
    %18 = vsyncpa [#allocation3], 0
    %s19 = scalar_lea.sflag [#allocation3], 1
    %20 = vsyncpa %s19, 0
    loop: start=0, step=1, limit=4
    $region2: #{forward.1} parent=1 // loop_pre_header
      _
    $region3: #{forward.1} parent=1 // loop_header
      %s22 = sphi 0, %s26
      %p23 = scmp.ge.s32.totalorder %s22, 4
      %s32 = sphi 0, %s34
      %s35 = sphi 0, %s32
      %s36 = sphi 0, %s35
      %s52 = sphi 0, %s36
      %s56 = sphi 0, %s56
      %s58 = sphi 0, %s56
      %s59 = sphi 0, %s58
      %s73 = sphi 0, %s59
      %s77 = sphi 0, %s77
      %s79 = sphi 0, %s77
      %s80 = sphi 0, %s79
      %s94 = sphi 0, %s80
      %s98 = sphi 0, %s98
      %s100 = sphi 0, %s98
      %s101 = sphi 0, %s100
      %s115 = sphi 0, %s101
      %s119 = sphi 0, %s119
      %s121 = sphi 0, %s119
      %s122 = sphi 0, %s121
      %s136 = sphi 0, %s122
      %s140 = sphi 0, %s140
      %s142 = sphi 0, %s140
      %s143 = sphi 0, %s142
      %s157 = sphi 0, %s143
      %s161 = sphi 0, %s161
      %s163 = sphi 0, %s161
      %s164 = sphi 0, %s163
      %s178 = sphi 0, %s164
      %s182 = sphi 0, %s182
      %s184 = sphi 0, %s182
      %s185 = sphi 0, %s184
      %s199 = sphi 0, %s185
      %s203 = sphi 0, %s203
      %s205 = sphi 0, %s203
      %s206 = sphi 0, %s205
      %s220 = sphi 0, %s206
      %s224 = sphi 0, %s224
      %s226 = sphi 0, %s224
      %s227 = sphi 0, %s226
      %s241 = sphi 0, %s227
      %s245 = sphi 0, %s245
      %s247 = sphi 0, %s245
      %s248 = sphi 0, %s247
      %s262 = sphi 0, %s248
      %s266 = sphi 0, %s266
      %s268 = sphi 0, %s266
      %s269 = sphi 0, %s268
      %s283 = sphi 0, %s269
      %s287 = sphi 0, %s287
      %s289 = sphi 0, %s287
      %s290 = sphi 0, %s289
      %s304 = sphi 0, %s290
      %s310 = sphi 0, %s312
      %s313 = sphi 0, %s310
      %s314 = sphi 0, %s313
      %s330 = sphi 0, %s314
    $region4: #{forward.1} parent=1 // loop_header_branch
      %25 = sbr.rel (%p23) target = $region8
    $region5: #{forward.1} parent=1 // loop_body
      %s27 = ssub.s32 %s22, 1
      %s28 = ssub.s32 %s22, 2
      %s29 = sadd.s32 %s22, 1
      %s30 = ssub.s32 %s22, %s29
      %p31 = scmp.eq.s32.totalorder %s30, 0
      %s33 = sadd.s32 %s32, 1
      %s34 = scalar_select %p31, %s32, %s33
      %p37 = pneg %p31
      %p38 = scmp.eq.s32.totalorder %s22, 1
      %p39 = por %p37, %p38
      %p40 = scmp.ne.s32.totalorder %s32, %s35
      %p41 = scmp.eq.s32.totalorder %s22, 0
      %p42 = por %p40, %p41
      %p43 = scmp.ne.s32.totalorder %s32, %s35
      %p44 = scmp.eq.s32.totalorder %s27, 1
      %p45 = por %p43, %p44
      %p46 = scmp.ne.s32.totalorder %s35, %s36
      %p47 = scmp.eq.s32.totalorder %s27, 0
      %p48 = por %p46, %p47
      %p49 = scmp.ne.s32.totalorder %s35, %s36
      %p50 = scmp.eq.s32.totalorder %s28, 1
      %p51 = por %p49, %p50
      %p53 = scmp.ne.s32.totalorder %s36, %s52
      %p54 = scmp.eq.s32.totalorder %s28, 0
      %p55 = por %p53, %p54
      %s57 = sadd.s32 %s56, 1
      %p60 = scmp.eq.s32.totalorder %s22, 1
      %p61 = scmp.ne.s32.totalorder %s56, %s58
      %p62 = scmp.eq.s32.totalorder %s22, 0
      %p63 = por %p61, %p62
      %p64 = scmp.ne.s32.totalorder %s56, %s58
      %p65 = scmp.eq.s32.totalorder %s27, 1
      %p66 = por %p64, %p65
      %p67 = scmp.ne.s32.totalorder %s58, %s59
      %p68 = scmp.eq.s32.totalorder %s27, 0
      %p69 = por %p67, %p68
      %p70 = scmp.ne.s32.totalorder %s58, %s59
      %p71 = scmp.eq.s32.totalorder %s28, 1
      %p72 = por %p70, %p71
      %p74 = scmp.ne.s32.totalorder %s59, %s73
      %p75 = scmp.eq.s32.totalorder %s28, 0
      %p76 = por %p74, %p75
      %s78 = sadd.s32 %s77, 1
      %p81 = scmp.eq.s32.totalorder %s22, 1
      %p82 = scmp.ne.s32.totalorder %s77, %s79
      %p83 = scmp.eq.s32.totalorder %s22, 0
      %p84 = por %p82, %p83
      %p85 = scmp.ne.s32.totalorder %s77, %s79
      %p86 = scmp.eq.s32.totalorder %s27, 1
      %p87 = por %p85, %p86
      %p88 = scmp.ne.s32.totalorder %s79, %s80
      %p89 = scmp.eq.s32.totalorder %s27, 0
      %p90 = por %p88, %p89
      %p91 = scmp.ne.s32.totalorder %s79, %s80
      %p92 = scmp.eq.s32.totalorder %s28, 1
      %p93 = por %p91, %p92
      %p95 = scmp.ne.s32.totalorder %s80, %s94
      %p96 = scmp.eq.s32.totalorder %s28, 0
      %p97 = por %p95, %p96
      %s99 = sadd.s32 %s98, 1
      %p102 = scmp.eq.s32.totalorder %s22, 1
      %p103 = scmp.ne.s32.totalorder %s98, %s100
      %p104 = scmp.eq.s32.totalorder %s22, 0
      %p105 = por %p103, %p104
      %p106 = scmp.ne.s32.totalorder %s98, %s100
      %p107 = scmp.eq.s32.totalorder %s27, 1
      %p108 = por %p106, %p107
      %p109 = scmp.ne.s32.totalorder %s100, %s101
      %p110 = scmp.eq.s32.totalorder %s27, 0
      %p111 = por %p109, %p110
      %p112 = scmp.ne.s32.totalorder %s100, %s101
      %p113 = scmp.eq.s32.totalorder %s28, 1
      %p114 = por %p112, %p113
      %p116 = scmp.ne.s32.totalorder %s101, %s115
      %p117 = scmp.eq.s32.totalorder %s28, 0
      %p118 = por %p116, %p117
      %s120 = sadd.s32 %s119, 1
      %p123 = scmp.eq.s32.totalorder %s22, 1
      %p124 = scmp.ne.s32.totalorder %s119, %s121
      %p125 = scmp.eq.s32.totalorder %s22, 0
      %p126 = por %p124, %p125
      %p127 = scmp.ne.s32.totalorder %s119, %s121
      %p128 = scmp.eq.s32.totalorder %s27, 1
      %p129 = por %p127, %p128
      %p130 = scmp.ne.s32.totalorder %s121, %s122
      %p131 = scmp.eq.s32.totalorder %s27, 0
      %p132 = por %p130, %p131
      %p133 = scmp.ne.s32.totalorder %s121, %s122
      %p134 = scmp.eq.s32.totalorder %s28, 1
      %p135 = por %p133, %p134
      %p137 = scmp.ne.s32.totalorder %s122, %s136
      %p138 = scmp.eq.s32.totalorder %s28, 0
      %p139 = por %p137, %p138
      %s141 = sadd.s32 %s140, 1
      %p144 = scmp.eq.s32.totalorder %s22, 1
      %p145 = scmp.ne.s32.totalorder %s140, %s142
      %p146 = scmp.eq.s32.totalorder %s22, 0
      %p147 = por %p145, %p146
      %p148 = scmp.ne.s32.totalorder %s140, %s142
      %p149 = scmp.eq.s32.totalorder %s27, 1
      %p150 = por %p148, %p149
      %p151 = scmp.ne.s32.totalorder %s142, %s143
      %p152 = scmp.eq.s32.totalorder %s27, 0
      %p153 = por %p151, %p152
      %p154 = scmp.ne.s32.totalorder %s142, %s143
      %p155 = scmp.eq.s32.totalorder %s28, 1
      %p156 = por %p154, %p155
      %p158 = scmp.ne.s32.totalorder %s143, %s157
      %p159 = scmp.eq.s32.totalorder %s28, 0
      %p160 = por %p158, %p159
      %s162 = sadd.s32 %s161, 1
      %p165 = scmp.eq.s32.totalorder %s22, 1
      %p166 = scmp.ne.s32.totalorder %s161, %s163
      %p167 = scmp.eq.s32.totalorder %s22, 0
      %p168 = por %p166, %p167
      %p169 = scmp.ne.s32.totalorder %s161, %s163
      %p170 = scmp.eq.s32.totalorder %s27, 1
      %p171 = por %p169, %p170
      %p172 = scmp.ne.s32.totalorder %s163, %s164
      %p173 = scmp.eq.s32.totalorder %s27, 0
      %p174 = por %p172, %p173
      %p175 = scmp.ne.s32.totalorder %s163, %s164
      %p176 = scmp.eq.s32.totalorder %s28, 1
      %p177 = por %p175, %p176
      %p179 = scmp.ne.s32.totalorder %s164, %s178
      %p180 = scmp.eq.s32.totalorder %s28, 0
      %p181 = por %p179, %p180
      %s183 = sadd.s32 %s182, 1
      %p186 = scmp.eq.s32.totalorder %s22, 1
      %p187 = scmp.ne.s32.totalorder %s182, %s184
      %p188 = scmp.eq.s32.totalorder %s22, 0
      %p189 = por %p187, %p188
      %p190 = scmp.ne.s32.totalorder %s182, %s184
      %p191 = scmp.eq.s32.totalorder %s27, 1
      %p192 = por %p190, %p191
      %p193 = scmp.ne.s32.totalorder %s184, %s185
      %p194 = scmp.eq.s32.totalorder %s27, 0
      %p195 = por %p193, %p194
      %p196 = scmp.ne.s32.totalorder %s184, %s185
      %p197 = scmp.eq.s32.totalorder %s28, 1
      %p198 = por %p196, %p197
      %p200 = scmp.ne.s32.totalorder %s185, %s199
      %p201 = scmp.eq.s32.totalorder %s28, 0
      %p202 = por %p200, %p201
      %s204 = sadd.s32 %s203, 1
      %p207 = scmp.eq.s32.totalorder %s22, 1
      %p208 = scmp.ne.s32.totalorder %s203, %s205
      %p209 = scmp.eq.s32.totalorder %s22, 0
      %p210 = por %p208, %p209
      %p211 = scmp.ne.s32.totalorder %s203, %s205
      %p212 = scmp.eq.s32.totalorder %s27, 1
      %p213 = por %p211, %p212
      %p214 = scmp.ne.s32.totalorder %s205, %s206
      %p215 = scmp.eq.s32.totalorder %s27, 0
      %p216 = por %p214, %p215
      %p217 = scmp.ne.s32.totalorder %s205, %s206
      %p218 = scmp.eq.s32.totalorder %s28, 1
      %p219 = por %p217, %p218
      %p221 = scmp.ne.s32.totalorder %s206, %s220
      %p222 = scmp.eq.s32.totalorder %s28, 0
      %p223 = por %p221, %p222
      %s225 = sadd.s32 %s224, 1
      %p228 = scmp.eq.s32.totalorder %s22, 1
      %p229 = scmp.ne.s32.totalorder %s224, %s226
      %p230 = scmp.eq.s32.totalorder %s22, 0
      %p231 = por %p229, %p230
      %p232 = scmp.ne.s32.totalorder %s224, %s226
      %p233 = scmp.eq.s32.totalorder %s27, 1
      %p234 = por %p232, %p233
      %p235 = scmp.ne.s32.totalorder %s226, %s227
      %p236 = scmp.eq.s32.totalorder %s27, 0
      %p237 = por %p235, %p236
      %p238 = scmp.ne.s32.totalorder %s226, %s227
      %p239 = scmp.eq.s32.totalorder %s28, 1
      %p240 = por %p238, %p239
      %p242 = scmp.ne.s32.totalorder %s227, %s241
      %p243 = scmp.eq.s32.totalorder %s28, 0
      %p244 = por %p242, %p243
      %s246 = sadd.s32 %s245, 1
      %p249 = scmp.eq.s32.totalorder %s22, 1
      %p250 = scmp.ne.s32.totalorder %s245, %s247
      %p251 = scmp.eq.s32.totalorder %s22, 0
      %p252 = por %p250, %p251
      %p253 = scmp.ne.s32.totalorder %s245, %s247
      %p254 = scmp.eq.s32.totalorder %s27, 1
      %p255 = por %p253, %p254
      %p256 = scmp.ne.s32.totalorder %s247, %s248
      %p257 = scmp.eq.s32.totalorder %s27, 0
      %p258 = por %p256, %p257
      %p259 = scmp.ne.s32.totalorder %s247, %s248
      %p260 = scmp.eq.s32.totalorder %s28, 1
      %p261 = por %p259, %p260
      %p263 = scmp.ne.s32.totalorder %s248, %s262
      %p264 = scmp.eq.s32.totalorder %s28, 0
      %p265 = por %p263, %p264
      %s267 = sadd.s32 %s266, 1
      %p270 = scmp.eq.s32.totalorder %s22, 1
      %p271 = scmp.ne.s32.totalorder %s266, %s268
      %p272 = scmp.eq.s32.totalorder %s22, 0
      %p273 = por %p271, %p272
      %p274 = scmp.ne.s32.totalorder %s266, %s268
      %p275 = scmp.eq.s32.totalorder %s27, 1
      %p276 = por %p274, %p275
      %p277 = scmp.ne.s32.totalorder %s268, %s269
      %p278 = scmp.eq.s32.totalorder %s27, 0
      %p279 = por %p277, %p278
      %p280 = scmp.ne.s32.totalorder %s268, %s269
      %p281 = scmp.eq.s32.totalorder %s28, 1
      %p282 = por %p280, %p281
      %p284 = scmp.ne.s32.totalorder %s269, %s283
      %p285 = scmp.eq.s32.totalorder %s28, 0
      %p286 = por %p284, %p285
      %s288 = sadd.s32 %s287, 1
      %p291 = scmp.eq.s32.totalorder %s22, 1
      %p292 = scmp.ne.s32.totalorder %s287, %s289
      %p293 = scmp.eq.s32.totalorder %s22, 0
      %p294 = por %p292, %p293
      %p295 = scmp.ne.s32.totalorder %s287, %s289
      %p296 = scmp.eq.s32.totalorder %s27, 1
      %p297 = por %p295, %p296
      %p298 = scmp.ne.s32.totalorder %s289, %s290
      %p299 = scmp.eq.s32.totalorder %s27, 0
      %p300 = por %p298, %p299
      %p301 = scmp.ne.s32.totalorder %s289, %s290
      %p302 = scmp.eq.s32.totalorder %s28, 1
      %p303 = por %p301, %p302
      %p305 = scmp.ne.s32.totalorder %s290, %s304
      %p306 = scmp.eq.s32.totalorder %s28, 0
      %p307 = por %p305, %p306
      %s308 = ssub.s32 %s22, %s29
      %p309 = scmp.eq.s32.totalorder %s308, 0
      %s311 = sadd.s32 %s310, 1
      %s312 = scalar_select %p309, %s310, %s311
      %p315 = pneg %p309
      %p316 = scmp.eq.s32.totalorder %s22, 1
      %p317 = por %p315, %p316
      %p318 = scmp.ne.s32.totalorder %s310, %s313
      %p319 = scmp.eq.s32.totalorder %s22, 0
      %p320 = por %p318, %p319
      %p321 = scmp.ne.s32.totalorder %s310, %s313
      %p322 = scmp.eq.s32.totalorder %s27, 1
      %p323 = por %p321, %p322
      %p324 = scmp.ne.s32.totalorder %s313, %s314
      %p325 = scmp.eq.s32.totalorder %s27, 0
      %p326 = por %p324, %p325
      %p327 = scmp.ne.s32.totalorder %s313, %s314
      %p328 = scmp.eq.s32.totalorder %s28, 1
      %p329 = por %p327, %p328
      %p331 = scmp.ne.s32.totalorder %s314, %s330
      %p332 = scmp.eq.s32.totalorder %s28, 0
      %p333 = por %p331, %p332
      %p334 = scmp.le.s32.totalorder 1, %s22
      %p335 = scmp.lt.s32.totalorder %s22, 3
      %p336 = pnand %p334, %p335
      %p337 = pneg %p336
      // Predicated region
      $region9: #{forward.1} parent=5 // pred_check
        _
      $region10: #{forward.1} parent=5 // pred_check_branch
        %339 = sbr.rel (%p336) target = $region12
      $region11: #{forward.1} parent=5 // pred_region
        %s340 = ssub.s32 %s22, 1
        // Predicated region
        $region13: #{forward.1} parent=11 // pred_check
          %p341 = pneg %p69
        $region14: #{forward.1} parent=11 // pred_check_branch
          %343 = sbr.rel (%p341) target = $region16
        $region15: #{forward.1} parent=11 // pred_region
          _
        $region16: #{forward.1} parent=11 // pred_fallthru
          _
        // Predicated region
        $region17: #{forward.1} parent=11 // pred_check
          %p344 = pneg %p90
        $region18: #{forward.1} parent=11 // pred_check_branch
          %346 = sbr.rel (%p344) target = $region20
        $region19: #{forward.1} parent=11 // pred_region
          _
        $region20: #{forward.1} parent=11 // pred_fallthru
          _
        // Predicated region
        $region21: #{forward.1} parent=11 // pred_check
          %p347 = pneg %p111
        $region22: #{forward.1} parent=11 // pred_check_branch
          %349 = sbr.rel (%p347) target = $region24
        $region23: #{forward.1} parent=11 // pred_region
          _
        $region24: #{forward.1} parent=11 // pred_fallthru
          _
        // Predicated region
        $region25: #{forward.1} parent=11 // pred_check
          %p350 = pneg %p132
        $region26: #{forward.1} parent=11 // pred_check_branch
          %352 = sbr.rel (%p350) target = $region28
        $region27: #{forward.1} parent=11 // pred_region
          _
        $region28: #{forward.1} parent=11 // pred_fallthru
          _
        // Predicated region
        $region29: #{forward.1} parent=11 // pred_check
          %p353 = pneg %p153
        $region30: #{forward.1} parent=11 // pred_check_branch
          %355 = sbr.rel (%p353) target = $region32
        $region31: #{forward.1} parent=11 // pred_region
          _
        $region32: #{forward.1} parent=11 // pred_fallthru
          _
        // Predicated region
        $region33: #{forward.1} parent=11 // pred_check
          %p356 = pneg %p174
        $region34: #{forward.1} parent=11 // pred_check_branch
          %358 = sbr.rel (%p356) target = $region36
        $region35: #{forward.1} parent=11 // pred_region
          _
        $region36: #{forward.1} parent=11 // pred_fallthru
          _
        // Predicated region
        $region37: #{forward.1} parent=11 // pred_check
          %p359 = pneg %p195
        $region38: #{forward.1} parent=11 // pred_check_branch
          %361 = sbr.rel (%p359) target = $region40
        $region39: #{forward.1} parent=11 // pred_region
          _
        $region40: #{forward.1} parent=11 // pred_fallthru
          _
        // Predicated region
        $region41: #{forward.1} parent=11 // pred_check
          %p362 = pneg %p216
        $region42: #{forward.1} parent=11 // pred_check_branch
          %364 = sbr.rel (%p362) target = $region44
        $region43: #{forward.1} parent=11 // pred_region
          _
        $region44: #{forward.1} parent=11 // pred_fallthru
          _
        // Predicated region
        $region45: #{forward.1} parent=11 // pred_check
          %p365 = pneg %p237
        $region46: #{forward.1} parent=11 // pred_check_branch
          %367 = sbr.rel (%p365) target = $region48
        $region47: #{forward.1} parent=11 // pred_region
          _
        $region48: #{forward.1} parent=11 // pred_fallthru
          _
        // Predicated region
        $region49: #{forward.1} parent=11 // pred_check
          %p368 = pneg %p258
        $region50: #{forward.1} parent=11 // pred_check_branch
          %370 = sbr.rel (%p368) target = $region52
        $region51: #{forward.1} parent=11 // pred_region
          _
        $region52: #{forward.1} parent=11 // pred_fallthru
          _
        // Predicated region
        $region53: #{forward.1} parent=11 // pred_check
          %p371 = pneg %p279
        $region54: #{forward.1} parent=11 // pred_check_branch
          %373 = sbr.rel (%p371) target = $region56
        $region55: #{forward.1} parent=11 // pred_region
          _
        $region56: #{forward.1} parent=11 // pred_fallthru
          _
        // Predicated region
        $region57: #{forward.1} parent=11 // pred_check
          %p374 = pneg %p300
        $region58: #{forward.1} parent=11 // pred_check_branch
          %376 = sbr.rel (%p374) target = $region60
        $region59: #{forward.1} parent=11 // pred_region
          _
        $region60: #{forward.1} parent=11 // pred_fallthru
          _
      $region12: #{forward.1} parent=5 // pred_fallthru
        _
      %p377 = scmp.lt.s32.totalorder %s22, 2
      // Predicated region
      $region61: #{forward.1} parent=5 // pred_check
        %p378 = pneg %p377
      $region62: #{forward.1} parent=5 // pred_check_branch
        %380 = sbr.rel (%p378) target = $region64
      $region63: #{forward.1} parent=5 // pred_region
        // Predicated region
        $region65: #{forward.1} parent=63 // pred_check
          %p381 = pneg %p42
        $region66: #{forward.1} parent=63 // pred_check_branch
          %383 = sbr.rel (%p381) target = $region68
        $region67: #{forward.1} parent=63 // pred_region
          %p384 = scmp.lt.s32.totalorder %s22, 1
          %s385 = scalar_select %p384, %s22, 1
          %s386 = smul.addr %s385, 4
          %s387 = smul.addr %s386, 8
          %s388 = scalar_lea.vmem %s0, %s387
        $region68: #{forward.1} parent=63 // pred_fallthru
          _
      $region64: #{forward.1} parent=5 // pred_fallthru
        _
      %p389 = scmp.le.s32.totalorder 1, %s22
      %p390 = scmp.lt.s32.totalorder %s22, 3
      %p391 = pnand %p389, %p390
      %p392 = pneg %p391
      // Predicated region
      $region69: #{forward.1} parent=5 // pred_check
        _
      $region70: #{forward.1} parent=5 // pred_check_branch
        %394 = sbr.rel (%p391) target = $region72
      $region71: #{forward.1} parent=5 // pred_region
        %s395 = ssub.s32 %s22, 1
        %p396 = scmp.lt.s32.totalorder %s27, 1
        %s397 = scalar_select %p396, %s27, 1
        %s398 = smul.addr %s397, 4
        %s399 = smul.addr %s398, 8
        %s400 = scalar_lea.vmem %s0, %s399
        %p401 = pneg %p48
        %p402 = pneg %p45
        %p403 = pneg %p69
        %p404 = pneg %p66
        %p405 = pneg %p90
        %p406 = pneg %p87
        %p407 = pneg %p111
        %p408 = pneg %p108
        %p409 = pneg %p132
        %p410 = pneg %p129
        %p411 = pneg %p153
        %p412 = pneg %p150
        %p413 = pneg %p174
        %p414 = pneg %p171
        %p415 = pneg %p195
        %p416 = pneg %p192
        %p417 = pneg %p216
        %p418 = pneg %p213
        %p419 = pneg %p237
        %p420 = pneg %p234
        %p421 = pneg %p258
        %p422 = pneg %p255
        %p423 = pneg %p279
        %p424 = pneg %p276
        %p425 = pneg %p300
        %p426 = pneg %p297
        %p427 = pneg %p326
        %p428 = pneg %p323
        %s429 = sand.u32 %s313, 1
        %s430 = scalar_lea.sflag [#allocation3], %s429
        %s431 = sand.u32 %s313, 1
        %s432 = scalar_lea.vmem [#allocation2], %s431
        %p433 = scmp.lt.s32.totalorder %s27, 1
        %s434 = scalar_select %p433, %s27, 1
        %s435 = smul.addr %s434, 4
        %s436 = smul.addr %s435, 8
        %s437 = scalar_lea.vmem %s0, %s436
        %v439 = vld [vmem:[%s437] sm:$0xff]
        %v440 = vld [vmem:[%s437 + $0x8] sm:$0xff]
        %v441 = vld [vmem:[%s437 + $0x10] sm:$0xff]
        %v442 = vld [vmem:[%s437 + $0x18] sm:$0xf]
        %v443 = vpack.c.bf16 %v440, %v439
        %v444 = vpack.c.bf16 %v442, %v441
        %v445 = vld [vmem:[%s1] sm:$0xff]
        %v446 = vld [vmem:[%s1 + $0x8] sm:$0xff]
        %v447 = vld [vmem:[%s1 + $0x10] sm:$0xff]
        %v448 = vld [vmem:[%s1 + $0x18] sm:$0x33]
        %v453 = vunpack.c.l.b16 %v445
        %v454 = vunpack.c.h.b16 %v445
        %v455 = vunpack.c.l.b16 %v446
        %v456 = vunpack.c.h.b16 %v446
        %v457 = vunpack.c.l.b16 %v447
        %v458 = vunpack.c.h.b16 %v447
        %v459 = vunpack.c.l.b16 %v448
        %v460 = vunpack.c.h.b16 %v448
        %v461 = vpack.c.b16 %v455, %v453
        %v462 = vpack.c.b16 %v456, %v454
        %v463 = vpack.c.b16 %v459, %v457
        %v464 = vpack.c.b16 %v460, %v458
        %vm467 = vcmask 228352
        %v469 = vsel %vm467, %v443, 0
        %v472 = vsel %vm467, %v444, 0
        %vm474 = vcmask 1045504
        %v476 = vsel %vm474, %v463, 0
        %v479 = vsel %vm474, %v464, 0
        %481 = vmatprep.subr.bf16.mxu0 %v462
        %482 = vmatpush1.bf16.msra.mxu0 %v461
        %483 = vmatprep.subr.bf16.mxu0 %v479
        %484 = vmatpush1.bf16.msra.mxu0 %v476
        %485 = vmatprep.subr.bf16.mxu0 0
        %486 = vmatpush1.bf16.msra.mxu0 0
        %487 = vmatprep.subr.bf16.mxu0 0
        %488 = vmatpush1.bf16.msra.mxu0 0
        %489 = vmatprep.subr.bf16.mxu0 0
        %490 = vmatpush1.bf16.msra.mxu0 0
        %491 = vmatprep.subr.bf16.mxu0 0
        %492 = vmatpush1.bf16.msra.mxu0 0
        %493 = vmatprep.subr.bf16.mxu0 0
        %494 = vmatpush1.bf16.msra.mxu0 0
        %495 = vmatprep.subr.bf16.mxu0 0
        %496 = vmatpush1.bf16.msra.mxu0 0
        %497 = vmatprep.subr.bf16.mxu0 0
        %498 = vmatpush1.bf16.msra.mxu0 0
        %499 = vmatprep.subr.bf16.mxu0 0
        %500 = vmatpush1.bf16.msra.mxu0 0
        %501 = vmatprep.subr.bf16.mxu0 0
        %502 = vmatpush1.bf16.msra.mxu0 0
        %503 = vmatprep.subr.bf16.mxu0 0
        %504 = vmatpush1.bf16.msra.mxu0 0
        %505 = vmatprep.subr.bf16.mxu0 0
        %506 = vmatpush1.bf16.msra.mxu0 0
        %507 = vmatprep.subr.bf16.mxu0 0
        %508 = vmatpush1.bf16.msra.mxu0 0
        %509 = vmatprep.subr.bf16.mxu0 0
        %510 = vmatpush1.bf16.msra.mxu0 0
        %511 = vmatprep.subr.bf16.mxu0 0
        %512 = vmatpush1.bf16.msra.mxu0 0
        %513 = vmatprep.mubr.bf16.mxu0 0
        %514 = vmatmul.mubr.bf16.gmra.mrb[0].mxu0 %v469
        %v515 = vpop.f32.mrb[0].mxu0
        %v516 = vadd.f32 0.0, %v515
        %v517 = vpop.f32.mrb[0].mxu0
        %v518 = vadd.f32 0.0, %v517
        %v519 = vpop.f32.mrb[0].mxu0
        %v520 = vadd.f32 0.0, %v519
        %v521 = vpop.f32.mrb[0].mxu0
        %v522 = vadd.f32 0.0, %v521
        %523 = vmatprep.mubr.bf16.mxu0 0
        %524 = vmatmul.mubr.bf16.gmra.mrb[0].mxu0 %v472
        %v525 = vpop.f32.mrb[0].mxu0
        %v526 = vadd.f32 0.0, %v525
        %v527 = vpop.f32.mrb[0].mxu0
        %v528 = vadd.f32 0.0, %v527
        %v529 = vpop.f32.mrb[0].mxu0
        %v530 = vadd.f32 0.0, %v529
        %v531 = vpop.f32.mrb[0].mxu0
        %v532 = vadd.f32 0.0, %v531
        %533 = vdwg.mxu0
        %vm542 = vcmask 1040384
        %v543 = vrot.slane %v516, 7
        %v544 = vrot.slane %v518, 7
        %v545 = vrot.slane %v520, 7
        %v546 = vsel %vm542, %v543, %v545
        %v547 = vrot.slane %v522, 7
        %v548 = vsel %vm542, %v544, %v547
        %v549 = vrot.slane %v526, 7
        %v550 = vsel %vm542, %v545, %v549
        %v551 = vrot.slane %v528, 7
        %v552 = vsel %vm542, %v547, %v551
        %v553 = vrot.slane %v530, 7
        %v554 = vsel %vm542, %v549, %v553
        %v555 = vrot.slane %v532, 7
        %v556 = vsel %vm542, %v551, %v555
        %v565 = vsel %vm542, 0.0, %v543
        %v566 = vsel %vm542, 0.0, %v544
        %vm567 = vcmask 1044480
        %v568 = vsel %vm567, %v554, 0.0
        %v569 = vsel %vm567, %v556, 0.0
        %v570 = vld [vmem:[%s2] ss:$4 sm:$0x3]
        %s571 = scalar_lea.vmem %s2, 1
        %v572 = vld [vmem:[%s571] ss:$4 sm:$0x3]
        %s573 = scalar_lea.vmem %s2, 2
        %v574 = vld [vmem:[%s573] ss:$4 sm:$0x3]
        %v576 = vlaneseq
        %v577 = vshrl.u32 %v576, 7
        %v578 = vsub.s32 0, %v577
        %v579 = vrot.slane %v570, %v578
        %v580 = vlaneseq
        %v581 = vshrl.u32 %v580, 7
        %v582 = vsub.s32 1, %v581
        %v583 = vrot.slane %v570, %v582
        %v586 = vadd.f32 %v565, %v579
        %v587 = vadd.f32 %v566, %v583
        %v588 = vadd.f32 %v546, %v579
        %v589 = vadd.f32 %v548, %v583
        %v590 = vadd.f32 %v550, %v579
        %v591 = vadd.f32 %v552, %v583
        %v592 = vadd.f32 %v568, %v579
        %v593 = vadd.f32 %v569, %v583
        %v594 = vmax.f32 %v586, 0.0
        %v595 = vmax.f32 %v587, 0.0
        %v596 = vmax.f32 %v588, 0.0
        %v597 = vmax.f32 %v589, 0.0
        %v598 = vmax.f32 %v590, 0.0
        %v599 = vmax.f32 %v591, 0.0
        %v600 = vmax.f32 %v592, 0.0
        %v601 = vmax.f32 %v593, 0.0
        %v603 = vlaneseq
        %v604 = vshrl.u32 %v603, 7
        %v605 = vsub.s32 0, %v604
        %v606 = vrot.slane %v572, %v605
        %v607 = vlaneseq
        %v608 = vshrl.u32 %v607, 7
        %v609 = vsub.s32 1, %v608
        %v610 = vrot.slane %v572, %v609
        %v613 = vmul.f32 %v594, %v606
        %v614 = vmul.f32 %v595, %v610
        %v615 = vmul.f32 %v596, %v606
        %v616 = vmul.f32 %v597, %v610
        %v617 = vmul.f32 %v598, %v606
        %v618 = vmul.f32 %v599, %v610
        %v619 = vmul.f32 %v600, %v606
        %v620 = vmul.f32 %v601, %v610
        %v622 = vlaneseq
        %v623 = vshrl.u32 %v622, 7
        %v624 = vsub.s32 0, %v623
        %v625 = vrot.slane %v574, %v624
        %v626 = vlaneseq
        %v627 = vshrl.u32 %v626, 7
        %v628 = vsub.s32 1, %v627
        %v629 = vrot.slane %v574, %v628
        %v632 = vadd.f32 %v613, %v625
        %v633 = vadd.f32 %v614, %v629
        %v634 = vadd.f32 %v615, %v625
        %v635 = vadd.f32 %v616, %v629
        %v636 = vadd.f32 %v617, %v625
        %v637 = vadd.f32 %v618, %v629
        %v638 = vadd.f32 %v619, %v625
        %v639 = vadd.f32 %v620, %v629
        %648 = vrot.lane.b32.xlu0 %v632, 120
        %v649 = vpop.permute.xlu0 %648
        %650 = vrot.lane.b32.xlu0 %v633, 120
        %v651 = vpop.permute.xlu0 %650
        %652 = vrot.lane.b32.xlu0 %v634, 120
        %v653 = vpop.permute.xlu0 %652
        %654 = vrot.lane.b32.xlu0 %v635, 120
        %v655 = vpop.permute.xlu0 %654
        %656 = vrot.lane.b32.xlu0 %v636, 120
        %v657 = vpop.permute.xlu0 %656
        %658 = vrot.lane.b32.xlu0 %v637, 120
        %v659 = vpop.permute.xlu0 %658
        %660 = vrot.lane.b32.xlu0 %v638, 120
        %v661 = vpop.permute.xlu0 %660
        %662 = vrot.lane.b32.xlu0 %v639, 120
        %v663 = vpop.permute.xlu0 %662
        %vm664 = vcmask 982016
        %v665 = vsel %vm664, %v649, %v651
        %v666 = vsel %vm664, %v653, %v655
        %v667 = vsel %vm664, %v657, %v659
        %v668 = vsel %vm664, %v661, %v663
        %v677 = vmax.f32 %v632, %v665
        %v678 = vmax.f32 %v633, %v651
        %v679 = vmax.f32 %v634, %v666
        %v680 = vmax.f32 %v635, %v655
        %v681 = vmax.f32 %v636, %v667
        %v682 = vmax.f32 %v637, %v659
        %v683 = vmax.f32 %v638, %v668
        %v684 = vmax.f32 %v639, %v663
        %vm693 = vcmask 1046528
        %v694 = vrot.slane %v677, 1
        %v695 = vrot.slane %v679, 1
        %v696 = vsel %vm693, %v694, %v695
        %v697 = vrot.slane %v678, 1
        %v698 = vrot.slane %v680, 1
        %v699 = vsel %vm693, %v697, %v698
        %v700 = vrot.slane %v681, 1
        %v701 = vsel %vm693, %v695, %v700
        %v702 = vrot.slane %v682, 1
        %v703 = vsel %vm693, %v698, %v702
        %v704 = vrot.slane %v683, 1
        %v705 = vsel %vm693, %v700, %v704
        %v706 = vrot.slane %v684, 1
        %v707 = vsel %vm693, %v702, %v706
        %v716 = vmax.f32 %v677, %v696
        %v717 = vmax.f32 %v678, %v699
        %v718 = vmax.f32 %v679, %v701
        %v719 = vmax.f32 %v680, %v703
        %v720 = vmax.f32 %v681, %v705
        %v721 = vmax.f32 %v682, %v707
        %v722 = vmax.f32 %v683, %v704
        %v723 = vmax.f32 %v684, %v706
        %v724 = vlaneseq
        %v725 = vshrl.u32 %v724, 7
        %v726 = vadd.s32 %v725, 8
        %v727 = vlaneseq
        %v728 = vand.u32 %v727, 127
        %v729 = vmul.u32 %v725, 2
        %v730 = vmul.u32 %v726, 2
        %vm731 = vcmp.eq.s32.totalorder %v728, %v729
        %vm732 = vcmp.eq.s32.totalorder %v728, %v730
        %v733 = vsel %vm731, 1, 0
        %v734 = vsel %vm732, 1, 0
        %v735 = vcvt.s32.f32 %v733
        %v736 = vcvt.s32.f32 %v734
        %vm737 = vcmask 236544
        %v739 = vsel %vm737, %v735, 0
        %v742 = vsel %vm737, %v736, 0
        %v745 = vsel %vm567, %v722, 0
        %v748 = vsel %vm567, %v723, 0
        %750 = vmatprep.subr.mxu0 %v717
        %751 = vmatpush1.msra.mxu0 %v716
        %752 = vmatprep.subr.mxu0 %v719
        %753 = vmatpush1.msra.mxu0 %v718
        %754 = vmatprep.subr.mxu0 %v721
        %755 = vmatpush1.msra.mxu0 %v720
        %756 = vmatprep.subr.mxu0 %v748
        %757 = vmatpush1.msra.mxu0 %v745
        %758 = vmatprep.subr.mxu0 0.0
        %759 = vmatpush1.msra.mxu0 0.0
        %760 = vmatprep.subr.mxu0 0.0
        %761 = vmatpush1.msra.mxu0 0.0
        %762 = vmatprep.subr.mxu0 0.0
        %763 = vmatpush1.msra.mxu0 0.0
        %764 = vmatprep.subr.mxu0 0.0
        %765 = vmatpush1.msra.mxu0 0.0
        %766 = vmatprep.subr.mxu0 0.0
        %767 = vmatpush1.msra.mxu0 0.0
        %768 = vmatprep.subr.mxu0 0.0
        %769 = vmatpush1.msra.mxu0 0.0
        %770 = vmatprep.subr.mxu0 0.0
        %771 = vmatpush1.msra.mxu0 0.0
        %772 = vmatprep.subr.mxu0 0.0
        %773 = vmatpush1.msra.mxu0 0.0
        %774 = vmatprep.subr.mxu0 0.0
        %775 = vmatpush1.msra.mxu0 0.0
        %776 = vmatprep.subr.mxu0 0.0
        %777 = vmatpush1.msra.mxu0 0.0
        %778 = vmatprep.subr.mxu0 0.0
        %779 = vmatpush1.msra.mxu0 0.0
        %780 = vmatprep.subr.mxu0 0.0
        %781 = vmatpush1.msra.mxu0 0.0
        %782 = vmatprep.subr.mxu0 0.0
        %783 = vmatpush1.msra.mxu0 0.0
        %784 = vmatprep.subr.mxu0 0.0
        %785 = vmatpush1.msra.mxu0 0.0
        %786 = vmatprep.subr.mxu0 0.0
        %787 = vmatpush1.msra.mxu0 0.0
        %788 = vmatprep.subr.mxu0 0.0
        %789 = vmatpush1.msra.mxu0 0.0
        %790 = vmatprep.subr.mxu0 0.0
        %791 = vmatpush1.msra.mxu0 0.0
        %792 = vmatprep.subr.mxu0 0.0
        %793 = vmatpush1.msra.mxu0 0.0
        %794 = vmatprep.subr.mxu0 0.0
        %795 = vmatpush1.msra.mxu0 0.0
        %796 = vmatprep.subr.mxu0 0.0
        %797 = vmatpush1.msra.mxu0 0.0
        %798 = vmatprep.subr.mxu0 0.0
        %799 = vmatpush1.msra.mxu0 0.0
        %800 = vmatprep.subr.mxu0 0.0
        %801 = vmatpush1.msra.mxu0 0.0
        %802 = vmatprep.subr.mxu0 0.0
        %803 = vmatpush1.msra.mxu0 0.0
        %804 = vmatprep.subr.mxu0 0.0
        %805 = vmatpush1.msra.mxu0 0.0
        %806 = vmatprep.subr.mxu0 0.0
        %807 = vmatpush1.msra.mxu0 0.0
        %808 = vmatprep.subr.mxu0 0.0
        %809 = vmatpush1.msra.mxu0 0.0
        %810 = vmatprep.subr.mxu0 0.0
        %811 = vmatpush1.msra.mxu0 0.0
        %812 = vmatprep.subr.mxu0 0.0
        %813 = vmatpush1.msra.mxu0 0.0
        %814 = vmatprep.mubr.f32.mxu0 0.0
        %815 = vmatmul.mubr.f32.gmra.mrb[0].mxu0 %v739
        %v816 = vpop.f32.mrb[0].mxu0
        %v817 = vadd.f32 0.0, %v816
        %v818 = vpop.f32.mrb[0].mxu0
        %v819 = vadd.f32 0.0, %v818
        %820 = vmatprep.mubr.f32.mxu0 0.0
        %821 = vmatmul.mubr.f32.gmra.mrb[0].mxu0 %v742
        %v822 = vpop.f32.mrb[0].mxu0
        %v823 = vadd.f32 0.0, %v822
        %v824 = vpop.f32.mrb[0].mxu0
        %v825 = vadd.f32 0.0, %v824
        %826 = vdwg.mxu0
        %v831 = vrot.slane %v817, 7
        %v832 = vrot.slane %v819, 7
        %v833 = vrot.slane %v823, 7
        %v834 = vsel %vm542, %v831, %v833
        %v835 = vrot.slane %v825, 7
        %v836 = vsel %vm542, %v832, %v835
        %v841 = vsel %vm542, 0.0, %v831
        %v842 = vsel %vm542, 0.0, %v832
        %v843 = vpack.c.bf16 %v834, %v841
        %v844 = vpack.c.bf16 %v836, %v842
        %v845 = vld [vmem:[%s3] sm:$0xff]
        %v846 = vld [vmem:[%s3 + $0x8] sm:$0xff]
        %v847 = vld [vmem:[%s3 + $0x10] sm:$0xff]
        %v848 = vld [vmem:[%s3 + $0x18] sm:$0xff]
        %v849 = vld [vmem:[%s3 + $0x20] sm:$0xff]
        %v850 = vld [vmem:[%s3 + $0x28] sm:$0xff]
        %v851 = vld [vmem:[%s3 + $0x30] sm:$0xff]
        %v852 = vld [vmem:[%s3 + $0x38] sm:$0xff]
        %v853 = vld [vmem:[%s3 + $0x40] sm:$0xff]
        %v854 = vld [vmem:[%s3 + $0x48] sm:$0xff]
        %v855 = vld [vmem:[%s3 + $0x50] sm:$0xff]
        %v856 = vld [vmem:[%s3 + $0x58] sm:$0xff]
        %v857 = vld [vmem:[%s3 + $0x60] sm:$0xff]
        %v858 = vld [vmem:[%s3 + $0x68] sm:$0xff]
        %v859 = vld [vmem:[%s3 + $0x70] sm:$0xff]
        %v860 = vld [vmem:[%s3 + $0x78] sm:$0xff]
        %v861 = vld [vmem:[%s3 + $0x80] sm:$0xff]
        %v862 = vld [vmem:[%s3 + $0x88] sm:$0xff]
        %v863 = vld [vmem:[%s3 + $0x90] sm:$0xff]
        %v864 = vld [vmem:[%s3 + $0x98] sm:$0xff]
        %v865 = vld [vmem:[%s3 + $0xa0] sm:$0xff]
        %v866 = vld [vmem:[%s3 + $0xa8] sm:$0xff]
        %v867 = vld [vmem:[%s3 + $0xb0] sm:$0xff]
        %v868 = vld [vmem:[%s3 + $0xb8] sm:$0xff]
        %v869 = vld [vmem:[%s3 + $0xc0] sm:$0xff]
        %v870 = vld [vmem:[%s3 + $0xc8] sm:$0xff]
        %v871 = vld [vmem:[%s3 + $0xd0] sm:$0xff]
        %v872 = vld [vmem:[%s3 + $0xd8] sm:$0xff]
        %v873 = vld [vmem:[%s3 + $0xe0] sm:$0xff]
        %s874 = scalar_lea.vmem %s3, 232
        %v875 = vld [vmem:[%s874] sm:$0xff]
        %v876 = vld [vmem:[%s874 + $0x8] sm:$0xff]
        %v877 = vld [vmem:[%s874 + $0x10] sm:$0xff]
        %v878 = vld [vmem:[%s874 + $0x18] sm:$0xff]
        %v879 = vld [vmem:[%s874 + $0x20] sm:$0xff]
        %v880 = vld [vmem:[%s874 + $0x28] sm:$0xff]
        %v881 = vld [vmem:[%s874 + $0x30] sm:$0xff]
        %v882 = vld [vmem:[%s874 + $0x38] sm:$0xff]
        %v883 = vld [vmem:[%s874 + $0x40] sm:$0xff]
        %v884 = vld [vmem:[%s874 + $0x48] sm:$0xff]
        %v885 = vld [vmem:[%s874 + $0x50] sm:$0xff]
        %v886 = vld [vmem:[%s874 + $0x58] sm:$0xff]
        %v887 = vld [vmem:[%s874 + $0x60] sm:$0xff]
        %v888 = vld [vmem:[%s874 + $0x68] sm:$0xff]
        %v889 = vld [vmem:[%s874 + $0x70] sm:$0xff]
        %v890 = vld [vmem:[%s874 + $0x78] sm:$0xff]
        %v891 = vld [vmem:[%s874 + $0x80] sm:$0xff]
        %v892 = vld [vmem:[%s874 + $0x88] sm:$0xff]
        %v893 = vld [vmem:[%s874 + $0x90] sm:$0xff]
        %v894 = vld [vmem:[%s874 + $0x98] sm:$0xff]
        %v895 = vld [vmem:[%s874 + $0xa0] sm:$0xff]
        %v896 = vld [vmem:[%s874 + $0xa8] sm:$0xff]
        %v897 = vld [vmem:[%s874 + $0xb0] sm:$0xff]
        %v898 = vld [vmem:[%s874 + $0xb8] sm:$0xff]
        %v899 = vld [vmem:[%s874 + $0xc0] sm:$0xff]
        %v900 = vld [vmem:[%s874 + $0xc8] sm:$0xff]
        %v901 = vld [vmem:[%s874 + $0xd0] sm:$0xff]
        %v902 = vld [vmem:[%s874 + $0xd8] sm:$0xff]
        %v903 = vld [vmem:[%s874 + $0xe0] sm:$0xff]
        %v905 = vshrl.u32 %v843, 16
        %v907 = vshll.u32 %v843, 16
        %v909 = vrot.slane %v907, 1
        %v910 = vor.u32 %v905, %v909
        %v912 = vshrl.u32 %v844, 16
        %v914 = vshll.u32 %v844, 16
        %v916 = vrot.slane %v914, 1
        %v917 = vor.u32 %v912, %v916
        %v948 = vunpack.c.l.b16 %v875
        %v949 = vunpack.c.h.b16 %v875
        %v950 = vunpack.c.l.b16 %v876
        %v951 = vunpack.c.h.b16 %v876
        %v952 = vunpack.c.l.b16 %v877
        %v953 = vunpack.c.h.b16 %v877
        %v954 = vunpack.c.l.b16 %v878
        %v955 = vunpack.c.h.b16 %v878
        %v956 = vunpack.c.l.b16 %v879
        %v957 = vunpack.c.h.b16 %v879
        %v958 = vunpack.c.l.b16 %v880
        %v959 = vunpack.c.h.b16 %v880
        %v960 = vunpack.c.l.b16 %v881
        %v961 = vunpack.c.h.b16 %v881
        %v962 = vunpack.c.l.b16 %v882
        %v963 = vunpack.c.h.b16 %v882
        %v964 = vunpack.c.l.b16 %v883
        %v965 = vunpack.c.h.b16 %v883
        %v966 = vunpack.c.l.b16 %v884
        %v967 = vunpack.c.h.b16 %v884
        %v968 = vunpack.c.l.b16 %v885
        %v969 = vunpack.c.h.b16 %v885
        %v970 = vunpack.c.l.b16 %v886
        %v971 = vunpack.c.h.b16 %v886
        %v972 = vunpack.c.l.b16 %v887
        %v973 = vunpack.c.h.b16 %v887
        %v974 = vunpack.c.l.b16 %v888
        %v975 = vunpack.c.h.b16 %v888
        %v976 = vunpack.c.l.b16 %v889
        %v977 = vunpack.c.h.b16 %v889
        %v978 = vunpack.c.l.b16 %v890
        %v979 = vunpack.c.h.b16 %v890
        %v980 = vunpack.c.l.b16 %v891
        %v981 = vunpack.c.h.b16 %v891
        %v982 = vunpack.c.l.b16 %v892
        %v983 = vunpack.c.h.b16 %v892
        %v984 = vunpack.c.l.b16 %v893
        %v985 = vunpack.c.h.b16 %v893
        %v986 = vunpack.c.l.b16 %v894
        %v987 = vunpack.c.h.b16 %v894
        %v988 = vunpack.c.l.b16 %v895
        %v989 = vunpack.c.h.b16 %v895
        %v990 = vunpack.c.l.b16 %v896
        %v991 = vunpack.c.h.b16 %v896
        %v992 = vunpack.c.l.b16 %v897
        %v993 = vunpack.c.h.b16 %v897
        %v994 = vunpack.c.l.b16 %v898
        %v995 = vunpack.c.h.b16 %v898
        %v996 = vunpack.c.l.b16 %v899
        %v997 = vunpack.c.h.b16 %v899
        %v998 = vunpack.c.l.b16 %v900
        %v999 = vunpack.c.h.b16 %v900
        %v1000 = vunpack.c.l.b16 %v901
        %v1001 = vunpack.c.h.b16 %v901
        %v1002 = vunpack.c.l.b16 %v902
        %v1003 = vunpack.c.h.b16 %v902
        %v1004 = vunpack.c.l.b16 %v903
        %v1005 = vunpack.c.h.b16 %v903
        %v1006 = vpack.c.b16 %v950, %v948
        %v1007 = vpack.c.b16 %v951, %v949
        %v1008 = vpack.c.b16 %v954, %v952
        %v1009 = vpack.c.b16 %v955, %v953
        %v1010 = vpack.c.b16 %v958, %v956
        %v1011 = vpack.c.b16 %v959, %v957
        %v1012 = vpack.c.b16 %v962, %v960
        %v1013 = vpack.c.b16 %v963, %v961
        %v1014 = vpack.c.b16 %v966, %v964
        %v1015 = vpack.c.b16 %v967, %v965
        %v1016 = vpack.c.b16 %v970, %v968
        %v1017 = vpack.c.b16 %v971, %v969
        %v1018 = vpack.c.b16 %v974, %v972
        %v1019 = vpack.c.b16 %v975, %v973
        %v1020 = vpack.c.b16 %v978, %v976
        %v1021 = vpack.c.b16 %v979, %v977
        %v1022 = vpack.c.b16 %v982, %v980
        %v1023 = vpack.c.b16 %v983, %v981
        %v1024 = vpack.c.b16 %v986, %v984
        %v1025 = vpack.c.b16 %v987, %v985
        %v1026 = vpack.c.b16 %v990, %v988
        %v1027 = vpack.c.b16 %v991, %v989
        %v1028 = vpack.c.b16 %v994, %v992
        %v1029 = vpack.c.b16 %v995, %v993
        %v1030 = vpack.c.b16 %v998, %v996
        %v1031 = vpack.c.b16 %v999, %v997
        %v1032 = vpack.c.b16 %v1002, %v1000
        %v1033 = vpack.c.b16 %v1003, %v1001
        %v1034 = vpack.c.b16 %v1004, %v1004
        %v1035 = vpack.c.b16 %v1005, %v1005
        %vm1064 = vcmask 850944
        %v1066 = vsel %vm1064, %v917, 0
        %vm1068 = vcmask 1043456
        %v1070 = vsel %vm1068, %v1034, 0
        %v1073 = vsel %vm1068, %v1035, 0
        %1075 = vmatprep.subr.bf16.mxu0 %v1007
        %1076 = vmatpush1.bf16.msra.mxu0 %v1006
        %1077 = vmatprep.subr.bf16.mxu0 %v1009
        %1078 = vmatpush1.bf16.msra.mxu0 %v1008
        %1079 = vmatprep.subr.bf16.mxu0 %v1011
        %1080 = vmatpush1.bf16.msra.mxu0 %v1010
        %1081 = vmatprep.subr.bf16.mxu0 %v1013
        %1082 = vmatpush1.bf16.msra.mxu0 %v1012
        %1083 = vmatprep.subr.bf16.mxu0 %v1015
        %1084 = vmatpush1.bf16.msra.mxu0 %v1014
        %1085 = vmatprep.subr.bf16.mxu0 %v1017
        %1086 = vmatpush1.bf16.msra.mxu0 %v1016
        %1087 = vmatprep.subr.bf16.mxu0 %v1019
        %1088 = vmatpush1.bf16.msra.mxu0 %v1018
        %1089 = vmatprep.subr.bf16.mxu0 %v1021
        %1090 = vmatpush1.bf16.msra.mxu0 %v1020
        %1091 = vmatprep.subr.bf16.mxu0 %v1023
        %1092 = vmatpush1.bf16.msra.mxu0 %v1022
        %1093 = vmatprep.subr.bf16.mxu0 %v1025
        %1094 = vmatpush1.bf16.msra.mxu0 %v1024
        %1095 = vmatprep.subr.bf16.mxu0 %v1027
        %1096 = vmatpush1.bf16.msra.mxu0 %v1026
        %1097 = vmatprep.subr.bf16.mxu0 %v1029
        %1098 = vmatpush1.bf16.msra.mxu0 %v1028
        %1099 = vmatprep.subr.bf16.mxu0 %v1031
        %1100 = vmatpush1.bf16.msra.mxu0 %v1030
        %1101 = vmatprep.subr.bf16.mxu0 %v1033
        %1102 = vmatpush1.bf16.msra.mxu0 %v1032
        %1103 = vmatprep.subr.bf16.mxu0 %v1073
        %1104 = vmatpush1.bf16.msra.mxu0 %v1070
        %1105 = vmatprep.subr.bf16.mxu0 0
        %1106 = vmatpush1.bf16.msra.mxu0 0
        %1107 = vmatprep.mubr.bf16.mxu0 %v1066
        %1108 = vmatmul.mubr.bf16.gmra.mrb[0].mxu0 %v910
        %v1109 = vpop.f32.mrb[0].mxu0
        %v1110 = vadd.f32 0.0, %v1109
        %v1111 = vpop.f32.mrb[0].mxu0
        %v1112 = vadd.f32 0.0, %v1111
        %v1113 = vpop.f32.mrb[0].mxu0
        %v1114 = vadd.f32 0.0, %v1113
        %v1115 = vpop.f32.mrb[0].mxu0
        %v1116 = vadd.f32 0.0, %v1115
        %1117 = vdwg.mxu0
        %v1147 = vunpack.c.l.b16 %v845
        %v1148 = vunpack.c.h.b16 %v845
        %v1149 = vunpack.c.l.b16 %v846
        %v1150 = vunpack.c.h.b16 %v846
        %v1151 = vunpack.c.l.b16 %v847
        %v1152 = vunpack.c.h.b16 %v847
        %v1153 = vunpack.c.l.b16 %v848
        %v1154 = vunpack.c.h.b16 %v848
        %v1155 = vunpack.c.l.b16 %v849
        %v1156 = vunpack.c.h.b16 %v849
        %v1157 = vunpack.c.l.b16 %v850
        %v1158 = vunpack.c.h.b16 %v850
        %v1159 = vunpack.c.l.b16 %v851
        %v1160 = vunpack.c.h.b16 %v851
        %v1161 = vunpack.c.l.b16 %v852
        %v1162 = vunpack.c.h.b16 %v852
        %v1163 = vunpack.c.l.b16 %v853
        %v1164 = vunpack.c.h.b16 %v853
        %v1165 = vunpack.c.l.b16 %v854
        %v1166 = vunpack.c.h.b16 %v854
        %v1167 = vunpack.c.l.b16 %v855
        %v1168 = vunpack.c.h.b16 %v855
        %v1169 = vunpack.c.l.b16 %v856
        %v1170 = vunpack.c.h.b16 %v856
        %v1171 = vunpack.c.l.b16 %v857
        %v1172 = vunpack.c.h.b16 %v857
        %v1173 = vunpack.c.l.b16 %v858
        %v1174 = vunpack.c.h.b16 %v858
        %v1175 = vunpack.c.l.b16 %v859
        %v1176 = vunpack.c.h.b16 %v859
        %v1177 = vunpack.c.l.b16 %v860
        %v1178 = vunpack.c.h.b16 %v860
        %v1179 = vunpack.c.l.b16 %v861
        %v1180 = vunpack.c.h.b16 %v861
        %v1181 = vunpack.c.l.b16 %v862
        %v1182 = vunpack.c.h.b16 %v862
        %v1183 = vunpack.c.l.b16 %v863
        %v1184 = vunpack.c.h.b16 %v863
        %v1185 = vunpack.c.l.b16 %v864
        %v1186 = vunpack.c.h.b16 %v864
        %v1187 = vunpack.c.l.b16 %v865
        %v1188 = vunpack.c.h.b16 %v865
        %v1189 = vunpack.c.l.b16 %v866
        %v1190 = vunpack.c.h.b16 %v866
        %v1191 = vunpack.c.l.b16 %v867
        %v1192 = vunpack.c.h.b16 %v867
        %v1193 = vunpack.c.l.b16 %v868
        %v1194 = vunpack.c.h.b16 %v868
        %v1195 = vunpack.c.l.b16 %v869
        %v1196 = vunpack.c.h.b16 %v869
        %v1197 = vunpack.c.l.b16 %v870
        %v1198 = vunpack.c.h.b16 %v870
        %v1199 = vunpack.c.l.b16 %v871
        %v1200 = vunpack.c.h.b16 %v871
        %v1201 = vunpack.c.l.b16 %v872
        %v1202 = vunpack.c.h.b16 %v872
        %v1203 = vunpack.c.l.b16 %v873
        %v1204 = vunpack.c.h.b16 %v873
        %v1205 = vpack.c.b16 %v1149, %v1147
        %v1206 = vpack.c.b16 %v1150, %v1148
        %v1207 = vpack.c.b16 %v1153, %v1151
        %v1208 = vpack.c.b16 %v1154, %v1152
        %v1209 = vpack.c.b16 %v1157, %v1155
        %v1210 = vpack.c.b16 %v1158, %v1156
        %v1211 = vpack.c.b16 %v1161, %v1159
        %v1212 = vpack.c.b16 %v1162, %v1160
        %v1213 = vpack.c.b16 %v1165, %v1163
        %v1214 = vpack.c.b16 %v1166, %v1164
        %v1215 = vpack.c.b16 %v1169, %v1167
        %v1216 = vpack.c.b16 %v1170, %v1168
        %v1217 = vpack.c.b16 %v1173, %v1171
        %v1218 = vpack.c.b16 %v1174, %v1172
        %v1219 = vpack.c.b16 %v1177, %v1175
        %v1220 = vpack.c.b16 %v1178, %v1176
        %v1221 = vpack.c.b16 %v1181, %v1179
        %v1222 = vpack.c.b16 %v1182, %v1180
        %v1223 = vpack.c.b16 %v1185, %v1183
        %v1224 = vpack.c.b16 %v1186, %v1184
        %v1225 = vpack.c.b16 %v1189, %v1187
        %v1226 = vpack.c.b16 %v1190, %v1188
        %v1227 = vpack.c.b16 %v1193, %v1191
        %v1228 = vpack.c.b16 %v1194, %v1192
        %v1229 = vpack.c.b16 %v1197, %v1195
        %v1230 = vpack.c.b16 %v1198, %v1196
        %v1231 = vpack.c.b16 %v1201, %v1199
        %v1232 = vpack.c.b16 %v1202, %v1200
        %v1233 = vpack.c.b16 %v1203, %v1203
        %v1234 = vpack.c.b16 %v1204, %v1204
        %v1263 = vsel %vm1064, %v844, 0
        %v1266 = vsel %vm1068, %v1233, 0
        %v1269 = vsel %vm1068, %v1234, 0
        %1271 = vmatprep.subr.bf16.mxu0 %v1206
        %1272 = vmatpush1.bf16.msra.mxu0 %v1205
        %1273 = vmatprep.subr.bf16.mxu0 %v1208
        %1274 = vmatpush1.bf16.msra.mxu0 %v1207
        %1275 = vmatprep.subr.bf16.mxu0 %v1210
        %1276 = vmatpush1.bf16.msra.mxu0 %v1209
        %1277 = vmatprep.subr.bf16.mxu0 %v1212
        %1278 = vmatpush1.bf16.msra.mxu0 %v1211
        %1279 = vmatprep.subr.bf16.mxu0 %v1214
        %1280 = vmatpush1.bf16.msra.mxu0 %v1213
        %1281 = vmatprep.subr.bf16.mxu0 %v1216
        %1282 = vmatpush1.bf16.msra.mxu0 %v1215
        %1283 = vmatprep.subr.bf16.mxu0 %v1218
        %1284 = vmatpush1.bf16.msra.mxu0 %v1217
        %1285 = vmatprep.subr.bf16.mxu0 %v1220
        %1286 = vmatpush1.bf16.msra.mxu0 %v1219
        %1287 = vmatprep.subr.bf16.mxu0 %v1222
        %1288 = vmatpush1.bf16.msra.mxu0 %v1221
        %1289 = vmatprep.subr.bf16.mxu0 %v1224
        %1290 = vmatpush1.bf16.msra.mxu0 %v1223
        %1291 = vmatprep.subr.bf16.mxu0 %v1226
        %1292 = vmatpush1.bf16.msra.mxu0 %v1225
        %1293 = vmatprep.subr.bf16.mxu0 %v1228
        %1294 = vmatpush1.bf16.msra.mxu0 %v1227
        %1295 = vmatprep.subr.bf16.mxu0 %v1230
        %1296 = vmatpush1.bf16.msra.mxu0 %v1229
        %1297 = vmatprep.subr.bf16.mxu0 %v1232
        %1298 = vmatpush1.bf16.msra.mxu0 %v1231
        %1299 = vmatprep.subr.bf16.mxu0 %v1269
        %1300 = vmatpush1.bf16.msra.mxu0 %v1266
        %1301 = vmatprep.subr.bf16.mxu0 0
        %1302 = vmatpush1.bf16.msra.mxu0 0
        %1303 = vmatprep.mubr.bf16.mxu0 %v1263
        %1304 = vmatmul.mubr.bf16.gmra.mrb[0].mxu0 %v843
        %v1305 = vpop.f32.mrb[0].mxu0
        %v1306 = vadd.f32 %v1110, %v1305
        %v1307 = vpop.f32.mrb[0].mxu0
        %v1308 = vadd.f32 %v1112, %v1307
        %v1309 = vpop.f32.mrb[0].mxu0
        %v1310 = vadd.f32 %v1114, %v1309
        %v1311 = vpop.f32.mrb[0].mxu0
        %v1312 = vadd.f32 %v1116, %v1311
        %1313 = vdwg.mxu0
        %v1314 = vpack.c.bf16 0.0, 0.0
        %s1315 = scalar_lea.vmem %s3, 464
        %v1316 = vld [vmem:[%s1315] sm:$0xff]
        %v1317 = vld [vmem:[%s1315 + $0x8] sm:$0xff]
        %v1318 = vld [vmem:[%s1315 + $0x10] sm:$0xff]
        %v1319 = vld [vmem:[%s1315 + $0x18] sm:$0xff]
        %v1320 = vld [vmem:[%s1315 + $0x20] sm:$0xff]
        %v1321 = vld [vmem:[%s1315 + $0x28] sm:$0xff]
        %v1322 = vld [vmem:[%s1315 + $0x30] sm:$0xff]
        %v1323 = vld [vmem:[%s1315 + $0x38] sm:$0xff]
        %v1324 = vld [vmem:[%s1315 + $0x40] sm:$0xff]
        %v1325 = vld [vmem:[%s1315 + $0x48] sm:$0xff]
        %v1326 = vld [vmem:[%s1315 + $0x50] sm:$0xff]
        %v1327 = vld [vmem:[%s1315 + $0x58] sm:$0xff]
        %v1328 = vld [vmem:[%s1315 + $0x60] sm:$0xff]
        %v1329 = vld [vmem:[%s1315 + $0x68] sm:$0xff]
        %v1330 = vld [vmem:[%s1315 + $0x70] sm:$0xff]
        %v1331 = vld [vmem:[%s1315 + $0x78] sm:$0xff]
        %v1332 = vld [vmem:[%s1315 + $0x80] sm:$0xff]
        %v1333 = vld [vmem:[%s1315 + $0x88] sm:$0xff]
        %v1334 = vld [vmem:[%s1315 + $0x90] sm:$0xff]
        %v1335 = vld [vmem:[%s1315 + $0x98] sm:$0xff]
        %v1336 = vld [vmem:[%s1315 + $0xa0] sm:$0xff]
        %v1337 = vld [vmem:[%s1315 + $0xa8] sm:$0xff]
        %v1338 = vld [vmem:[%s1315 + $0xb0] sm:$0xff]
        %v1339 = vld [vmem:[%s1315 + $0xb8] sm:$0xff]
        %v1340 = vld [vmem:[%s1315 + $0xc0] sm:$0xff]
        %v1341 = vld [vmem:[%s1315 + $0xc8] sm:$0xff]
        %v1342 = vld [vmem:[%s1315 + $0xd0] sm:$0xff]
        %v1343 = vld [vmem:[%s1315 + $0xd8] sm:$0xff]
        %v1344 = vld [vmem:[%s1315 + $0xe0] sm:$0xff]
        %vm1348 = vcmask 1046528
        %v1349 = vrot.slane %v843, 1
        %v1350 = vrot.slane %v1314, 1
        %v1351 = vsel %vm1348, %v1349, %v1350
        %v1352 = vrot.slane %v844, 1
        %v1353 = vsel %vm1348, %v1352, %v1350
        %v1384 = vunpack.c.l.b16 %v1316
        %v1385 = vunpack.c.h.b16 %v1316
        %v1386 = vunpack.c.l.b16 %v1317
        %v1387 = vunpack.c.h.b16 %v1317
        %v1388 = vunpack.c.l.b16 %v1318
        %v1389 = vunpack.c.h.b16 %v1318
        %v1390 = vunpack.c.l.b16 %v1319
        %v1391 = vunpack.c.h.b16 %v1319
        %v1392 = vunpack.c.l.b16 %v1320
        %v1393 = vunpack.c.h.b16 %v1320
        %v1394 = vunpack.c.l.b16 %v1321
        %v1395 = vunpack.c.h.b16 %v1321
        %v1396 = vunpack.c.l.b16 %v1322
        %v1397 = vunpack.c.h.b16 %v1322
        %v1398 = vunpack.c.l.b16 %v1323
        %v1399 = vunpack.c.h.b16 %v1323
        %v1400 = vunpack.c.l.b16 %v1324
        %v1401 = vunpack.c.h.b16 %v1324
        %v1402 = vunpack.c.l.b16 %v1325
        %v1403 = vunpack.c.h.b16 %v1325
        %v1404 = vunpack.c.l.b16 %v1326
        %v1405 = vunpack.c.h.b16 %v1326
        %v1406 = vunpack.c.l.b16 %v1327
        %v1407 = vunpack.c.h.b16 %v1327
        %v1408 = vunpack.c.l.b16 %v1328
        %v1409 = vunpack.c.h.b16 %v1328
        %v1410 = vunpack.c.l.b16 %v1329
        %v1411 = vunpack.c.h.b16 %v1329
        %v1412 = vunpack.c.l.b16 %v1330
        %v1413 = vunpack.c.h.b16 %v1330
        %v1414 = vunpack.c.l.b16 %v1331
        %v1415 = vunpack.c.h.b16 %v1331
        %v1416 = vunpack.c.l.b16 %v1332
        %v1417 = vunpack.c.h.b16 %v1332
        %v1418 = vunpack.c.l.b16 %v1333
        %v1419 = vunpack.c.h.b16 %v1333
        %v1420 = vunpack.c.l.b16 %v1334
        %v1421 = vunpack.c.h.b16 %v1334
        %v1422 = vunpack.c.l.b16 %v1335
        %v1423 = vunpack.c.h.b16 %v1335
        %v1424 = vunpack.c.l.b16 %v1336
        %v1425 = vunpack.c.h.b16 %v1336
        %v1426 = vunpack.c.l.b16 %v1337
        %v1427 = vunpack.c.h.b16 %v1337
        %v1428 = vunpack.c.l.b16 %v1338
        %v1429 = vunpack.c.h.b16 %v1338
        %v1430 = vunpack.c.l.b16 %v1339
        %v1431 = vunpack.c.h.b16 %v1339
        %v1432 = vunpack.c.l.b16 %v1340
        %v1433 = vunpack.c.h.b16 %v1340
        %v1434 = vunpack.c.l.b16 %v1341
        %v1435 = vunpack.c.h.b16 %v1341
        %v1436 = vunpack.c.l.b16 %v1342
        %v1437 = vunpack.c.h.b16 %v1342
        %v1438 = vunpack.c.l.b16 %v1343
        %v1439 = vunpack.c.h.b16 %v1343
        %v1440 = vunpack.c.l.b16 %v1344
        %v1441 = vunpack.c.h.b16 %v1344
        %v1442 = vpack.c.b16 %v1386, %v1384
        %v1443 = vpack.c.b16 %v1387, %v1385
        %v1444 = vpack.c.b16 %v1390, %v1388
        %v1445 = vpack.c.b16 %v1391, %v1389
        %v1446 = vpack.c.b16 %v1394, %v1392
        %v1447 = vpack.c.b16 %v1395, %v1393
        %v1448 = vpack.c.b16 %v1398, %v1396
        %v1449 = vpack.c.b16 %v1399, %v1397
        %v1450 = vpack.c.b16 %v1402, %v1400
        %v1451 = vpack.c.b16 %v1403, %v1401
        %v1452 = vpack.c.b16 %v1406, %v1404
        %v1453 = vpack.c.b16 %v1407, %v1405
        %v1454 = vpack.c.b16 %v1410, %v1408
        %v1455 = vpack.c.b16 %v1411, %v1409
        %v1456 = vpack.c.b16 %v1414, %v1412
        %v1457 = vpack.c.b16 %v1415, %v1413
        %v1458 = vpack.c.b16 %v1418, %v1416
        %v1459 = vpack.c.b16 %v1419, %v1417
        %v1460 = vpack.c.b16 %v1422, %v1420
        %v1461 = vpack.c.b16 %v1423, %v1421
        %v1462 = vpack.c.b16 %v1426, %v1424
        %v1463 = vpack.c.b16 %v1427, %v1425
        %v1464 = vpack.c.b16 %v1430, %v1428
        %v1465 = vpack.c.b16 %v1431, %v1429
        %v1466 = vpack.c.b16 %v1434, %v1432
        %v1467 = vpack.c.b16 %v1435, %v1433
        %v1468 = vpack.c.b16 %v1438, %v1436
        %v1469 = vpack.c.b16 %v1439, %v1437
        %v1470 = vpack.c.b16 %v1440, %v1440
        %v1471 = vpack.c.b16 %v1441, %v1441
        %v1501 = vsel %vm1064, %v1353, 0
        %v1504 = vsel %vm1068, %v1470, 0
        %v1507 = vsel %vm1068, %v1471, 0
        %1509 = vmatprep.subr.bf16.mxu0 %v1443
        %1510 = vmatpush1.bf16.msra.mxu0 %v1442
        %1511 = vmatprep.subr.bf16.mxu0 %v1445
        %1512 = vmatpush1.bf16.msra.mxu0 %v1444
        %1513 = vmatprep.subr.bf16.mxu0 %v1447
        %1514 = vmatpush1.bf16.msra.mxu0 %v1446
        %1515 = vmatprep.subr.bf16.mxu0 %v1449
        %1516 = vmatpush1.bf16.msra.mxu0 %v1448
        %1517 = vmatprep.subr.bf16.mxu0 %v1451
        %1518 = vmatpush1.bf16.msra.mxu0 %v1450
        %1519 = vmatprep.subr.bf16.mxu0 %v1453
        %1520 = vmatpush1.bf16.msra.mxu0 %v1452
        %1521 = vmatprep.subr.bf16.mxu0 %v1455
        %1522 = vmatpush1.bf16.msra.mxu0 %v1454
        %1523 = vmatprep.subr.bf16.mxu0 %v1457
        %1524 = vmatpush1.bf16.msra.mxu0 %v1456
        %1525 = vmatprep.subr.bf16.mxu0 %v1459
        %1526 = vmatpush1.bf16.msra.mxu0 %v1458
        %1527 = vmatprep.subr.bf16.mxu0 %v1461
        %1528 = vmatpush1.bf16.msra.mxu0 %v1460
        %1529 = vmatprep.subr.bf16.mxu0 %v1463
        %1530 = vmatpush1.bf16.msra.mxu0 %v1462
        %1531 = vmatprep.subr.bf16.mxu0 %v1465
        %1532 = vmatpush1.bf16.msra.mxu0 %v1464
        %1533 = vmatprep.subr.bf16.mxu0 %v1467
        %1534 = vmatpush1.bf16.msra.mxu0 %v1466
        %1535 = vmatprep.subr.bf16.mxu0 %v1469
        %1536 = vmatpush1.bf16.msra.mxu0 %v1468
        %1537 = vmatprep.subr.bf16.mxu0 %v1507
        %1538 = vmatpush1.bf16.msra.mxu0 %v1504
        %1539 = vmatprep.subr.bf16.mxu0 0
        %1540 = vmatpush1.bf16.msra.mxu0 0
        %1541 = vmatprep.mubr.bf16.mxu0 %v1501
        %1542 = vmatmul.mubr.bf16.gmra.mrb[0].mxu0 %v1351
        %v1543 = vpop.f32.mrb[0].mxu0
        %v1544 = vadd.f32 0.0, %v1543
        %v1545 = vpop.f32.mrb[0].mxu0
        %v1546 = vadd.f32 0.0, %v1545
        %v1547 = vpop.f32.mrb[0].mxu0
        %v1548 = vadd.f32 0.0, %v1547
        %v1549 = vpop.f32.mrb[0].mxu0
        %v1550 = vadd.f32 0.0, %v1549
        %1551 = vdwg.mxu0
        %v1552 = vadd.f32 %v1306, %v1544
        %v1553 = vadd.f32 %v1308, %v1546
        %v1554 = vadd.f32 %v1310, %v1548
        %v1555 = vadd.f32 %v1312, %v1550
        %v1556 = vld [vmem:[%s4] ss:$4 sm:$0x3]
        %s1557 = scalar_lea.vmem %s4, 1
        %v1558 = vld [vmem:[%s1557] ss:$4 sm:$0x3]
        %s1559 = scalar_lea.vmem %s4, 2
        %v1560 = vld [vmem:[%s1559] ss:$4 sm:$0x3]
        %v1562 = vlaneseq
        %v1563 = vshrl.u32 %v1562, 7
        %v1564 = vsub.s32 0, %v1563
        %v1565 = vrot.slane %v1556, %v1564
        %v1566 = vlaneseq
        %v1567 = vshrl.u32 %v1566, 7
        %v1568 = vsub.s32 1, %v1567
        %v1569 = vrot.slane %v1556, %v1568
        %v1572 = vadd.f32 %v1552, %v1565
        %v1573 = vadd.f32 %v1553, %v1569
        %v1574 = vadd.f32 %v1554, %v1565
        %v1575 = vadd.f32 %v1555, %v1569
        %v1576 = vmax.f32 %v1572, 0.0
        %v1577 = vmax.f32 %v1573, 0.0
        %v1578 = vmax.f32 %v1574, 0.0
        %v1579 = vmax.f32 %v1575, 0.0
        %v1581 = vlaneseq
        %v1582 = vshrl.u32 %v1581, 7
        %v1583 = vsub.s32 0, %v1582
        %v1584 = vrot.slane %v1558, %v1583
        %v1585 = vlaneseq
        %v1586 = vshrl.u32 %v1585, 7
        %v1587 = vsub.s32 1, %v1586
        %v1588 = vrot.slane %v1558, %v1587
        %v1591 = vmul.f32 %v1576, %v1584
        %v1592 = vmul.f32 %v1577, %v1588
        %v1593 = vmul.f32 %v1578, %v1584
        %v1594 = vmul.f32 %v1579, %v1588
        %v1596 = vlaneseq
        %v1597 = vshrl.u32 %v1596, 7
        %v1598 = vsub.s32 0, %v1597
        %v1599 = vrot.slane %v1560, %v1598
        %v1600 = vlaneseq
        %v1601 = vshrl.u32 %v1600, 7
        %v1602 = vsub.s32 1, %v1601
        %v1603 = vrot.slane %v1560, %v1602
        %v1606 = vadd.f32 %v1591, %v1599
        %v1607 = vadd.f32 %v1592, %v1603
        %v1608 = vadd.f32 %v1593, %v1599
        %v1609 = vadd.f32 %v1594, %v1603
        %1614 = vrot.lane.b32.xlu0 %v1606, 112
        %v1615 = vpop.permute.xlu0 %1614
        %1616 = vrot.lane.b32.xlu0 %v1607, 112
        %v1617 = vpop.permute.xlu0 %1616
        %1618 = vrot.lane.b32.xlu0 %v1608, 112
        %v1619 = vpop.permute.xlu0 %1618
        %1620 = vrot.lane.b32.xlu0 %v1609, 112
        %v1621 = vpop.permute.xlu0 %1620
        %vm1622 = vcmask 916480
        %v1623 = vsel %vm1622, %v1615, %v1617
        %v1624 = vsel %vm1622, %v1619, %v1621
        %v1629 = vmax.f32 %v1606, %v1623
        %v1630 = vmax.f32 %v1607, %v1617
        %v1631 = vmax.f32 %v1608, %v1624
        %v1632 = vmax.f32 %v1609, %v1621
        %v1637 = vrot.slane %v1629, 1
        %v1638 = vrot.slane %v1631, 1
        %v1639 = vsel %vm693, %v1637, %v1638
        %v1640 = vrot.slane %v1630, 1
        %v1641 = vrot.slane %v1632, 1
        %v1642 = vsel %vm693, %v1640, %v1641
        %v1647 = vmax.f32 %v1629, %v1639
        %v1648 = vmax.f32 %v1630, %v1642
        %v1649 = vmax.f32 %v1631, %v1638
        %v1650 = vmax.f32 %v1632, %v1641
        %vm1651 = vcmask 113664
        %v1652 = vsel %vm1651, %v735, 0
        %v1655 = vsel %vm474, %v1649, 0
        %v1658 = vsel %vm474, %v1650, 0
        %1660 = vmatprep.subr.mxu0 %v1648
        %1661 = vmatpush1.msra.mxu0 %v1647
        %1662 = vmatprep.subr.mxu0 %v1658
        %1663 = vmatpush1.msra.mxu0 %v1655
        %1664 = vmatprep.subr.mxu0 0.0
        %1665 = vmatpush1.msra.mxu0 0.0
        %1666 = vmatprep.subr.mxu0 0.0
        %1667 = vmatpush1.msra.mxu0 0.0
        %1668 = vmatprep.subr.mxu0 0.0
        %1669 = vmatpush1.msra.mxu0 0.0
        %1670 = vmatprep.subr.mxu0 0.0
        %1671 = vmatpush1.msra.mxu0 0.0
        %1672 = vmatprep.subr.mxu0 0.0
        %1673 = vmatpush1.msra.mxu0 0.0
        %1674 = vmatprep.subr.mxu0 0.0
        %1675 = vmatpush1.msra.mxu0 0.0
        %1676 = vmatprep.subr.mxu0 0.0
        %1677 = vmatpush1.msra.mxu0 0.0
        %1678 = vmatprep.subr.mxu0 0.0
        %1679 = vmatpush1.msra.mxu0 0.0
        %1680 = vmatprep.subr.mxu0 0.0
        %1681 = vmatpush1.msra.mxu0 0.0
        %1682 = vmatprep.subr.mxu0 0.0
        %1683 = vmatpush1.msra.mxu0 0.0
        %1684 = vmatprep.subr.mxu0 0.0
        %1685 = vmatpush1.msra.mxu0 0.0
        %1686 = vmatprep.subr.mxu0 0.0
        %1687 = vmatpush1.msra.mxu0 0.0
        %1688 = vmatprep.subr.mxu0 0.0
        %1689 = vmatpush1.msra.mxu0 0.0
        %1690 = vmatprep.subr.mxu0 0.0
        %1691 = vmatpush1.msra.mxu0 0.0
        %1692 = vmatprep.subr.mxu0 0.0
        %1693 = vmatpush1.msra.mxu0 0.0
        %1694 = vmatprep.subr.mxu0 0.0
        %1695 = vmatpush1.msra.mxu0 0.0
        %1696 = vmatprep.subr.mxu0 0.0
        %1697 = vmatpush1.msra.mxu0 0.0
        %1698 = vmatprep.subr.mxu0 0.0
        %1699 = vmatpush1.msra.mxu0 0.0
        %1700 = vmatprep.subr.mxu0 0.0
        %1701 = vmatpush1.msra.mxu0 0.0
        %1702 = vmatprep.subr.mxu0 0.0
        %1703 = vmatpush1.msra.mxu0 0.0
        %1704 = vmatprep.subr.mxu0 0.0
        %1705 = vmatpush1.msra.mxu0 0.0
        %1706 = vmatprep.subr.mxu0 0.0
        %1707 = vmatpush1.msra.mxu0 0.0
        %1708 = vmatprep.subr.mxu0 0.0
        %1709 = vmatpush1.msra.mxu0 0.0
        %1710 = vmatprep.subr.mxu0 0.0
        %1711 = vmatpush1.msra.mxu0 0.0
        %1712 = vmatprep.subr.mxu0 0.0
        %1713 = vmatpush1.msra.mxu0 0.0
        %1714 = vmatprep.subr.mxu0 0.0
        %1715 = vmatpush1.msra.mxu0 0.0
        %1716 = vmatprep.subr.mxu0 0.0
        %1717 = vmatpush1.msra.mxu0 0.0
        %1718 = vmatprep.subr.mxu0 0.0
        %1719 = vmatpush1.msra.mxu0 0.0
        %1720 = vmatprep.subr.mxu0 0.0
        %1721 = vmatpush1.msra.mxu0 0.0
        %1722 = vmatprep.subr.mxu0 0.0
        %1723 = vmatpush1.msra.mxu0 0.0
        %1724 = vmatprep.mubr.f32.mxu0 0.0
        %1725 = vmatmul.mubr.f32.gmra.mrb[0].mxu0 %v1652
        %v1726 = vpop.f32.mrb[0].mxu0
        %v1727 = vadd.f32 0.0, %v1726
        %v1728 = vpop.f32.mrb[0].mxu0
        %v1729 = vadd.f32 0.0, %v1728
        %1730 = vdwg.mxu0
        %v1733 = vrot.slane %v1727, 6
        %v1734 = vrot.slane %v1729, 6
        %vm1737 = vcmask 1041408
        %v1738 = vsel %vm1737, 0.0, %v1733
        %v1739 = vsel %vm1737, 0.0, %v1734
        %v1740 = vsel %vm542, %v1733, 0.0
        %v1741 = vsel %vm542, %v1734, 0.0
        %v1742 = vpack.c.bf16 %v1738, %v1738
        %v1743 = vpack.c.bf16 %v1739, %v1739
        %v1744 = vld [vmem:[%s5] sm:$0xf]
        %v1745 = vld [vmem:[%s5 + $0x4] sm:$0xf]
        %v1746 = vld [vmem:[%s5 + $0x8] sm:$0xf]
        %v1747 = vld [vmem:[%s5 + $0xc] sm:$0xf]
        %v1748 = vld [vmem:[%s5 + $0x10] sm:$0xf]
        %v1749 = vld [vmem:[%s5 + $0x14] sm:$0xf]
        %v1750 = vld [vmem:[%s5 + $0x18] sm:$0xf]
        %v1751 = vld [vmem:[%s5 + $0x1c] sm:$0xf]
        %v1752 = vld [vmem:[%s5 + $0x20] sm:$0xf]
        %v1753 = vld [vmem:[%s5 + $0x24] sm:$0xf]
        %v1754 = vld [vmem:[%s5 + $0x28] sm:$0xf]
        %v1755 = vld [vmem:[%s5 + $0x2c] sm:$0xf]
        %v1756 = vld [vmem:[%s5 + $0x30] sm:$0xf]
        %v1757 = vld [vmem:[%s5 + $0x34] sm:$0xf]
        %v1758 = vld [vmem:[%s5 + $0x38] sm:$0xf]
        %v1759 = vld [vmem:[%s5 + $0x3c] sm:$0xf]
        %v1760 = vld [vmem:[%s5 + $0x40] sm:$0xf]
        %v1761 = vld [vmem:[%s5 + $0x44] sm:$0xf]
        %v1762 = vld [vmem:[%s5 + $0x48] sm:$0xf]
        %v1763 = vld [vmem:[%s5 + $0x4c] sm:$0xf]
        %v1764 = vld [vmem:[%s5 + $0x50] sm:$0xf]
        %v1765 = vld [vmem:[%s5 + $0x54] sm:$0xf]
        %v1766 = vld [vmem:[%s5 + $0x58] sm:$0xf]
        %v1767 = vld [vmem:[%s5 + $0x5c] sm:$0xf]
        %v1768 = vld [vmem:[%s5 + $0x60] sm:$0xf]
        %v1769 = vld [vmem:[%s5 + $0x64] sm:$0xf]
        %v1770 = vld [vmem:[%s5 + $0x68] sm:$0xf]
        %v1771 = vld [vmem:[%s5 + $0x6c] sm:$0xf]
        %s1772 = scalar_lea.vmem %s5, 112
        %v1773 = vld [vmem:[%s1772] sm:$0xf]
        %v1774 = vld [vmem:[%s1772 + $0x4] sm:$0xf]
        %v1775 = vld [vmem:[%s1772 + $0x8] sm:$0xf]
        %v1776 = vld [vmem:[%s1772 + $0xc] sm:$0xf]
        %v1777 = vld [vmem:[%s1772 + $0x10] sm:$0xf]
        %v1778 = vld [vmem:[%s1772 + $0x14] sm:$0xf]
        %v1779 = vld [vmem:[%s1772 + $0x18] sm:$0xf]
        %v1780 = vld [vmem:[%s1772 + $0x1c] sm:$0xf]
        %v1781 = vld [vmem:[%s1772 + $0x20] sm:$0xf]
        %v1782 = vld [vmem:[%s1772 + $0x24] sm:$0xf]
        %v1783 = vld [vmem:[%s1772 + $0x28] sm:$0xf]
        %v1784 = vld [vmem:[%s1772 + $0x2c] sm:$0xf]
        %v1785 = vld [vmem:[%s1772 + $0x30] sm:$0xf]
        %v1786 = vld [vmem:[%s1772 + $0x34] sm:$0xf]
        %v1787 = vld [vmem:[%s1772 + $0x38] sm:$0xf]
        %v1788 = vld [vmem:[%s1772 + $0x3c] sm:$0xf]
        %v1789 = vld [vmem:[%s1772 + $0x40] sm:$0xf]
        %v1790 = vld [vmem:[%s1772 + $0x44] sm:$0xf]
        %v1791 = vld [vmem:[%s1772 + $0x48] sm:$0xf]
        %v1792 = vld [vmem:[%s1772 + $0x4c] sm:$0xf]
        %v1793 = vld [vmem:[%s1772 + $0x50] sm:$0xf]
        %v1794 = vld [vmem:[%s1772 + $0x54] sm:$0xf]
        %v1795 = vld [vmem:[%s1772 + $0x58] sm:$0xf]
        %v1796 = vld [vmem:[%s1772 + $0x5c] sm:$0xf]
        %v1797 = vld [vmem:[%s1772 + $0x60] sm:$0xf]
        %v1798 = vld [vmem:[%s1772 + $0x64] sm:$0xf]
        %v1799 = vld [vmem:[%s1772 + $0x68] sm:$0xf]
        %v1800 = vld [vmem:[%s1772 + $0x6c] sm:$0xf]
        %v1802 = vshrl.u32 %v1742, 16
        %v1804 = vshll.u32 %v1742, 16
        %v1806 = vrot.slane %v1804, 1
        %v1807 = vor.u32 %v1802, %v1806
        %v1809 = vshrl.u32 %v1743, 16
        %v1811 = vshll.u32 %v1743, 16
        %v1813 = vrot.slane %v1811, 1
        %v1814 = vor.u32 %v1809, %v1813
        %v1844 = vunpack.c.l.b16 %v1773
        %v1845 = vunpack.c.l.b16 %v1774
        %v1846 = vunpack.c.l.b16 %v1775
        %v1847 = vunpack.c.l.b16 %v1776
        %v1848 = vunpack.c.l.b16 %v1777
        %v1849 = vunpack.c.l.b16 %v1778
        %v1850 = vunpack.c.l.b16 %v1779
        %v1851 = vunpack.c.l.b16 %v1780
        %v1852 = vunpack.c.l.b16 %v1781
        %v1853 = vunpack.c.l.b16 %v1782
        %v1854 = vunpack.c.l.b16 %v1783
        %v1855 = vunpack.c.l.b16 %v1784
        %v1856 = vunpack.c.l.b16 %v1785
        %v1857 = vunpack.c.l.b16 %v1786
        %v1858 = vunpack.c.l.b16 %v1787
        %v1859 = vunpack.c.l.b16 %v1788
        %v1860 = vunpack.c.l.b16 %v1789
        %v1861 = vunpack.c.l.b16 %v1790
        %v1862 = vunpack.c.l.b16 %v1791
        %v1863 = vunpack.c.l.b16 %v1792
        %v1864 = vunpack.c.l.b16 %v1793
        %v1865 = vunpack.c.l.b16 %v1794
        %v1866 = vunpack.c.l.b16 %v1795
        %v1867 = vunpack.c.l.b16 %v1796
        %v1868 = vunpack.c.l.b16 %v1797
        %v1869 = vunpack.c.l.b16 %v1798
        %v1870 = vunpack.c.l.b16 %v1799
        %v1871 = vunpack.c.l.b16 %v1800
        %v1872 = vpack.c.b16 %v1845, %v1844
        %v1873 = vpack.c.b16 %v1847, %v1846
        %v1874 = vpack.c.b16 %v1849, %v1848
        %v1875 = vpack.c.b16 %v1851, %v1850
        %v1876 = vpack.c.b16 %v1853, %v1852
        %v1877 = vpack.c.b16 %v1855, %v1854
        %v1878 = vpack.c.b16 %v1857, %v1856
        %v1879 = vpack.c.b16 %v1859, %v1858
        %v1880 = vpack.c.b16 %v1861, %v1860
        %v1881 = vpack.c.b16 %v1863, %v1862
        %v1882 = vpack.c.b16 %v1865, %v1864
        %v1883 = vpack.c.b16 %v1867, %v1866
        %v1884 = vpack.c.b16 %v1869, %v1868
        %v1885 = vpack.c.b16 %v1871, %v1870
        %vm1900 = vcmask 785408
        %v1902 = vsel %vm1900, %v1814, 0
        %1904 = vmatprep.subr.bf16.mxu0 0
        %1905 = vmatpush1.bf16.msra.mxu0 %v1872
        %1906 = vmatprep.subr.bf16.mxu0 0
        %1907 = vmatpush1.bf16.msra.mxu0 %v1873
        %1908 = vmatprep.subr.bf16.mxu0 0
        %1909 = vmatpush1.bf16.msra.mxu0 %v1874
        %1910 = vmatprep.subr.bf16.mxu0 0
        %1911 = vmatpush1.bf16.msra.mxu0 %v1875
        %1912 = vmatprep.subr.bf16.mxu0 0
        %1913 = vmatpush1.bf16.msra.mxu0 %v1876
        %1914 = vmatprep.subr.bf16.mxu0 0
        %1915 = vmatpush1.bf16.msra.mxu0 %v1877
        %1916 = vmatprep.subr.bf16.mxu0 0
        %1917 = vmatpush1.bf16.msra.mxu0 %v1878
        %1918 = vmatprep.subr.bf16.mxu0 0
        %1919 = vmatpush1.bf16.msra.mxu0 %v1879
        %1920 = vmatprep.subr.bf16.mxu0 0
        %1921 = vmatpush1.bf16.msra.mxu0 %v1880
        %1922 = vmatprep.subr.bf16.mxu0 0
        %1923 = vmatpush1.bf16.msra.mxu0 %v1881
        %1924 = vmatprep.subr.bf16.mxu0 0
        %1925 = vmatpush1.bf16.msra.mxu0 %v1882
        %1926 = vmatprep.subr.bf16.mxu0 0
        %1927 = vmatpush1.bf16.msra.mxu0 %v1883
        %1928 = vmatprep.subr.bf16.mxu0 0
        %1929 = vmatpush1.bf16.msra.mxu0 %v1884
        %1930 = vmatprep.subr.bf16.mxu0 0
        %1931 = vmatpush1.bf16.msra.mxu0 %v1885
        %1932 = vmatprep.subr.bf16.mxu0 0
        %1933 = vmatpush1.bf16.msra.mxu0 0
        %1934 = vmatprep.subr.bf16.mxu0 0
        %1935 = vmatpush1.bf16.msra.mxu0 0
        %1936 = vmatprep.mubr.bf16.mxu0 %v1902
        %1937 = vmatmul.mubr.bf16.gmra.mrb[0].mxu0 %v1807
        %v1938 = vpop.f32.mrb[0].mxu0
        %v1939 = vadd.f32 0.0, %v1938
        %v1940 = vpop.f32.mrb[0].mxu0
        %v1941 = vpop.f32.mrb[0].mxu0
        %v1942 = vpop.f32.mrb[0].mxu0
        %1943 = vdwg.mxu0
        %v1972 = vunpack.c.l.b16 %v1744
        %v1973 = vunpack.c.l.b16 %v1745
        %v1974 = vunpack.c.l.b16 %v1746
        %v1975 = vunpack.c.l.b16 %v1747
        %v1976 = vunpack.c.l.b16 %v1748
        %v1977 = vunpack.c.l.b16 %v1749
        %v1978 = vunpack.c.l.b16 %v1750
        %v1979 = vunpack.c.l.b16 %v1751
        %v1980 = vunpack.c.l.b16 %v1752
        %v1981 = vunpack.c.l.b16 %v1753
        %v1982 = vunpack.c.l.b16 %v1754
        %v1983 = vunpack.c.l.b16 %v1755
        %v1984 = vunpack.c.l.b16 %v1756
        %v1985 = vunpack.c.l.b16 %v1757
        %v1986 = vunpack.c.l.b16 %v1758
        %v1987 = vunpack.c.l.b16 %v1759
        %v1988 = vunpack.c.l.b16 %v1760
        %v1989 = vunpack.c.l.b16 %v1761
        %v1990 = vunpack.c.l.b16 %v1762
        %v1991 = vunpack.c.l.b16 %v1763
        %v1992 = vunpack.c.l.b16 %v1764
        %v1993 = vunpack.c.l.b16 %v1765
        %v1994 = vunpack.c.l.b16 %v1766
        %v1995 = vunpack.c.l.b16 %v1767
        %v1996 = vunpack.c.l.b16 %v1768
        %v1997 = vunpack.c.l.b16 %v1769
        %v1998 = vunpack.c.l.b16 %v1770
        %v1999 = vunpack.c.l.b16 %v1771
        %v2000 = vpack.c.b16 %v1973, %v1972
        %v2001 = vpack.c.b16 %v1975, %v1974
        %v2002 = vpack.c.b16 %v1977, %v1976
        %v2003 = vpack.c.b16 %v1979, %v1978
        %v2004 = vpack.c.b16 %v1981, %v1980
        %v2005 = vpack.c.b16 %v1983, %v1982
        %v2006 = vpack.c.b16 %v1985, %v1984
        %v2007 = vpack.c.b16 %v1987, %v1986
        %v2008 = vpack.c.b16 %v1989, %v1988
        %v2009 = vpack.c.b16 %v1991, %v1990
        %v2010 = vpack.c.b16 %v1993, %v1992
        %v2011 = vpack.c.b16 %v1995, %v1994
        %v2012 = vpack.c.b16 %v1997, %v1996
        %v2013 = vpack.c.b16 %v1999, %v1998
        %v2028 = vsel %vm1900, %v1743, 0
        %2030 = vmatprep.subr.bf16.mxu0 0
        %2031 = vmatpush1.bf16.msra.mxu0 %v2000
        %2032 = vmatprep.subr.bf16.mxu0 0
        %2033 = vmatpush1.bf16.msra.mxu0 %v2001
        %2034 = vmatprep.subr.bf16.mxu0 0
        %2035 = vmatpush1.bf16.msra.mxu0 %v2002
        %2036 = vmatprep.subr.bf16.mxu0 0
        %2037 = vmatpush1.bf16.msra.mxu0 %v2003
        %2038 = vmatprep.subr.bf16.mxu0 0
        %2039 = vmatpush1.bf16.msra.mxu0 %v2004
        %2040 = vmatprep.subr.bf16.mxu0 0
        %2041 = vmatpush1.bf16.msra.mxu0 %v2005
        %2042 = vmatprep.subr.bf16.mxu0 0
        %2043 = vmatpush1.bf16.msra.mxu0 %v2006
        %2044 = vmatprep.subr.bf16.mxu0 0
        %2045 = vmatpush1.bf16.msra.mxu0 %v2007
        %2046 = vmatprep.subr.bf16.mxu0 0
        %2047 = vmatpush1.bf16.msra.mxu0 %v2008
        %2048 = vmatprep.subr.bf16.mxu0 0
        %2049 = vmatpush1.bf16.msra.mxu0 %v2009
        %2050 = vmatprep.subr.bf16.mxu0 0
        %2051 = vmatpush1.bf16.msra.mxu0 %v2010
        %2052 = vmatprep.subr.bf16.mxu0 0
        %2053 = vmatpush1.bf16.msra.mxu0 %v2011
        %2054 = vmatprep.subr.bf16.mxu0 0
        %2055 = vmatpush1.bf16.msra.mxu0 %v2012
        %2056 = vmatprep.subr.bf16.mxu0 0
        %2057 = vmatpush1.bf16.msra.mxu0 %v2013
        %2058 = vmatprep.subr.bf16.mxu0 0
        %2059 = vmatpush1.bf16.msra.mxu0 0
        %2060 = vmatprep.subr.bf16.mxu0 0
        %2061 = vmatpush1.bf16.msra.mxu0 0
        %2062 = vmatprep.mubr.bf16.mxu0 %v2028
        %2063 = vmatmul.mubr.bf16.gmra.mrb[0].mxu0 %v1742
        %v2064 = vpop.f32.mrb[0].mxu0
        %v2065 = vadd.f32 %v1939, %v2064
        %v2066 = vpop.f32.mrb[0].mxu0
        %v2067 = vpop.f32.mrb[0].mxu0
        %v2068 = vpop.f32.mrb[0].mxu0
        %2069 = vdwg.mxu0
        %v2070 = vpack.c.bf16 %v1740, %v1738
        %v2071 = vpack.c.bf16 %v1741, %v1739
        %s2072 = scalar_lea.vmem %s5, 224
        %v2073 = vld [vmem:[%s2072] sm:$0xf]
        %v2074 = vld [vmem:[%s2072 + $0x4] sm:$0xf]
        %v2075 = vld [vmem:[%s2072 + $0x8] sm:$0xf]
        %v2076 = vld [vmem:[%s2072 + $0xc] sm:$0xf]
        %v2077 = vld [vmem:[%s2072 + $0x10] sm:$0xf]
        %v2078 = vld [vmem:[%s2072 + $0x14] sm:$0xf]
        %v2079 = vld [vmem:[%s2072 + $0x18] sm:$0xf]
        %v2080 = vld [vmem:[%s2072 + $0x1c] sm:$0xf]
        %v2081 = vld [vmem:[%s2072 + $0x20] sm:$0xf]
        %v2082 = vld [vmem:[%s2072 + $0x24] sm:$0xf]
        %v2083 = vld [vmem:[%s2072 + $0x28] sm:$0xf]
        %v2084 = vld [vmem:[%s2072 + $0x2c] sm:$0xf]
        %v2085 = vld [vmem:[%s2072 + $0x30] sm:$0xf]
        %v2086 = vld [vmem:[%s2072 + $0x34] sm:$0xf]
        %v2087 = vld [vmem:[%s2072 + $0x38] sm:$0xf]
        %v2088 = vld [vmem:[%s2072 + $0x3c] sm:$0xf]
        %v2089 = vld [vmem:[%s2072 + $0x40] sm:$0xf]
        %v2090 = vld [vmem:[%s2072 + $0x44] sm:$0xf]
        %v2091 = vld [vmem:[%s2072 + $0x48] sm:$0xf]
        %v2092 = vld [vmem:[%s2072 + $0x4c] sm:$0xf]
        %v2093 = vld [vmem:[%s2072 + $0x50] sm:$0xf]
        %v2094 = vld [vmem:[%s2072 + $0x54] sm:$0xf]
        %v2095 = vld [vmem:[%s2072 + $0x58] sm:$0xf]
        %v2096 = vld [vmem:[%s2072 + $0x5c] sm:$0xf]
        %v2097 = vld [vmem:[%s2072 + $0x60] sm:$0xf]
        %v2098 = vld [vmem:[%s2072 + $0x64] sm:$0xf]
        %v2099 = vld [vmem:[%s2072 + $0x68] sm:$0xf]
        %v2100 = vld [vmem:[%s2072 + $0x6c] sm:$0xf]
        %v2103 = vrot.slane %v2070, 1
        %v2104 = vrot.slane %v2071, 1
        %v2134 = vunpack.c.l.b16 %v2073
        %v2135 = vunpack.c.l.b16 %v2074
        %v2136 = vunpack.c.l.b16 %v2075
        %v2137 = vunpack.c.l.b16 %v2076
        %v2138 = vunpack.c.l.b16 %v2077
        %v2139 = vunpack.c.l.b16 %v2078
        %v2140 = vunpack.c.l.b16 %v2079
        %v2141 = vunpack.c.l.b16 %v2080
        %v2142 = vunpack.c.l.b16 %v2081
        %v2143 = vunpack.c.l.b16 %v2082
        %v2144 = vunpack.c.l.b16 %v2083
        %v2145 = vunpack.c.l.b16 %v2084
        %v2146 = vunpack.c.l.b16 %v2085
        %v2147 = vunpack.c.l.b16 %v2086
        %v2148 = vunpack.c.l.b16 %v2087
        %v2149 = vunpack.c.l.b16 %v2088
        %v2150 = vunpack.c.l.b16 %v2089
        %v2151 = vunpack.c.l.b16 %v2090
        %v2152 = vunpack.c.l.b16 %v2091
        %v2153 = vunpack.c.l.b16 %v2092
        %v2154 = vunpack.c.l.b16 %v2093
        %v2155 = vunpack.c.l.b16 %v2094
        %v2156 = vunpack.c.l.b16 %v2095
        %v2157 = vunpack.c.l.b16 %v2096
        %v2158 = vunpack.c.l.b16 %v2097
        %v2159 = vunpack.c.l.b16 %v2098
        %v2160 = vunpack.c.l.b16 %v2099
        %v2161 = vunpack.c.l.b16 %v2100
        %v2162 = vpack.c.b16 %v2135, %v2134
        %v2163 = vpack.c.b16 %v2137, %v2136
        %v2164 = vpack.c.b16 %v2139, %v2138
        %v2165 = vpack.c.b16 %v2141, %v2140
        %v2166 = vpack.c.b16 %v2143, %v2142
        %v2167 = vpack.c.b16 %v2145, %v2144
        %v2168 = vpack.c.b16 %v2147, %v2146
        %v2169 = vpack.c.b16 %v2149, %v2148
        %v2170 = vpack.c.b16 %v2151, %v2150
        %v2171 = vpack.c.b16 %v2153, %v2152
        %v2172 = vpack.c.b16 %v2155, %v2154
        %v2173 = vpack.c.b16 %v2157, %v2156
        %v2174 = vpack.c.b16 %v2159, %v2158
        %v2175 = vpack.c.b16 %v2161, %v2160
        %v2191 = vsel %vm1900, %v2104, 0
        %2193 = vmatprep.subr.bf16.mxu0 0
        %2194 = vmatpush1.bf16.msra.mxu0 %v2162
        %2195 = vmatprep.subr.bf16.mxu0 0
        %2196 = vmatpush1.bf16.msra.mxu0 %v2163
        %2197 = vmatprep.subr.bf16.mxu0 0
        %2198 = vmatpush1.bf16.msra.mxu0 %v2164
        %2199 = vmatprep.subr.bf16.mxu0 0
        %2200 = vmatpush1.bf16.msra.mxu0 %v2165
        %2201 = vmatprep.subr.bf16.mxu0 0
        %2202 = vmatpush1.bf16.msra.mxu0 %v2166
        %2203 = vmatprep.subr.bf16.mxu0 0
        %2204 = vmatpush1.bf16.msra.mxu0 %v2167
        %2205 = vmatprep.subr.bf16.mxu0 0
        %2206 = vmatpush1.bf16.msra.mxu0 %v2168
        %2207 = vmatprep.subr.bf16.mxu0 0
        %2208 = vmatpush1.bf16.msra.mxu0 %v2169
        %2209 = vmatprep.subr.bf16.mxu0 0
        %2210 = vmatpush1.bf16.msra.mxu0 %v2170
        %2211 = vmatprep.subr.bf16.mxu0 0
        %2212 = vmatpush1.bf16.msra.mxu0 %v2171
        %2213 = vmatprep.subr.bf16.mxu0 0
        %2214 = vmatpush1.bf16.msra.mxu0 %v2172
        %2215 = vmatprep.subr.bf16.mxu0 0
        %2216 = vmatpush1.bf16.msra.mxu0 %v2173
        %2217 = vmatprep.subr.bf16.mxu0 0
        %2218 = vmatpush1.bf16.msra.mxu0 %v2174
        %2219 = vmatprep.subr.bf16.mxu0 0
        %2220 = vmatpush1.bf16.msra.mxu0 %v2175
        %2221 = vmatprep.subr.bf16.mxu0 0
        %2222 = vmatpush1.bf16.msra.mxu0 0
        %2223 = vmatprep.subr.bf16.mxu0 0
        %2224 = vmatpush1.bf16.msra.mxu0 0
        %2225 = vmatprep.mubr.bf16.mxu0 %v2191
        %2226 = vmatmul.mubr.bf16.gmra.mrb[0].mxu0 %v2103
        %v2227 = vpop.f32.mrb[0].mxu0
        %v2228 = vadd.f32 0.0, %v2227
        %v2229 = vpop.f32.mrb[0].mxu0
        %v2230 = vpop.f32.mrb[0].mxu0
        %v2231 = vpop.f32.mrb[0].mxu0
        %2232 = vdwg.mxu0
        %v2233 = vadd.f32 %v2065, %v2228
        %s2234 = scalar_lea.vmem %s5, 336
        %v2235 = vld [vmem:[%s2234] sm:$0xf]
        %v2236 = vld [vmem:[%s2234 + $0x4] sm:$0xf]
        %v2237 = vld [vmem:[%s2234 + $0x8] sm:$0xf]
        %v2238 = vld [vmem:[%s2234 + $0xc] sm:$0xf]
        %v2239 = vld [vmem:[%s2234 + $0x10] sm:$0xf]
        %v2240 = vld [vmem:[%s2234 + $0x14] sm:$0xf]
        %v2241 = vld [vmem:[%s2234 + $0x18] sm:$0xf]
        %v2242 = vld [vmem:[%s2234 + $0x1c] sm:$0xf]
        %v2243 = vld [vmem:[%s2234 + $0x20] sm:$0xf]
        %v2244 = vld [vmem:[%s2234 + $0x24] sm:$0xf]
        %v2245 = vld [vmem:[%s2234 + $0x28] sm:$0xf]
        %v2246 = vld [vmem:[%s2234 + $0x2c] sm:$0xf]
        %v2247 = vld [vmem:[%s2234 + $0x30] sm:$0xf]
        %v2248 = vld [vmem:[%s2234 + $0x34] sm:$0xf]
        %v2249 = vld [vmem:[%s2234 + $0x38] sm:$0xf]
        %v2250 = vld [vmem:[%s2234 + $0x3c] sm:$0xf]
        %v2251 = vld [vmem:[%s2234 + $0x40] sm:$0xf]
        %v2252 = vld [vmem:[%s2234 + $0x44] sm:$0xf]
        %v2253 = vld [vmem:[%s2234 + $0x48] sm:$0xf]
        %v2254 = vld [vmem:[%s2234 + $0x4c] sm:$0xf]
        %v2255 = vld [vmem:[%s2234 + $0x50] sm:$0xf]
        %v2256 = vld [vmem:[%s2234 + $0x54] sm:$0xf]
        %v2257 = vld [vmem:[%s2234 + $0x58] sm:$0xf]
        %v2258 = vld [vmem:[%s2234 + $0x5c] sm:$0xf]
        %v2259 = vld [vmem:[%s2234 + $0x60] sm:$0xf]
        %v2260 = vld [vmem:[%s2234 + $0x64] sm:$0xf]
        %v2261 = vld [vmem:[%s2234 + $0x68] sm:$0xf]
        %v2262 = vld [vmem:[%s2234 + $0x6c] sm:$0xf]
        %v2264 = vshrl.u32 %v2070, 16
        %v2266 = vrot.slane %v2264, 1
        %v2267 = vshll.u32 %v2070, 16
        %v2269 = vrot.slane %v2267, 2
        %v2270 = vor.u32 %v2266, %v2269
        %v2272 = vshrl.u32 %v2071, 16
        %v2274 = vrot.slane %v2272, 1
        %v2275 = vshll.u32 %v2071, 16
        %v2277 = vrot.slane %v2275, 2
        %v2278 = vor.u32 %v2274, %v2277
        %v2308 = vunpack.c.l.b16 %v2235
        %v2309 = vunpack.c.l.b16 %v2236
        %v2310 = vunpack.c.l.b16 %v2237
        %v2311 = vunpack.c.l.b16 %v2238
        %v2312 = vunpack.c.l.b16 %v2239
        %v2313 = vunpack.c.l.b16 %v2240
        %v2314 = vunpack.c.l.b16 %v2241
        %v2315 = vunpack.c.l.b16 %v2242
        %v2316 = vunpack.c.l.b16 %v2243
        %v2317 = vunpack.c.l.b16 %v2244
        %v2318 = vunpack.c.l.b16 %v2245
        %v2319 = vunpack.c.l.b16 %v2246
        %v2320 = vunpack.c.l.b16 %v2247
        %v2321 = vunpack.c.l.b16 %v2248
        %v2322 = vunpack.c.l.b16 %v2249
        %v2323 = vunpack.c.l.b16 %v2250
        %v2324 = vunpack.c.l.b16 %v2251
        %v2325 = vunpack.c.l.b16 %v2252
        %v2326 = vunpack.c.l.b16 %v2253
        %v2327 = vunpack.c.l.b16 %v2254
        %v2328 = vunpack.c.l.b16 %v2255
        %v2329 = vunpack.c.l.b16 %v2256
        %v2330 = vunpack.c.l.b16 %v2257
        %v2331 = vunpack.c.l.b16 %v2258
        %v2332 = vunpack.c.l.b16 %v2259
        %v2333 = vunpack.c.l.b16 %v2260
        %v2334 = vunpack.c.l.b16 %v2261
        %v2335 = vunpack.c.l.b16 %v2262
        %v2336 = vpack.c.b16 %v2309, %v2308
        %v2337 = vpack.c.b16 %v2311, %v2310
        %v2338 = vpack.c.b16 %v2313, %v2312
        %v2339 = vpack.c.b16 %v2315, %v2314
        %v2340 = vpack.c.b16 %v2317, %v2316
        %v2341 = vpack.c.b16 %v2319, %v2318
        %v2342 = vpack.c.b16 %v2321, %v2320
        %v2343 = vpack.c.b16 %v2323, %v2322
        %v2344 = vpack.c.b16 %v2325, %v2324
        %v2345 = vpack.c.b16 %v2327, %v2326
        %v2346 = vpack.c.b16 %v2329, %v2328
        %v2347 = vpack.c.b16 %v2331, %v2330
        %v2348 = vpack.c.b16 %v2333, %v2332
        %v2349 = vpack.c.b16 %v2335, %v2334
        %v2365 = vsel %vm1900, %v2278, 0
        %2367 = vmatprep.subr.bf16.mxu0 0
        %2368 = vmatpush1.bf16.msra.mxu0 %v2336
        %2369 = vmatprep.subr.bf16.mxu0 0
        %2370 = vmatpush1.bf16.msra.mxu0 %v2337
        %2371 = vmatprep.subr.bf16.mxu0 0
        %2372 = vmatpush1.bf16.msra.mxu0 %v2338
        %2373 = vmatprep.subr.bf16.mxu0 0
        %2374 = vmatpush1.bf16.msra.mxu0 %v2339
        %2375 = vmatprep.subr.bf16.mxu0 0
        %2376 = vmatpush1.bf16.msra.mxu0 %v2340
        %2377 = vmatprep.subr.bf16.mxu0 0
        %2378 = vmatpush1.bf16.msra.mxu0 %v2341
        %2379 = vmatprep.subr.bf16.mxu0 0
        %2380 = vmatpush1.bf16.msra.mxu0 %v2342
        %2381 = vmatprep.subr.bf16.mxu0 0
        %2382 = vmatpush1.bf16.msra.mxu0 %v2343
        %2383 = vmatprep.subr.bf16.mxu0 0
        %2384 = vmatpush1.bf16.msra.mxu0 %v2344
        %2385 = vmatprep.subr.bf16.mxu0 0
        %2386 = vmatpush1.bf16.msra.mxu0 %v2345
        %2387 = vmatprep.subr.bf16.mxu0 0
        %2388 = vmatpush1.bf16.msra.mxu0 %v2346
        %2389 = vmatprep.subr.bf16.mxu0 0
        %2390 = vmatpush1.bf16.msra.mxu0 %v2347
        %2391 = vmatprep.subr.bf16.mxu0 0
        %2392 = vmatpush1.bf16.msra.mxu0 %v2348
        %2393 = vmatprep.subr.bf16.mxu0 0
        %2394 = vmatpush1.bf16.msra.mxu0 %v2349
        %2395 = vmatprep.subr.bf16.mxu0 0
        %2396 = vmatpush1.bf16.msra.mxu0 0
        %2397 = vmatprep.subr.bf16.mxu0 0
        %2398 = vmatpush1.bf16.msra.mxu0 0
        %2399 = vmatprep.mubr.bf16.mxu0 %v2365
        %2400 = vmatmul.mubr.bf16.gmra.mrb[0].mxu0 %v2270
        %v2401 = vpop.f32.mrb[0].mxu0
        %v2402 = vadd.f32 0.0, %v2401
        %v2403 = vpop.f32.mrb[0].mxu0
        %v2404 = vpop.f32.mrb[0].mxu0
        %v2405 = vpop.f32.mrb[0].mxu0
        %2406 = vdwg.mxu0
        %v2407 = vadd.f32 %v2233, %v2402
        %s2408 = scalar_lea.vmem %s5, 448
        %v2409 = vld [vmem:[%s2408] sm:$0xf]
        %v2410 = vld [vmem:[%s2408 + $0x4] sm:$0xf]
        %v2411 = vld [vmem:[%s2408 + $0x8] sm:$0xf]
        %v2412 = vld [vmem:[%s2408 + $0xc] sm:$0xf]
        %v2413 = vld [vmem:[%s2408 + $0x10] sm:$0xf]
        %v2414 = vld [vmem:[%s2408 + $0x14] sm:$0xf]
        %v2415 = vld [vmem:[%s2408 + $0x18] sm:$0xf]
        %v2416 = vld [vmem:[%s2408 + $0x1c] sm:$0xf]
        %v2417 = vld [vmem:[%s2408 + $0x20] sm:$0xf]
        %v2418 = vld [vmem:[%s2408 + $0x24] sm:$0xf]
        %v2419 = vld [vmem:[%s2408 + $0x28] sm:$0xf]
        %v2420 = vld [vmem:[%s2408 + $0x2c] sm:$0xf]
        %v2421 = vld [vmem:[%s2408 + $0x30] sm:$0xf]
        %v2422 = vld [vmem:[%s2408 + $0x34] sm:$0xf]
        %v2423 = vld [vmem:[%s2408 + $0x38] sm:$0xf]
        %v2424 = vld [vmem:[%s2408 + $0x3c] sm:$0xf]
        %v2425 = vld [vmem:[%s2408 + $0x40] sm:$0xf]
        %v2426 = vld [vmem:[%s2408 + $0x44] sm:$0xf]
        %v2427 = vld [vmem:[%s2408 + $0x48] sm:$0xf]
        %v2428 = vld [vmem:[%s2408 + $0x4c] sm:$0xf]
        %v2429 = vld [vmem:[%s2408 + $0x50] sm:$0xf]
        %v2430 = vld [vmem:[%s2408 + $0x54] sm:$0xf]
        %v2431 = vld [vmem:[%s2408 + $0x58] sm:$0xf]
        %v2432 = vld [vmem:[%s2408 + $0x5c] sm:$0xf]
        %v2433 = vld [vmem:[%s2408 + $0x60] sm:$0xf]
        %v2434 = vld [vmem:[%s2408 + $0x64] sm:$0xf]
        %v2435 = vld [vmem:[%s2408 + $0x68] sm:$0xf]
        %v2436 = vld [vmem:[%s2408 + $0x6c] sm:$0xf]
        %v2437 = vrot.slane %v2070, 2
        %v2438 = vrot.slane %v2071, 2
        %v2468 = vunpack.c.l.b16 %v2409
        %v2469 = vunpack.c.l.b16 %v2410
        %v2470 = vunpack.c.l.b16 %v2411
        %v2471 = vunpack.c.l.b16 %v2412
        %v2472 = vunpack.c.l.b16 %v2413
        %v2473 = vunpack.c.l.b16 %v2414
        %v2474 = vunpack.c.l.b16 %v2415
        %v2475 = vunpack.c.l.b16 %v2416
        %v2476 = vunpack.c.l.b16 %v2417
        %v2477 = vunpack.c.l.b16 %v2418
        %v2478 = vunpack.c.l.b16 %v2419
        %v2479 = vunpack.c.l.b16 %v2420
        %v2480 = vunpack.c.l.b16 %v2421
        %v2481 = vunpack.c.l.b16 %v2422
        %v2482 = vunpack.c.l.b16 %v2423
        %v2483 = vunpack.c.l.b16 %v2424
        %v2484 = vunpack.c.l.b16 %v2425
        %v2485 = vunpack.c.l.b16 %v2426
        %v2486 = vunpack.c.l.b16 %v2427
        %v2487 = vunpack.c.l.b16 %v2428
        %v2488 = vunpack.c.l.b16 %v2429
        %v2489 = vunpack.c.l.b16 %v2430
        %v2490 = vunpack.c.l.b16 %v2431
        %v2491 = vunpack.c.l.b16 %v2432
        %v2492 = vunpack.c.l.b16 %v2433
        %v2493 = vunpack.c.l.b16 %v2434
        %v2494 = vunpack.c.l.b16 %v2435
        %v2495 = vunpack.c.l.b16 %v2436
        %v2496 = vpack.c.b16 %v2469, %v2468
        %v2497 = vpack.c.b16 %v2471, %v2470
        %v2498 = vpack.c.b16 %v2473, %v2472
        %v2499 = vpack.c.b16 %v2475, %v2474
        %v2500 = vpack.c.b16 %v2477, %v2476
        %v2501 = vpack.c.b16 %v2479, %v2478
        %v2502 = vpack.c.b16 %v2481, %v2480
        %v2503 = vpack.c.b16 %v2483, %v2482
        %v2504 = vpack.c.b16 %v2485, %v2484
        %v2505 = vpack.c.b16 %v2487, %v2486
        %v2506 = vpack.c.b16 %v2489, %v2488
        %v2507 = vpack.c.b16 %v2491, %v2490
        %v2508 = vpack.c.b16 %v2493, %v2492
        %v2509 = vpack.c.b16 %v2495, %v2494
        %v2525 = vsel %vm1900, %v2438, 0
        %2527 = vmatprep.subr.bf16.mxu0 0
        %2528 = vmatpush1.bf16.msra.mxu0 %v2496
        %2529 = vmatprep.subr.bf16.mxu0 0
        %2530 = vmatpush1.bf16.msra.mxu0 %v2497
        %2531 = vmatprep.subr.bf16.mxu0 0
        %2532 = vmatpush1.bf16.msra.mxu0 %v2498
        %2533 = vmatprep.subr.bf16.mxu0 0
        %2534 = vmatpush1.bf16.msra.mxu0 %v2499
        %2535 = vmatprep.subr.bf16.mxu0 0
        %2536 = vmatpush1.bf16.msra.mxu0 %v2500
        %2537 = vmatprep.subr.bf16.mxu0 0
        %2538 = vmatpush1.bf16.msra.mxu0 %v2501
        %2539 = vmatprep.subr.bf16.mxu0 0
        %2540 = vmatpush1.bf16.msra.mxu0 %v2502
        %2541 = vmatprep.subr.bf16.mxu0 0
        %2542 = vmatpush1.bf16.msra.mxu0 %v2503
        %2543 = vmatprep.subr.bf16.mxu0 0
        %2544 = vmatpush1.bf16.msra.mxu0 %v2504
        %2545 = vmatprep.subr.bf16.mxu0 0
        %2546 = vmatpush1.bf16.msra.mxu0 %v2505
        %2547 = vmatprep.subr.bf16.mxu0 0
        %2548 = vmatpush1.bf16.msra.mxu0 %v2506
        %2549 = vmatprep.subr.bf16.mxu0 0
        %2550 = vmatpush1.bf16.msra.mxu0 %v2507
        %2551 = vmatprep.subr.bf16.mxu0 0
        %2552 = vmatpush1.bf16.msra.mxu0 %v2508
        %2553 = vmatprep.subr.bf16.mxu0 0
        %2554 = vmatpush1.bf16.msra.mxu0 %v2509
        %2555 = vmatprep.subr.bf16.mxu0 0
        %2556 = vmatpush1.bf16.msra.mxu0 0
        %2557 = vmatprep.subr.bf16.mxu0 0
        %2558 = vmatpush1.bf16.msra.mxu0 0
        %2559 = vmatprep.mubr.bf16.mxu0 %v2525
        %2560 = vmatmul.mubr.bf16.gmra.mrb[0].mxu0 %v2437
        %v2561 = vpop.f32.mrb[0].mxu0
        %v2562 = vadd.f32 0.0, %v2561
        %v2563 = vpop.f32.mrb[0].mxu0
        %v2564 = vpop.f32.mrb[0].mxu0
        %v2565 = vpop.f32.mrb[0].mxu0
        %2566 = vdwg.mxu0
        %v2567 = vadd.f32 %v2407, %v2562
        %v2568 = vld [vmem:[%s6] sm:$0x1]
        %v2569 = vld [vmem:[%s6 + $0x1] sm:$0x1]
        %v2570 = vld [vmem:[%s6 + $0x2] sm:$0x1]
        %v2571 = vlaneseq
        %v2572 = vshrl.u32 %v2571, 7
        %v2573 = vsub.s32 0, %v2572
        %v2574 = vrot.slane %v2568, %v2573
        %v2575 = vadd.f32 %v2567, %v2574
        %v2576 = vmax.f32 %v2575, 0.0
        %v2577 = vlaneseq
        %v2578 = vshrl.u32 %v2577, 7
        %v2579 = vsub.s32 0, %v2578
        %v2580 = vrot.slane %v2569, %v2579
        %v2581 = vmul.f32 %v2576, %v2580
        %v2582 = vlaneseq
        %v2583 = vshrl.u32 %v2582, 7
        %v2584 = vsub.s32 0, %v2583
        %v2585 = vrot.slane %v2570, %v2584
        %v2586 = vadd.f32 %v2581, %v2585
        %2588 = vrot.lane.b32.xlu0 %v2586, 112
        %v2589 = vpop.permute.xlu0 %2588
        %v2591 = vmax.f32 %v2586, %v2589
        %v2593 = vrot.slane %v2591, 1
        %v2595 = vmax.f32 %v2591, %v2593
        %vm2596 = vcmask 48128
        %v2597 = vsel %vm2596, %v735, 0
        %v2600 = vsel %vm474, %v2595, 0
        %2602 = vmatprep.subr.mxu0 0.0
        %2603 = vmatpush1.msra.mxu0 %v2600
        %2604 = vmatprep.subr.mxu0 0.0
        %2605 = vmatpush1.msra.mxu0 0.0
        %2606 = vmatprep.subr.mxu0 0.0
        %2607 = vmatpush1.msra.mxu0 0.0
        %2608 = vmatprep.subr.mxu0 0.0
        %2609 = vmatpush1.msra.mxu0 0.0
        %2610 = vmatprep.subr.mxu0 0.0
        %2611 = vmatpush1.msra.mxu0 0.0
        %2612 = vmatprep.subr.mxu0 0.0
        %2613 = vmatpush1.msra.mxu0 0.0
        %2614 = vmatprep.subr.mxu0 0.0
        %2615 = vmatpush1.msra.mxu0 0.0
        %2616 = vmatprep.subr.mxu0 0.0
        %2617 = vmatpush1.msra.mxu0 0.0
        %2618 = vmatprep.subr.mxu0 0.0
        %2619 = vmatpush1.msra.mxu0 0.0
        %2620 = vmatprep.subr.mxu0 0.0
        %2621 = vmatpush1.msra.mxu0 0.0
        %2622 = vmatprep.subr.mxu0 0.0
        %2623 = vmatpush1.msra.mxu0 0.0
        %2624 = vmatprep.subr.mxu0 0.0
        %2625 = vmatpush1.msra.mxu0 0.0
        %2626 = vmatprep.subr.mxu0 0.0
        %2627 = vmatpush1.msra.mxu0 0.0
        %2628 = vmatprep.subr.mxu0 0.0
        %2629 = vmatpush1.msra.mxu0 0.0
        %2630 = vmatprep.subr.mxu0 0.0
        %2631 = vmatpush1.msra.mxu0 0.0
        %2632 = vmatprep.subr.mxu0 0.0
        %2633 = vmatpush1.msra.mxu0 0.0
        %2634 = vmatprep.subr.mxu0 0.0
        %2635 = vmatpush1.msra.mxu0 0.0
        %2636 = vmatprep.subr.mxu0 0.0
        %2637 = vmatpush1.msra.mxu0 0.0
        %2638 = vmatprep.subr.mxu0 0.0
        %2639 = vmatpush1.msra.mxu0 0.0
        %2640 = vmatprep.subr.mxu0 0.0
        %2641 = vmatpush1.msra.mxu0 0.0
        %2642 = vmatprep.subr.mxu0 0.0
        %2643 = vmatpush1.msra.mxu0 0.0
        %2644 = vmatprep.subr.mxu0 0.0
        %2645 = vmatpush1.msra.mxu0 0.0
        %2646 = vmatprep.subr.mxu0 0.0
        %2647 = vmatpush1.msra.mxu0 0.0
        %2648 = vmatprep.subr.mxu0 0.0
        %2649 = vmatpush1.msra.mxu0 0.0
        %2650 = vmatprep.subr.mxu0 0.0
        %2651 = vmatpush1.msra.mxu0 0.0
        %2652 = vmatprep.subr.mxu0 0.0
        %2653 = vmatpush1.msra.mxu0 0.0
        %2654 = vmatprep.subr.mxu0 0.0
        %2655 = vmatpush1.msra.mxu0 0.0
        %2656 = vmatprep.subr.mxu0 0.0
        %2657 = vmatpush1.msra.mxu0 0.0
        %2658 = vmatprep.subr.mxu0 0.0
        %2659 = vmatpush1.msra.mxu0 0.0
        %2660 = vmatprep.subr.mxu0 0.0
        %2661 = vmatpush1.msra.mxu0 0.0
        %2662 = vmatprep.subr.mxu0 0.0
        %2663 = vmatpush1.msra.mxu0 0.0
        %2664 = vmatprep.subr.mxu0 0.0
        %2665 = vmatpush1.msra.mxu0 0.0
        %2666 = vmatprep.mubr.f32.mxu0 0.0
        %2667 = vmatmul.mubr.f32.gmra.mrb[0].mxu0 %v2597
        %v2668 = vpop.f32.mrb[0].mxu0
        %v2669 = vadd.f32 0.0, %v2668
        %v2670 = vpop.f32.mrb[0].mxu0
        %2671 = vdwg.mxu0
        %v2672 = vpack.c.bf16 %v2669, %v2669
        %v2673 = vld [vmem:[%s7] sm:$0xff]
        %v2674 = vld [vmem:[%s7 + $0x8] sm:$0xff]
        %v2675 = vld [vmem:[%s7 + $0x10] sm:$0xff]
        %v2676 = vld [vmem:[%s7 + $0x18] sm:$0xff]
        %v2677 = vld [vmem:[%s7 + $0x20] sm:$0xff]
        %v2678 = vld [vmem:[%s7 + $0x28] sm:$0xff]
        %v2679 = vld [vmem:[%s7 + $0x30] sm:$0xff]
        %v2680 = vld [vmem:[%s7 + $0x38] sm:$0xff]
        %v2681 = vld [vmem:[%s7 + $0x40] sm:$0xff]
        %v2682 = vld [vmem:[%s7 + $0x48] sm:$0xff]
        %v2683 = vld [vmem:[%s7 + $0x50] sm:$0xff]
        %v2684 = vld [vmem:[%s7 + $0x58] sm:$0xff]
        %v2697 = vunpack.c.l.b16 %v2673
        %v2698 = vunpack.c.h.b16 %v2673
        %v2699 = vunpack.c.l.b16 %v2674
        %v2700 = vunpack.c.h.b16 %v2674
        %v2701 = vunpack.c.l.b16 %v2675
        %v2702 = vunpack.c.h.b16 %v2675
        %v2703 = vunpack.c.l.b16 %v2676
        %v2704 = vunpack.c.h.b16 %v2676
        %v2705 = vunpack.c.l.b16 %v2677
        %v2706 = vunpack.c.h.b16 %v2677
        %v2707 = vunpack.c.l.b16 %v2678
        %v2708 = vunpack.c.h.b16 %v2678
        %v2709 = vunpack.c.l.b16 %v2679
        %v2710 = vunpack.c.h.b16 %v2679
        %v2711 = vunpack.c.l.b16 %v2680
        %v2712 = vunpack.c.h.b16 %v2680
        %v2713 = vunpack.c.l.b16 %v2681
        %v2714 = vunpack.c.h.b16 %v2681
        %v2715 = vunpack.c.l.b16 %v2682
        %v2716 = vunpack.c.h.b16 %v2682
        %v2717 = vunpack.c.l.b16 %v2683
        %v2718 = vunpack.c.h.b16 %v2683
        %v2719 = vunpack.c.l.b16 %v2684
        %v2720 = vunpack.c.h.b16 %v2684
        %v2721 = vpack.c.b16 %v2699, %v2697
        %v2722 = vpack.c.b16 %v2700, %v2698
        %v2723 = vpack.c.b16 %v2703, %v2701
        %v2724 = vpack.c.b16 %v2704, %v2702
        %v2725 = vpack.c.b16 %v2707, %v2705
        %v2726 = vpack.c.b16 %v2708, %v2706
        %v2727 = vpack.c.b16 %v2711, %v2709
        %v2728 = vpack.c.b16 %v2712, %v2710
        %v2729 = vpack.c.b16 %v2715, %v2713
        %v2730 = vpack.c.b16 %v2716, %v2714
        %v2731 = vpack.c.b16 %v2719, %v2717
        %v2732 = vpack.c.b16 %v2720, %v2718
        %v2746 = vsel %vm1900, %v2672, 0
        %2748 = vmatprep.subr.bf16.mxu0 %v2722
        %2749 = vmatpush1.bf16.msra.mxu0 %v2721
        %2750 = vmatprep.subr.bf16.mxu0 %v2724
        %2751 = vmatpush1.bf16.msra.mxu0 %v2723
        %2752 = vmatprep.subr.bf16.mxu0 %v2726
        %2753 = vmatpush1.bf16.msra.mxu0 %v2725
        %2754 = vmatprep.subr.bf16.mxu0 %v2728
        %2755 = vmatpush1.bf16.msra.mxu0 %v2727
        %2756 = vmatprep.subr.bf16.mxu0 %v2730
        %2757 = vmatpush1.bf16.msra.mxu0 %v2729
        %2758 = vmatprep.subr.bf16.mxu0 %v2732
        %2759 = vmatpush1.bf16.msra.mxu0 %v2731
        %2760 = vmatprep.subr.bf16.mxu0 0
        %2761 = vmatpush1.bf16.msra.mxu0 0
        %2762 = vmatprep.subr.bf16.mxu0 0
        %2763 = vmatpush1.bf16.msra.mxu0 0
        %2764 = vmatprep.subr.bf16.mxu0 0
        %2765 = vmatpush1.bf16.msra.mxu0 0
        %2766 = vmatprep.subr.bf16.mxu0 0
        %2767 = vmatpush1.bf16.msra.mxu0 0
        %2768 = vmatprep.subr.bf16.mxu0 0
        %2769 = vmatpush1.bf16.msra.mxu0 0
        %2770 = vmatprep.subr.bf16.mxu0 0
        %2771 = vmatpush1.bf16.msra.mxu0 0
        %2772 = vmatprep.subr.bf16.mxu0 0
        %2773 = vmatpush1.bf16.msra.mxu0 0
        %2774 = vmatprep.subr.bf16.mxu0 0
        %2775 = vmatpush1.bf16.msra.mxu0 0
        %2776 = vmatprep.subr.bf16.mxu0 0
        %2777 = vmatpush1.bf16.msra.mxu0 0
        %2778 = vmatprep.subr.bf16.mxu0 0
        %2779 = vmatpush1.bf16.msra.mxu0 0
        %2780 = vmatprep.mubr.bf16.mxu0 0
        %2781 = vmatmul.mubr.bf16.gmra.mrb[0].mxu0 %v2746
        %v2782 = vpop.f32.mrb[0].mxu0
        %v2783 = vadd.f32 0.0, %v2782
        %v2784 = vpop.f32.mrb[0].mxu0
        %v2785 = vadd.f32 0.0, %v2784
        %v2786 = vpop.f32.mrb[0].mxu0
        %v2787 = vpop.f32.mrb[0].mxu0
        %2788 = vdwg.mxu0
        %v2790 = vrot.slane %v2783, 1
        %2791 = vrot.lane.b32.xlu0 %v2790, 64
        %v2792 = vpop.permute.xlu0 %2791
        %v2794 = vadd.f32 %v2783, %v2792
        %v2796 = vrot.slane %v2785, 2
        %v2798 = vadd.f32 %v2794, %v2796
        %v2799 = vld [vmem:[%s8] sm:$0x1]
        %v2800 = vadd.f32 %v2798, %v2799
        %v2801 = vmax.f32 %v2800, 0.0
        %v2802 = vpack.c.bf16 %v2801, %v2801
        %v2803 = vld [vmem:[%s9] sm:$0xf]
        %v2804 = vld [vmem:[%s9 + $0x4] sm:$0xf]
        %v2805 = vld [vmem:[%s9 + $0x8] sm:$0xf]
        %v2806 = vld [vmem:[%s9 + $0xc] sm:$0xf]
        %v2807 = vld [vmem:[%s9 + $0x10] sm:$0xf]
        %v2808 = vld [vmem:[%s9 + $0x14] sm:$0xf]
        %v2809 = vld [vmem:[%s9 + $0x18] sm:$0xf]
        %v2810 = vld [vmem:[%s9 + $0x1c] sm:$0xf]
        %v2811 = vld [vmem:[%s10] sm:$0x1]
        %v2820 = vunpack.c.l.b16 %v2803
        %v2821 = vunpack.c.l.b16 %v2804
        %v2822 = vunpack.c.l.b16 %v2805
        %v2823 = vunpack.c.l.b16 %v2806
        %v2824 = vunpack.c.l.b16 %v2807
        %v2825 = vunpack.c.l.b16 %v2808
        %v2826 = vunpack.c.l.b16 %v2809
        %v2827 = vunpack.c.l.b16 %v2810
        %v2828 = vpack.c.b16 %v2821, %v2820
        %v2829 = vpack.c.b16 %v2823, %v2822
        %v2830 = vpack.c.b16 %v2825, %v2824
        %v2831 = vpack.c.b16 %v2827, %v2826
        %vm2836 = vcmask 523264
        %v2838 = vsel %vm2836, %v2802, 0
        %2840 = vmatprep.subr.bf16.mxu0 0
        %2841 = vmatpush1.bf16.msra.mxu0 %v2828
        %2842 = vmatprep.subr.bf16.mxu0 0
        %2843 = vmatpush1.bf16.msra.mxu0 %v2829
        %2844 = vmatprep.subr.bf16.mxu0 0
        %2845 = vmatpush1.bf16.msra.mxu0 %v2830
        %2846 = vmatprep.subr.bf16.mxu0 0
        %2847 = vmatpush1.bf16.msra.mxu0 %v2831
        %2848 = vmatprep.subr.bf16.mxu0 0
        %2849 = vmatpush1.bf16.msra.mxu0 0
        %2850 = vmatprep.subr.bf16.mxu0 0
        %2851 = vmatpush1.bf16.msra.mxu0 0
        %2852 = vmatprep.subr.bf16.mxu0 0
        %2853 = vmatpush1.bf16.msra.mxu0 0
        %2854 = vmatprep.subr.bf16.mxu0 0
        %2855 = vmatpush1.bf16.msra.mxu0 0
        %2856 = vmatprep.subr.bf16.mxu0 0
        %2857 = vmatpush1.bf16.msra.mxu0 0
        %2858 = vmatprep.subr.bf16.mxu0 0
        %2859 = vmatpush1.bf16.msra.mxu0 0
        %2860 = vmatprep.subr.bf16.mxu0 0
        %2861 = vmatpush1.bf16.msra.mxu0 0
        %2862 = vmatprep.subr.bf16.mxu0 0
        %2863 = vmatpush1.bf16.msra.mxu0 0
        %2864 = vmatprep.subr.bf16.mxu0 0
        %2865 = vmatpush1.bf16.msra.mxu0 0
        %2866 = vmatprep.subr.bf16.mxu0 0
        %2867 = vmatpush1.bf16.msra.mxu0 0
        %2868 = vmatprep.subr.bf16.mxu0 0
        %2869 = vmatpush1.bf16.msra.mxu0 0
        %2870 = vmatprep.subr.bf16.mxu0 0
        %2871 = vmatpush1.bf16.msra.mxu0 0
        %2872 = vmatprep.mubr.bf16.mxu0 0
        %2873 = vmatmul.mubr.bf16.gmra.mrb[0].mxu0 %v2838
        %v2874 = vpop.f32.mrb[0].mxu0
        %v2875 = vadd.f32 %v2811, %v2874
        %v2876 = vpop.f32.mrb[0].mxu0
        %v2877 = vpop.f32.mrb[0].mxu0
        %v2878 = vpop.f32.mrb[0].mxu0
        %2879 = vdwg.mxu0
        %v2880 = vmax.f32 %v2875, 0.0
        %v2881 = vpack.c.bf16 %v2880, %v2880
        %v2882 = vld [vmem:[%s11] sm:$0xf]
        %v2883 = vld [vmem:[%s11 + $0x4] sm:$0xf]
        %v2884 = vld [vmem:[%s11 + $0x8] sm:$0xf]
        %v2885 = vld [vmem:[%s11 + $0xc] sm:$0xf]
        %v2886 = vld [vmem:[%s11 + $0x10] sm:$0xf]
        %v2887 = vld [vmem:[%s11 + $0x14] sm:$0xf]
        %v2888 = vld [vmem:[%s11 + $0x18] sm:$0xf]
        %v2889 = vld [vmem:[%s11 + $0x1c] sm:$0xf]
        %v2890 = vld [vmem:[%s12] sm:$0x1]
        %v2899 = vunpack.c.l.b16 %v2882
        %v2900 = vunpack.c.l.b16 %v2883
        %v2901 = vunpack.c.l.b16 %v2884
        %v2902 = vunpack.c.l.b16 %v2885
        %v2903 = vunpack.c.l.b16 %v2886
        %v2904 = vunpack.c.l.b16 %v2887
        %v2905 = vunpack.c.l.b16 %v2888
        %v2906 = vunpack.c.l.b16 %v2889
        %v2907 = vpack.c.b16 %v2900, %v2899
        %v2908 = vpack.c.b16 %v2902, %v2901
        %v2909 = vpack.c.b16 %v2904, %v2903
        %v2910 = vpack.c.b16 %v2906, %v2905
        %v2916 = vsel %vm2836, %v2881, 0
        %2918 = vmatprep.subr.bf16.mxu0 0
        %2919 = vmatpush1.bf16.msra.mxu0 %v2907
        %2920 = vmatprep.subr.bf16.mxu0 0
        %2921 = vmatpush1.bf16.msra.mxu0 %v2908
        %2922 = vmatprep.subr.bf16.mxu0 0
        %2923 = vmatpush1.bf16.msra.mxu0 %v2909
        %2924 = vmatprep.subr.bf16.mxu0 0
        %2925 = vmatpush1.bf16.msra.mxu0 %v2910
        %2926 = vmatprep.subr.bf16.mxu0 0
        %2927 = vmatpush1.bf16.msra.mxu0 0
        %2928 = vmatprep.subr.bf16.mxu0 0
        %2929 = vmatpush1.bf16.msra.mxu0 0
        %2930 = vmatprep.subr.bf16.mxu0 0
        %2931 = vmatpush1.bf16.msra.mxu0 0
        %2932 = vmatprep.subr.bf16.mxu0 0
        %2933 = vmatpush1.bf16.msra.mxu0 0
        %2934 = vmatprep.subr.bf16.mxu0 0
        %2935 = vmatpush1.bf16.msra.mxu0 0
        %2936 = vmatprep.subr.bf16.mxu0 0
        %2937 = vmatpush1.bf16.msra.mxu0 0
        %2938 = vmatprep.subr.bf16.mxu0 0
        %2939 = vmatpush1.bf16.msra.mxu0 0
        %2940 = vmatprep.subr.bf16.mxu0 0
        %2941 = vmatpush1.bf16.msra.mxu0 0
        %2942 = vmatprep.subr.bf16.mxu0 0
        %2943 = vmatpush1.bf16.msra.mxu0 0
        %2944 = vmatprep.subr.bf16.mxu0 0
        %2945 = vmatpush1.bf16.msra.mxu0 0
        %2946 = vmatprep.subr.bf16.mxu0 0
        %2947 = vmatpush1.bf16.msra.mxu0 0
        %2948 = vmatprep.subr.bf16.mxu0 0
        %2949 = vmatpush1.bf16.msra.mxu0 0
        %2950 = vmatprep.mubr.bf16.mxu0 0
        %2951 = vmatmul.mubr.bf16.gmra.mrb[0].mxu0 %v2916
        %v2952 = vpop.f32.mrb[0].mxu0
        %v2953 = vadd.f32 %v2890, %v2952
        %v2954 = vpop.f32.mrb[0].mxu0
        %v2955 = vpop.f32.mrb[0].mxu0
        %v2956 = vpop.f32.mrb[0].mxu0
        %2957 = vdwg.mxu0
        %vm2958 = vcmask 73728
        %2959 = vst.msk [vmem:[%s432] sm:$0x1] %vm2958, %v2953
        %s2960 = sand.u32 %s313, 1
        %s2961 = scalar_lea.sflag [#allocation3], %s2960
        %s2962 = sand.u32 %s313, 1
        %s2963 = scalar_lea.vmem [#allocation2], %s2962
        // Predicated region
        $region73: #{forward.1} parent=71 // pred_check
          %p2964 = pneg %p323
        $region74: #{forward.1} parent=71 // pred_check_branch
          %2966 = sbr.rel (%p2964) target = $region76
        $region75: #{forward.1} parent=71 // pred_region
          %s2968 = ssub.s32 16, 16
          %2969 = vsyncadd %s2961, %s2968
          %s2970 = smul.addr %s27, 16
          %s2971 = scalar_lea.hbm %s13, %s2970
          %s2973 = sshll.u32 %s2963, 4
          %s2974 = int_to_ptr.vmem [resolvable:$true] %s2973
          %2976 = dma.vmem_to_hbm [thread:$0]  %s2974, 16, %s2971, %s2961
        $region76: #{forward.1} parent=71 // pred_fallthru
          _
      $region72: #{forward.1} parent=5 // pred_fallthru
        _
      %p2977 = scmp.le.s32.totalorder 2, %s22
      // Predicated region
      $region77: #{forward.1} parent=5 // pred_check
        %p2978 = pneg %p2977
      $region78: #{forward.1} parent=5 // pred_check_branch
        %2980 = sbr.rel (%p2978) target = $region80
      $region79: #{forward.1} parent=5 // pred_region
        %s2981 = ssub.s32 %s22, 2
        // Predicated region
        $region81: #{forward.1} parent=79 // pred_check
          %p2982 = pneg %p329
        $region82: #{forward.1} parent=79 // pred_check_branch
          %2984 = sbr.rel (%p2982) target = $region84
        $region83: #{forward.1} parent=79 // pred_region
          %s2985 = sand.u32 %s314, 1
          %s2986 = scalar_lea.sflag [#allocation3], %s2985
          %s2987 = sand.u32 %s314, 1
          %s2988 = scalar_lea.vmem [#allocation2], %s2987
          %2989 = dma.done %s2986, 16
        $region84: #{forward.1} parent=79 // pred_fallthru
          _
      $region80: #{forward.1} parent=5 // pred_fallthru
        _
    $region6: #{forward.1} parent=1 // loop_footer
      %s26 = sadd.s32 1, %s22
    $region7: #{forward.1} parent=1 // loop_footer_branch
      %21 = sbr.rel target = $region3
    $region8: #{forward.1} parent=1 // loop_exit
      _
    %2990 = vsyncpa [#allocation3], 1
    %s2991 = scalar_lea.sflag [#allocation3], 1
    %2992 = vsyncpa %s2991, 1

</llo_original>
